<compile_context>
chip_gen: v6e
topology: v6e:2x2x1
jax: 0.10.0
libtpu: 0.0.40
codegen_flags: <defaults>
</compile_context>

<pallas_src>
import functools

import numpy as np
import jax
import jax.numpy as jnp
from jax.experimental import pallas as pl
from jax.experimental.pallas import tpu as pltpu


def _round_up(v, m):
    return ((v + m - 1) // m) * m


def _physical_vmem_bytes():
    """Physical VMEM for this generation (conservative default: v7x 64 MiB)."""
    try:
        info = pltpu.get_tpu_info()
        v = int(getattr(info, "vmem_capacity_bytes", 0))
        if v > 0:
            return v
    except Exception:
        pass
    return 64 * 1024 * 1024


# --------------------------------------------------------------------------
# Kernels
# --------------------------------------------------------------------------
def _mlp_h3(x_ref, w1_ref, b1_ref, w2_ref, b2_ref, w3_ref, b3_ref):
    """fc1/fc2/fc3 (+ReLU) on one (tb, D) batch tile -> f32 (tb, 64)."""
    cdt = w1_ref.dtype                         # MXU input dtype (bf16 or f32)
    x = x_ref[...].astype(cdt)
    h1 = jnp.dot(x, w1_ref[...], preferred_element_type=jnp.float32) + b1_ref[...]
    h1 = jnp.maximum(h1, 0.0)                  # ReLU in f32 (VPU, v5e-safe)
    h2 = jnp.dot(h1.astype(cdt), w2_ref[...],
                 preferred_element_type=jnp.float32) + b2_ref[...]
    h2 = jnp.maximum(h2, 0.0)
    h3 = jnp.dot(h2.astype(cdt), w3_ref[...],
                 preferred_element_type=jnp.float32) + b3_ref[...]
    return jnp.maximum(h3, 0.0)


def mlp_kernel_row(x_ref, w1_ref, b1_ref, w2_ref, b2_ref,
                   w3_ref, b3_ref, w4_ref, b4_ref, o_ref):
    """Lane-dense variant: output block is a (1, tb) row (unmasked stores)."""
    h3 = _mlp_h3(x_ref, w1_ref, b1_ref, w2_ref, b2_ref, w3_ref, b3_ref)
    # fc4 (64 -> 1): contract the 64-dim of h3 against the (1, 64) weight row
    # so the result lands directly in the lane dimension as (1, tb).  The MXU
    # is nowhere near the binding slot at these shapes, so this tiny matmul is
    # effectively free and avoids tb/8 masked column stores per grid step.
    z_row = jax.lax.dot_general(w4_ref[...], h3, (((1,), (1,)), ((), ())),
                                preferred_element_type=jnp.float32)   # (1, tb)
    o_ref[...] = jax.nn.sigmoid(z_row + b4_ref[0, 0])                 # EUP

def mlp_kernel_col(x_ref, w1_ref, b1_ref, w2_ref, b2_ref,
                   w3_ref, b3_ref, w4_ref, b4_ref, o_ref):
    """Conservative fallback: (tb, 1) column output (previously validated)."""
    h3 = _mlp_h3(x_ref, w1_ref, b1_ref, w2_ref, b2_ref, w3_ref, b3_ref)
    z = jnp.sum(h3 * w4_ref[...], axis=-1, keepdims=True) + b4_ref[0, 0]
    o_ref[...] = jax.nn.sigmoid(z)


# --------------------------------------------------------------------------
# pallas_call builder
# --------------------------------------------------------------------------
def _const_spec(shape, single_buffer):
    """BlockSpec for a VMEM-resident operand (constant index map).

    With a constant index map the block is never re-fetched, so a single
    buffer halves its resident VMEM at zero pipelining cost.
    """
    idx = lambda i: (0, 0)
    if single_buffer:
        try:
            return pl.BlockSpec(shape, idx, pipeline_mode=pl.Buffered(1))
        except Exception:  # pipeline_mode / Buffered unavailable -> default
            pass
    return pl.BlockSpec(shape, idx)


def _build_and_run(x_pad, w1, b1, w2, b2, w3, b3, w4, b4,
                   *, tb, lane_dense, single_buffer, phys_vmem):
    Bp, D = x_pad.shape
    H1 = w1.shape[1]
    H3 = w3.shape[1]
    grid = (Bp // tb,)
    cdt_size = np.dtype(w1.dtype).itemsize

    in_specs = [
        pl.BlockSpec((tb, D), lambda i: (i, 0)),            # x (streamed over B)
        _const_spec((D, H1), single_buffer),                 # w1
        _const_spec((1, H1), single_buffer),                 # b1
        _const_spec((H1, D), single_buffer),                 # w2
        _const_spec((1, D), single_buffer),                  # b2
        _const_spec((D, H3), single_buffer),                 # w3
        _const_spec((1, H3), single_buffer),                 # b3
        _const_spec((1, H3), single_buffer),                 # w4 row (f32)
        pl.BlockSpec(memory_space=pltpu.MemorySpace.SMEM),   # b4 scalar
    ]
    if lane_dense:
        kernel = mlp_kernel_row
        out_shape = jax.ShapeDtypeStruct((1, Bp), jnp.float32)
        out_specs = pl.BlockSpec((1, tb), lambda i: (0, i))
        out_buf_bytes = 2 * 8 * tb * 4                        # (1, tb) blocks
    else:
        kernel = mlp_kernel_col
        out_shape = jax.ShapeDtypeStruct((Bp, 1), jnp.float32)
        out_specs = pl.BlockSpec((tb, 1), lambda i: (i, 0))
        out_buf_bytes = 2 * tb * 128 * 4                      # lane-padded

    # Advisory cost estimate for XLA's scheduler.
    flops = 2 * Bp * (D * H1 + H1 * D + D * H3 + H3)
    weight_bytes = sum(int(a.size) * a.dtype.itemsize
                       for a in (w1, b1, w2, b2, w3, b3, w4, b4))
    bytes_accessed = int(x_pad.size) * x_pad.dtype.itemsize + weight_bytes + Bp * 4
    cost = pl.CostEstimate(flops=flops, transcendentals=Bp,
                           bytes_accessed=bytes_accessed)

    # VMEM-limit policy: trigger near the smallest scoped default (v5e 16 MiB)
    # and cap at 75% of physical VMEM (headroom for Mosaic-internal scratch).
    wt_mult = 1 if single_buffer else 2
    vmem_est = int(1.3 * (wt_mult * weight_bytes
                          + 2 * tb * D * 4                    # x double buffer
                          + out_buf_bytes
                          + tb * (H1 + D + H3) * 4            # live f32 acts
                          + tb * (H1 + D) * cdt_size))        # bf16 copies
    cp_kwargs = dict(dimension_semantics=("parallel",))
    if vmem_est > 12 * 1024 * 1024:
        cp_kwargs["vmem_limit_bytes"] = int(
            min(max(vmem_est, 32 * 1024 * 1024), int(phys_vmem * 0.75)))

    out = pl.pallas_call(
        kernel,
        out_shape=out_shape,
        grid_spec=pltpu.PrefetchScalarGridSpec(
            num_scalar_prefetch=0,
            grid=grid,
            in_specs=in_specs,
            out_specs=out_specs,
        ),
        compiler_params=pltpu.CompilerParams(**cp_kwargs),
        cost_estimate=cost,
    )(x_pad, w1, b1, w2, b2, w3, b3, w4, b4)

    if lane_dense:
        out = out.reshape(Bp, 1)      # (1, Bp) row-major -> (Bp, 1), same order
    return out


def _derive_tile(B, D, H1, H3, weight_bytes, cdt_size, block_b, phys_vmem):
    """Batch-tile size: VMEM-budget driven, lane/sublane aligned."""
    b_pad8 = _round_up(max(B, 1), 8)
    if block_b is None:
        # Resident bytes per batch row: x double-buffer + live f32 activations
        # + bf16 copies feeding the MXU.  Target <= min(40% physical, 28 MiB)
        # so the footprint stays under every generation's scoped ceiling.
        budget = min(int(phys_vmem * 0.40), 28 * 1024 * 1024)
        per_row = (2 * D * 4 + (H1 + D + H3 + 16) * 4
                   + (H1 + D) * cdt_size + 64)
        avail = budget - 2 * weight_bytes - (1 << 20)
        tb = max(128, min(8192, (max(avail, 0) // per_row // 128) * 128))
        # Keep >= ~4 grid steps when the batch allows it so the "parallel"
        # axis actually distributes work across v7x's two TensorCores.
        tb = min(tb, max(128, _round_up(-(-b_pad8 // 4), 128)))
    else:
        tb = _round_up(max(8, int(block_b)), 8)
    if tb >= b_pad8:
        return b_pad8                 # single grid step; block == padded batch
    tb = _round_up(tb, 128)           # multi-step: lane-dense out needs 128-mult
    if tb >= b_pad8:
        return b_pad8
    return tb


def safsar_forward(x, params, *, block_b=None, compute_dtype=jnp.bfloat16):
    """Forward pass of BinaryClassificationModelSAFSAR.

    x: (B, D) float32.  params: (in, out) weights and (1, out) biases (f32).
    compute_dtype: dtype fed to the MXU.  bf16 is the default on *all*
    generations (v5e's MXU also takes bf16); accumulation and all elementwise
    math (bias, ReLU, sigmoid) stay f32.  block_b: optional explicit batch
    tile (otherwise derived from the VMEM budget).
    """
    B, D = x.shape
    H1 = params["w1"].shape[1]        # 2*D
    H3 = params["w3"].shape[1]        # 64

    # Weights in (in, out) layout (y = x @ W + b); fc4 as a (1, 64) f32 row
    # and its bias as an SMEM scalar.
    w1 = params["w1"].astype(compute_dtype)
    w2 = params["w2"].astype(compute_dtype)
    w3 = params["w3"].astype(compute_dtype)
    w4 = params["w4"].reshape(1, H3).astype(jnp.float32)
    b1 = params["b1"].astype(jnp.float32)
    b2 = params["b2"].astype(jnp.float32)
    b3 = params["b3"].astype(jnp.float32)
    b4 = params["b4"].reshape(1, 1).astype(jnp.float32)

    phys_vmem = _physical_vmem_bytes()
    cdt_size = np.dtype(compute_dtype).itemsize
    weight_bytes = sum(int(a.size) * a.dtype.itemsize
                       for a in (w1, b1, w2, b2, w3, b3, w4, b4))
    tb = _derive_tile(B, D, H1, H3, weight_bytes, cdt_size, block_b, phys_vmem)

    Bp = _round_up(B, tb)
    # x stays in its caller dtype (f32 here): casting in the wrapper would add
    # a separate full HBM pass; the kernel casts on the fly for the MXU.
    x_pad = jnp.pad(x, ((0, Bp - B), (0, 0))) if Bp != B else x

    run = functools.partial(_build_and_run, x_pad, w1, b1, w2, b2, w3, b3,
                            w4, b4, tb=tb, phys_vmem=phys_vmem)
    # Preferred (lane-dense output, single-buffered weights) first; retry with
    # progressively more conservative, previously validated configurations if
    # a tuned feature does not lower on this generation.  (Eager call: compile
    # errors are catchable here.)
    configs = ((True, True), (True, False), (False, False))
    err = None
    for lane_dense, single_buffer in configs:
        try:
            out = run(lane_dense=lane_dense, single_buffer=single_buffer)
            return out[:B]
        except Exception as e:                        # retry next config
            err = e
    raise err


# --------------------------------------------------------------------------
# Reference / init / test
# --------------------------------------------------------------------------
def init_params(key, input_dim):
    """nn.Linear-style init: U(-1/sqrt(fan_in), 1/sqrt(fan_in))."""
    dims = [(input_dim, input_dim * 2),
            (input_dim * 2, input_dim),
            (input_dim, 64),
            (64, 1)]
    params = {}
    keys = jax.random.split(key, 2 * len(dims))
    for i, (fan_in, fan_out) in enumerate(dims):
        bound = 1.0 / np.sqrt(fan_in)
        params[f"w{i+1}"] = jax.random.uniform(
            keys[2 * i], (fan_in, fan_out), jnp.float32, -bound, bound)
        params[f"b{i+1}"] = jax.random.uniform(
            keys[2 * i + 1], (1, fan_out), jnp.float32, -bound, bound)
    return params


def reference_forward(x, p):
    h = jnp.maximum(x @ p["w1"] + p["b1"], 0.0)
    h = jnp.maximum(h @ p["w2"] + p["b2"], 0.0)
    h = jnp.maximum(h @ p["w3"] + p["b3"], 0.0)
    return jax.nn.sigmoid(h @ p["w4"] + p["b4"])


if __name__ == "__main__":
    key = jax.random.PRNGKey(0)
    k_x, k_p = jax.random.split(key)

    batch = 300            # not a multiple of 8 / 128 -> exercises padding
    input_dim = 32

    x = jax.random.normal(k_x, (batch, input_dim), jnp.float32)
    params = init_params(k_p, input_dim)
    ref = reference_forward(x, params)

    # f32 path with an explicit 128-row tile -> multi-step "parallel" grid.
    out_f32 = jax.block_until_ready(
        safsar_forward(x, params, block_b=128, compute_dtype=jnp.float32))
    np.testing.assert_allclose(np.asarray(out_f32), np.asarray(ref),
                               rtol=1e-5, atol=1e-5)
    assert out_f32.shape == (batch, 1)

    # Default path: bf16 MXU inputs, auto (VMEM-budget-derived) batch tile.
    out_bf16 = jax.block_until_ready(safsar_forward(x, params))
    np.testing.assert_allclose(np.asarray(out_bf16), np.asarray(ref),
                               rtol=5e-2, atol=5e-2)
    assert out_bf16.shape == (batch, 1)

    print("KERNEL_OK")
</pallas_src>

<mosaic_0001>
module attributes {stable_mosaic.version = 11 : i64} {
  func.func @mlp_kernel_row(%arg0: i32, %arg1: memref<128x32xf32, #tpu.memory_space<vmem>>, %arg2: memref<32x64xf32, #tpu.memory_space<vmem>>, %arg3: memref<1x64xf32, #tpu.memory_space<vmem>>, %arg4: memref<64x32xf32, #tpu.memory_space<vmem>>, %arg5: memref<1x32xf32, #tpu.memory_space<vmem>>, %arg6: memref<32x64xf32, #tpu.memory_space<vmem>>, %arg7: memref<1x64xf32, #tpu.memory_space<vmem>>, %arg8: memref<1x64xf32, #tpu.memory_space<vmem>>, %arg9: memref<1x1xf32, #tpu.memory_space<smem>>, %arg10: memref<1x128xf32, #tpu.memory_space<vmem>>) attributes {dimension_semantics = [#tpu.dimension_semantics<parallel>], iteration_bounds = array<i64: 3>, scalar_prefetch = 0 : i64, scratch_operands = 0 : i64, tpu.core_type = #tpu.core_type<tc>, window_params = [{transform_indices = @transform_0, window_bounds = array<i64: 128, 32>}, {pipeline_mode = #tpu.pipeline_mode<synchronous>, transform_indices = @transform_1, window_bounds = array<i64: 32, 64>}, {pipeline_mode = #tpu.pipeline_mode<synchronous>, transform_indices = @transform_2, window_bounds = array<i64: 1, 64>}, {pipeline_mode = #tpu.pipeline_mode<synchronous>, transform_indices = @transform_3, window_bounds = array<i64: 64, 32>}, {pipeline_mode = #tpu.pipeline_mode<synchronous>, transform_indices = @transform_4, window_bounds = array<i64: 1, 32>}, {pipeline_mode = #tpu.pipeline_mode<synchronous>, transform_indices = @transform_5, window_bounds = array<i64: 32, 64>}, {pipeline_mode = #tpu.pipeline_mode<synchronous>, transform_indices = @transform_6, window_bounds = array<i64: 1, 64>}, {pipeline_mode = #tpu.pipeline_mode<synchronous>, transform_indices = @transform_7, window_bounds = array<i64: 1, 64>}, {transform_indices = @transform_8, window_bounds = array<i64: 1, 1>}, {transform_indices = @transform_9, window_bounds = array<i64: 1, 128>}]} {
    %c0 = arith.constant 0 : index
    %c0_0 = arith.constant 0 : index
    %0 = vector.load %arg1[%c0, %c0_0] : memref<128x32xf32, #tpu.memory_space<vmem>>, vector<128x32xf32>
    %c0_1 = arith.constant 0 : index
    %c0_2 = arith.constant 0 : index
    %1 = vector.load %arg2[%c0_1, %c0_2] : memref<32x64xf32, #tpu.memory_space<vmem>>, vector<32x64xf32>
    %cst = arith.constant dense<0.000000e+00> : vector<128x64xf32>
    %2 = tpu.matmul %0, %1, %cst {dimension_numbers = #tpu.dot_dimension_numbers<[1], [0], [0], [1], [0, 0, 1, 1], [], []>} : vector<128x32xf32>, vector<32x64xf32>, vector<128x64xf32> -> vector<128x64xf32>
    %c0_3 = arith.constant 0 : index
    %c0_4 = arith.constant 0 : index
    %3 = vector.load %arg3[%c0_3, %c0_4] : memref<1x64xf32, #tpu.memory_space<vmem>>, vector<1x64xf32>
    %4 = vector.broadcast %3 : vector<1x64xf32> to vector<128x64xf32>
    %5 = arith.addf %2, %4 : vector<128x64xf32>
    %cst_5 = arith.constant 0.000000e+00 : f32
    %6 = vector.broadcast %cst_5 : f32 to vector<128x64xf32>
    %7 = arith.maximumf %5, %6 : vector<128x64xf32>
    %c0_6 = arith.constant 0 : index
    %c0_7 = arith.constant 0 : index
    %8 = vector.load %arg4[%c0_6, %c0_7] : memref<64x32xf32, #tpu.memory_space<vmem>>, vector<64x32xf32>
    %cst_8 = arith.constant dense<0.000000e+00> : vector<128x32xf32>
    %9 = tpu.matmul %7, %8, %cst_8 {dimension_numbers = #tpu.dot_dimension_numbers<[1], [0], [0], [1], [0, 0, 1, 1], [], []>} : vector<128x64xf32>, vector<64x32xf32>, vector<128x32xf32> -> vector<128x32xf32>
    %c0_9 = arith.constant 0 : index
    %c0_10 = arith.constant 0 : index
    %10 = vector.load %arg5[%c0_9, %c0_10] : memref<1x32xf32, #tpu.memory_space<vmem>>, vector<1x32xf32>
    %11 = vector.broadcast %10 : vector<1x32xf32> to vector<128x32xf32>
    %12 = arith.addf %9, %11 : vector<128x32xf32>
    %cst_11 = arith.constant 0.000000e+00 : f32
    %13 = vector.broadcast %cst_11 : f32 to vector<128x32xf32>
    %14 = arith.maximumf %12, %13 : vector<128x32xf32>
    %c0_12 = arith.constant 0 : index
    %c0_13 = arith.constant 0 : index
    %15 = vector.load %arg6[%c0_12, %c0_13] : memref<32x64xf32, #tpu.memory_space<vmem>>, vector<32x64xf32>
    %cst_14 = arith.constant dense<0.000000e+00> : vector<128x64xf32>
    %16 = tpu.matmul %14, %15, %cst_14 {dimension_numbers = #tpu.dot_dimension_numbers<[1], [0], [0], [1], [0, 0, 1, 1], [], []>} : vector<128x32xf32>, vector<32x64xf32>, vector<128x64xf32> -> vector<128x64xf32>
    %c0_15 = arith.constant 0 : index
    %c0_16 = arith.constant 0 : index
    %17 = vector.load %arg7[%c0_15, %c0_16] : memref<1x64xf32, #tpu.memory_space<vmem>>, vector<1x64xf32>
    %18 = vector.broadcast %17 : vector<1x64xf32> to vector<128x64xf32>
    %19 = arith.addf %16, %18 : vector<128x64xf32>
    %cst_17 = arith.constant 0.000000e+00 : f32
    %20 = vector.broadcast %cst_17 : f32 to vector<128x64xf32>
    %21 = arith.maximumf %19, %20 : vector<128x64xf32>
    %c0_18 = arith.constant 0 : index
    %c0_19 = arith.constant 0 : index
    %22 = vector.load %arg8[%c0_18, %c0_19] : memref<1x64xf32, #tpu.memory_space<vmem>>, vector<1x64xf32>
    %cst_20 = arith.constant dense<0.000000e+00> : vector<1x128xf32>
    %23 = tpu.matmul %22, %21, %cst_20 {dimension_numbers = #tpu.dot_dimension_numbers<[1], [1], [0], [0], [0, 0, 1, 0], [], []>} : vector<1x64xf32>, vector<128x64xf32>, vector<1x128xf32> -> vector<1x128xf32>
    %c0_21 = arith.constant 0 : index
    %c0_22 = arith.constant 0 : index
    %24 = memref.load %arg9[%c0_21, %c0_22] : memref<1x1xf32, #tpu.memory_space<smem>>
    %25 = vector.broadcast %24 : f32 to vector<1x128xf32>
    %26 = arith.addf %23, %25 : vector<1x128xf32>
    %27 = arith.negf %26 : vector<1x128xf32>
    %28 = math.exp %27 : vector<1x128xf32>
    %cst_23 = arith.constant 1.000000e+00 : f32
    %29 = vector.broadcast %cst_23 : f32 to vector<1x128xf32>
    %30 = arith.addf %29, %28 : vector<1x128xf32>
    %31 = arith.divf %29, %30 : vector<1x128xf32>
    %c0_24 = arith.constant 0 : index
    %c0_25 = arith.constant 0 : index
    %32 = vector.load %arg10[%c0_24, %c0_25] : memref<1x128xf32, #tpu.memory_space<vmem>>, vector<1x128xf32>
    tpu.vector_store %arg10[%c0_24, %c0_25], %31 {strides = array<i32>} : memref<1x128xf32, #tpu.memory_space<vmem>>, vector<1x128xf32>,
    return
  }
  func.func @transform_0(%arg0: i32) -> (i32, i32) {
    %c0_i32 = arith.constant 0 : i32
    %c0_i32_0 = arith.constant 0 : i32
    return %arg0, %c0_i32 : i32, i32
  }
  func.func @transform_1(%arg0: i32) -> (i32, i32) {
    %c0_i32 = arith.constant 0 : i32
    %c0_i32_0 = arith.constant 0 : i32
    %c0_i32_1 = arith.constant 0 : i32
    return %c0_i32, %c0_i32_0 : i32, i32
  }
  func.func @transform_2(%arg0: i32) -> (i32, i32) {
    %c0_i32 = arith.constant 0 : i32
    %c0_i32_0 = arith.constant 0 : i32
    %c0_i32_1 = arith.constant 0 : i32
    return %c0_i32, %c0_i32_0 : i32, i32
  }
  func.func @transform_3(%arg0: i32) -> (i32, i32) {
    %c0_i32 = arith.constant 0 : i32
    %c0_i32_0 = arith.constant 0 : i32
    %c0_i32_1 = arith.constant 0 : i32
    return %c0_i32, %c0_i32_0 : i32, i32
  }
  func.func @transform_4(%arg0: i32) -> (i32, i32) {
    %c0_i32 = arith.constant 0 : i32
    %c0_i32_0 = arith.constant 0 : i32
    %c0_i32_1 = arith.constant 0 : i32
    return %c0_i32, %c0_i32_0 : i32, i32
  }
  func.func @transform_5(%arg0: i32) -> (i32, i32) {
    %c0_i32 = arith.constant 0 : i32
    %c0_i32_0 = arith.constant 0 : i32
    %c0_i32_1 = arith.constant 0 : i32
    return %c0_i32, %c0_i32_0 : i32, i32
  }
  func.func @transform_6(%arg0: i32) -> (i32, i32) {
    %c0_i32 = arith.constant 0 : i32
    %c0_i32_0 = arith.constant 0 : i32
    %c0_i32_1 = arith.constant 0 : i32
    return %c0_i32, %c0_i32_0 : i32, i32
  }
  func.func @transform_7(%arg0: i32) -> (i32, i32) {
    %c0_i32 = arith.constant 0 : i32
    %c0_i32_0 = arith.constant 0 : i32
    %c0_i32_1 = arith.constant 0 : i32
    return %c0_i32, %c0_i32_0 : i32, i32
  }
  func.func @transform_8(%arg0: i32) -> (i32, i32) {
    %c0_i32 = arith.constant 0 : i32
    %c0_i32_0 = arith.constant 0 : i32
    %c0_i32_1 = arith.constant 0 : i32
    return %c0_i32, %c0_i32_0 : i32, i32
  }
  func.func @transform_9(%arg0: i32) -> (i32, i32) {
    %c0_i32 = arith.constant 0 : i32
    %c0_i32_0 = arith.constant 0 : i32
    return %c0_i32, %arg0 : i32, i32
  }
}

module attributes {stable_mosaic.version = 11 : i64} {
  func.func @mlp_kernel_row(%arg0: i32, %arg1: memref<128x32xf32, #tpu.memory_space<vmem>>, %arg2: memref<32x64xf32, #tpu.memory_space<vmem>>, %arg3: memref<1x64xf32, #tpu.memory_space<vmem>>, %arg4: memref<64x32xf32, #tpu.memory_space<vmem>>, %arg5: memref<1x32xf32, #tpu.memory_space<vmem>>, %arg6: memref<32x64xf32, #tpu.memory_space<vmem>>, %arg7: memref<1x64xf32, #tpu.memory_space<vmem>>, %arg8: memref<1x64xf32, #tpu.memory_space<vmem>>, %arg9: memref<1x1xf32, #tpu.memory_space<smem>>, %arg10: memref<1x128xf32, #tpu.memory_space<vmem>>) attributes {dimension_semantics = [#tpu.dimension_semantics<parallel>], iteration_bounds = array<i64: 3>, scalar_prefetch = 0 : i64, scratch_operands = 0 : i64, tpu.core_type = #tpu.core_type<tc>, window_params = [{transform_indices = @transform_0, window_bounds = array<i64: 128, 32>}, {pipeline_mode = #tpu.pipeline_mode<synchronous>, transform_indices = @transform_1, window_bounds = array<i64: 32, 64>}, {pipeline_mode = #tpu.pipeline_mode<synchronous>, transform_indices = @transform_2, window_bounds = array<i64: 1, 64>}, {pipeline_mode = #tpu.pipeline_mode<synchronous>, transform_indices = @transform_3, window_bounds = array<i64: 64, 32>}, {pipeline_mode = #tpu.pipeline_mode<synchronous>, transform_indices = @transform_4, window_bounds = array<i64: 1, 32>}, {pipeline_mode = #tpu.pipeline_mode<synchronous>, transform_indices = @transform_5, window_bounds = array<i64: 32, 64>}, {pipeline_mode = #tpu.pipeline_mode<synchronous>, transform_indices = @transform_6, window_bounds = array<i64: 1, 64>}, {pipeline_mode = #tpu.pipeline_mode<synchronous>, transform_indices = @transform_7, window_bounds = array<i64: 1, 64>}, {transform_indices = @transform_8, window_bounds = array<i64: 1, 1>}, {transform_indices = @transform_9, window_bounds = array<i64: 1, 128>}]} {
    %c0 = arith.constant 0 : index
    %c0_0 = arith.constant 0 : index
    %0 = vector.load %arg1[%c0, %c0_0] : memref<128x32xf32, #tpu.memory_space<vmem>>, vector<128x32xf32>
    %c0_1 = arith.constant 0 : index
    %c0_2 = arith.constant 0 : index
    %1 = vector.load %arg2[%c0_1, %c0_2] : memref<32x64xf32, #tpu.memory_space<vmem>>, vector<32x64xf32>
    %cst = arith.constant dense<0.000000e+00> : vector<128x64xf32>
    %2 = tpu.matmul %0, %1, %cst {dimension_numbers = #tpu.dot_dimension_numbers<[1], [0], [0], [1], [0, 0, 1, 1], [], []>} : vector<128x32xf32>, vector<32x64xf32>, vector<128x64xf32> -> vector<128x64xf32>
    %c0_3 = arith.constant 0 : index
    %c0_4 = arith.constant 0 : index
    %3 = vector.load %arg3[%c0_3, %c0_4] : memref<1x64xf32, #tpu.memory_space<vmem>>, vector<1x64xf32>
    %4 = vector.broadcast %3 : vector<1x64xf32> to vector<128x64xf32>
    %5 = arith.addf %2, %4 : vector<128x64xf32>
    %cst_5 = arith.constant 0.000000e+00 : f32
    %6 = vector.broadcast %cst_5 : f32 to vector<128x64xf32>
    %7 = arith.maximumf %5, %6 : vector<128x64xf32>
    %c0_6 = arith.constant 0 : index
    %c0_7 = arith.constant 0 : index
    %8 = vector.load %arg4[%c0_6, %c0_7] : memref<64x32xf32, #tpu.memory_space<vmem>>, vector<64x32xf32>
    %cst_8 = arith.constant dense<0.000000e+00> : vector<128x32xf32>
    %9 = tpu.matmul %7, %8, %cst_8 {dimension_numbers = #tpu.dot_dimension_numbers<[1], [0], [0], [1], [0, 0, 1, 1], [], []>} : vector<128x64xf32>, vector<64x32xf32>, vector<128x32xf32> -> vector<128x32xf32>
    %c0_9 = arith.constant 0 : index
    %c0_10 = arith.constant 0 : index
    %10 = vector.load %arg5[%c0_9, %c0_10] : memref<1x32xf32, #tpu.memory_space<vmem>>, vector<1x32xf32>
    %11 = vector.broadcast %10 : vector<1x32xf32> to vector<128x32xf32>
    %12 = arith.addf %9, %11 : vector<128x32xf32>
    %cst_11 = arith.constant 0.000000e+00 : f32
    %13 = vector.broadcast %cst_11 : f32 to vector<128x32xf32>
    %14 = arith.maximumf %12, %13 : vector<128x32xf32>
    %c0_12 = arith.constant 0 : index
    %c0_13 = arith.constant 0 : index
    %15 = vector.load %arg6[%c0_12, %c0_13] : memref<32x64xf32, #tpu.memory_space<vmem>>, vector<32x64xf32>
    %cst_14 = arith.constant dense<0.000000e+00> : vector<128x64xf32>
    %16 = tpu.matmul %14, %15, %cst_14 {dimension_numbers = #tpu.dot_dimension_numbers<[1], [0], [0], [1], [0, 0, 1, 1], [], []>} : vector<128x32xf32>, vector<32x64xf32>, vector<128x64xf32> -> vector<128x64xf32>
    %c0_15 = arith.constant 0 : index
    %c0_16 = arith.constant 0 : index
    %17 = vector.load %arg7[%c0_15, %c0_16] : memref<1x64xf32, #tpu.memory_space<vmem>>, vector<1x64xf32>
    %18 = vector.broadcast %17 : vector<1x64xf32> to vector<128x64xf32>
    %19 = arith.addf %16, %18 : vector<128x64xf32>
    %cst_17 = arith.constant 0.000000e+00 : f32
    %20 = vector.broadcast %cst_17 : f32 to vector<128x64xf32>
    %21 = arith.maximumf %19, %20 : vector<128x64xf32>
    %c0_18 = arith.constant 0 : index
    %c0_19 = arith.constant 0 : index
    %22 = vector.load %arg8[%c0_18, %c0_19] : memref<1x64xf32, #tpu.memory_space<vmem>>, vector<1x64xf32>
    %cst_20 = arith.constant dense<0.000000e+00> : vector<1x128xf32>
    %23 = tpu.matmul %22, %21, %cst_20 {dimension_numbers = #tpu.dot_dimension_numbers<[1], [1], [0], [0], [0, 0, 1, 0], [], []>} : vector<1x64xf32>, vector<128x64xf32>, vector<1x128xf32> -> vector<1x128xf32>
    %c0_21 = arith.constant 0 : index
    %c0_22 = arith.constant 0 : index
    %24 = memref.load %arg9[%c0_21, %c0_22] : memref<1x1xf32, #tpu.memory_space<smem>>
    %25 = vector.broadcast %24 : f32 to vector<1x128xf32>
    %26 = arith.addf %23, %25 : vector<1x128xf32>
    %27 = arith.negf %26 : vector<1x128xf32>
    %28 = math.exp %27 : vector<1x128xf32>
    %cst_23 = arith.constant 1.000000e+00 : f32
    %29 = vector.broadcast %cst_23 : f32 to vector<1x128xf32>
    %30 = arith.addf %29, %28 : vector<1x128xf32>
    %31 = arith.divf %29, %30 : vector<1x128xf32>
    %c0_24 = arith.constant 0 : index
    %c0_25 = arith.constant 0 : index
    %32 = vector.load %arg10[%c0_24, %c0_25] : memref<1x128xf32, #tpu.memory_space<vmem>>, vector<1x128xf32>
    tpu.vector_store %arg10[%c0_24, %c0_25], %31 {strides = array<i32>} : memref<1x128xf32, #tpu.memory_space<vmem>>, vector<1x128xf32>,
    return
  }
  func.func @transform_0(%arg0: i32) -> (i32, i32) {
    %c0_i32 = arith.constant 0 : i32
    %c0_i32_0 = arith.constant 0 : i32
    return %arg0, %c0_i32 : i32, i32
  }
  func.func @transform_1(%arg0: i32) -> (i32, i32) {
    %c0_i32 = arith.constant 0 : i32
    %c0_i32_0 = arith.constant 0 : i32
    %c0_i32_1 = arith.constant 0 : i32
    return %c0_i32, %c0_i32_0 : i32, i32
  }
  func.func @transform_2(%arg0: i32) -> (i32, i32) {
    %c0_i32 = arith.constant 0 : i32
    %c0_i32_0 = arith.constant 0 : i32
    %c0_i32_1 = arith.constant 0 : i32
    return %c0_i32, %c0_i32_0 : i32, i32
  }
  func.func @transform_3(%arg0: i32) -> (i32, i32) {
    %c0_i32 = arith.constant 0 : i32
    %c0_i32_0 = arith.constant 0 : i32
    %c0_i32_1 = arith.constant 0 : i32
    return %c0_i32, %c0_i32_0 : i32, i32
  }
  func.func @transform_4(%arg0: i32) -> (i32, i32) {
    %c0_i32 = arith.constant 0 : i32
    %c0_i32_0 = arith.constant 0 : i32
    %c0_i32_1 = arith.constant 0 : i32
    return %c0_i32, %c0_i32_0 : i32, i32
  }
  func.func @transform_5(%arg0: i32) -> (i32, i32) {
    %c0_i32 = arith.constant 0 : i32
    %c0_i32_0 = arith.constant 0 : i32
    %c0_i32_1 = arith.constant 0 : i32
    return %c0_i32, %c0_i32_0 : i32, i32
  }
  func.func @transform_6(%arg0: i32) -> (i32, i32) {
    %c0_i32 = arith.constant 0 : i32
    %c0_i32_0 = arith.constant 0 : i32
    %c0_i32_1 = arith.constant 0 : i32
    return %c0_i32, %c0_i32_0 : i32, i32
  }
  func.func @transform_7(%arg0: i32) -> (i32, i32) {
    %c0_i32 = arith.constant 0 : i32
    %c0_i32_0 = arith.constant 0 : i32
    %c0_i32_1 = arith.constant 0 : i32
    return %c0_i32, %c0_i32_0 : i32, i32
  }
  func.func @transform_8(%arg0: i32) -> (i32, i32) {
    %c0_i32 = arith.constant 0 : i32
    %c0_i32_0 = arith.constant 0 : i32
    %c0_i32_1 = arith.constant 0 : i32
    return %c0_i32, %c0_i32_0 : i32, i32
  }
  func.func @transform_9(%arg0: i32) -> (i32, i32) {
    %c0_i32 = arith.constant 0 : i32
    %c0_i32_0 = arith.constant 0 : i32
    return %c0_i32, %arg0 : i32, i32
  }
}

module attributes {stable_mosaic.version = 11 : i64} {
  func.func @mlp_kernel_col(%arg0: i32, %arg1: memref<128x32xf32, #tpu.memory_space<vmem>>, %arg2: memref<32x64xf32, #tpu.memory_space<vmem>>, %arg3: memref<1x64xf32, #tpu.memory_space<vmem>>, %arg4: memref<64x32xf32, #tpu.memory_space<vmem>>, %arg5: memref<1x32xf32, #tpu.memory_space<vmem>>, %arg6: memref<32x64xf32, #tpu.memory_space<vmem>>, %arg7: memref<1x64xf32, #tpu.memory_space<vmem>>, %arg8: memref<1x64xf32, #tpu.memory_space<vmem>>, %arg9: memref<1x1xf32, #tpu.memory_space<smem>>, %arg10: memref<128x1xf32, #tpu.memory_space<vmem>>) attributes {dimension_semantics = [#tpu.dimension_semantics<parallel>], iteration_bounds = array<i64: 3>, scalar_prefetch = 0 : i64, scratch_operands = 0 : i64, tpu.core_type = #tpu.core_type<tc>, window_params = [{transform_indices = @transform_0, window_bounds = array<i64: 128, 32>}, {pipeline_mode = #tpu.pipeline_mode<synchronous>, transform_indices = @transform_1, window_bounds = array<i64: 32, 64>}, {pipeline_mode = #tpu.pipeline_mode<synchronous>, transform_indices = @transform_2, window_bounds = array<i64: 1, 64>}, {pipeline_mode = #tpu.pipeline_mode<synchronous>, transform_indices = @transform_3, window_bounds = array<i64: 64, 32>}, {pipeline_mode = #tpu.pipeline_mode<synchronous>, transform_indices = @transform_4, window_bounds = array<i64: 1, 32>}, {pipeline_mode = #tpu.pipeline_mode<synchronous>, transform_indices = @transform_5, window_bounds = array<i64: 32, 64>}, {pipeline_mode = #tpu.pipeline_mode<synchronous>, transform_indices = @transform_6, window_bounds = array<i64: 1, 64>}, {pipeline_mode = #tpu.pipeline_mode<synchronous>, transform_indices = @transform_7, window_bounds = array<i64: 1, 64>}, {transform_indices = @transform_8, window_bounds = array<i64: 1, 1>}, {transform_indices = @transform_9, window_bounds = array<i64: 128, 1>}]} {
    %c0 = arith.constant 0 : index
    %c0_0 = arith.constant 0 : index
    %0 = vector.load %arg1[%c0, %c0_0] : memref<128x32xf32, #tpu.memory_space<vmem>>, vector<128x32xf32>
    %c0_1 = arith.constant 0 : index
    %c0_2 = arith.constant 0 : index
    %1 = vector.load %arg2[%c0_1, %c0_2] : memref<32x64xf32, #tpu.memory_space<vmem>>, vector<32x64xf32>
    %cst = arith.constant dense<0.000000e+00> : vector<128x64xf32>
    %2 = tpu.matmul %0, %1, %cst {dimension_numbers = #tpu.dot_dimension_numbers<[1], [0], [0], [1], [0, 0, 1, 1], [], []>} : vector<128x32xf32>, vector<32x64xf32>, vector<128x64xf32> -> vector<128x64xf32>
    %c0_3 = arith.constant 0 : index
    %c0_4 = arith.constant 0 : index
    %3 = vector.load %arg3[%c0_3, %c0_4] : memref<1x64xf32, #tpu.memory_space<vmem>>, vector<1x64xf32>
    %4 = vector.broadcast %3 : vector<1x64xf32> to vector<128x64xf32>
    %5 = arith.addf %2, %4 : vector<128x64xf32>
    %cst_5 = arith.constant 0.000000e+00 : f32
    %6 = vector.broadcast %cst_5 : f32 to vector<128x64xf32>
    %7 = arith.maximumf %5, %6 : vector<128x64xf32>
    %c0_6 = arith.constant 0 : index
    %c0_7 = arith.constant 0 : index
    %8 = vector.load %arg4[%c0_6, %c0_7] : memref<64x32xf32, #tpu.memory_space<vmem>>, vector<64x32xf32>
    %cst_8 = arith.constant dense<0.000000e+00> : vector<128x32xf32>
    %9 = tpu.matmul %7, %8, %cst_8 {dimension_numbers = #tpu.dot_dimension_numbers<[1], [0], [0], [1], [0, 0, 1, 1], [], []>} : vector<128x64xf32>, vector<64x32xf32>, vector<128x32xf32> -> vector<128x32xf32>
    %c0_9 = arith.constant 0 : index
    %c0_10 = arith.constant 0 : index
    %10 = vector.load %arg5[%c0_9, %c0_10] : memref<1x32xf32, #tpu.memory_space<vmem>>, vector<1x32xf32>
    %11 = vector.broadcast %10 : vector<1x32xf32> to vector<128x32xf32>
    %12 = arith.addf %9, %11 : vector<128x32xf32>
    %cst_11 = arith.constant 0.000000e+00 : f32
    %13 = vector.broadcast %cst_11 : f32 to vector<128x32xf32>
    %14 = arith.maximumf %12, %13 : vector<128x32xf32>
    %c0_12 = arith.constant 0 : index
    %c0_13 = arith.constant 0 : index
    %15 = vector.load %arg6[%c0_12, %c0_13] : memref<32x64xf32, #tpu.memory_space<vmem>>, vector<32x64xf32>
    %cst_14 = arith.constant dense<0.000000e+00> : vector<128x64xf32>
    %16 = tpu.matmul %14, %15, %cst_14 {dimension_numbers = #tpu.dot_dimension_numbers<[1], [0], [0], [1], [0, 0, 1, 1], [], []>} : vector<128x32xf32>, vector<32x64xf32>, vector<128x64xf32> -> vector<128x64xf32>
    %c0_15 = arith.constant 0 : index
    %c0_16 = arith.constant 0 : index
    %17 = vector.load %arg7[%c0_15, %c0_16] : memref<1x64xf32, #tpu.memory_space<vmem>>, vector<1x64xf32>
    %18 = vector.broadcast %17 : vector<1x64xf32> to vector<128x64xf32>
    %19 = arith.addf %16, %18 : vector<128x64xf32>
    %cst_17 = arith.constant 0.000000e+00 : f32
    %20 = vector.broadcast %cst_17 : f32 to vector<128x64xf32>
    %21 = arith.maximumf %19, %20 : vector<128x64xf32>
    %c0_18 = arith.constant 0 : index
    %c0_19 = arith.constant 0 : index
    %22 = vector.load %arg8[%c0_18, %c0_19] : memref<1x64xf32, #tpu.memory_space<vmem>>, vector<1x64xf32>
    %23 = vector.broadcast %22 : vector<1x64xf32> to vector<128x64xf32>
    %24 = arith.mulf %21, %23 : vector<128x64xf32>
    %cst_20 = arith.constant dense<0.000000e+00> : vector<128xf32>
    %25 = vector.multi_reduction <add>, %24, %cst_20 [1] : vector<128x64xf32> to vector<128xf32>
    %26 = vector.shape_cast %25 : vector<128xf32> to vector<128x1xf32>
    %c0_21 = arith.constant 0 : index
    %c0_22 = arith.constant 0 : index
    %27 = memref.load %arg9[%c0_21, %c0_22] : memref<1x1xf32, #tpu.memory_space<smem>>
    %28 = vector.broadcast %27 : f32 to vector<128x1xf32>
    %29 = arith.addf %26, %28 : vector<128x1xf32>
    %30 = arith.negf %29 : vector<128x1xf32>
    %31 = math.exp %30 : vector<128x1xf32>
    %cst_23 = arith.constant 1.000000e+00 : f32
    %32 = vector.broadcast %cst_23 : f32 to vector<128x1xf32>
    %33 = arith.addf %32, %31 : vector<128x1xf32>
    %34 = arith.divf %32, %33 : vector<128x1xf32>
    %c0_24 = arith.constant 0 : index
    %c0_25 = arith.constant 0 : index
    %35 = vector.load %arg10[%c0_24, %c0_25] : memref<128x1xf32, #tpu.memory_space<vmem>>, vector<128x1xf32>
    tpu.vector_store %arg10[%c0_24, %c0_25], %34 {strides = array<i32>} : memref<128x1xf32, #tpu.memory_space<vmem>>, vector<128x1xf32>,
    return
  }
  func.func @transform_0(%arg0: i32) -> (i32, i32) {
    %c0_i32 = arith.constant 0 : i32
    %c0_i32_0 = arith.constant 0 : i32
    return %arg0, %c0_i32 : i32, i32
  }
  func.func @transform_1(%arg0: i32) -> (i32, i32) {
    %c0_i32 = arith.constant 0 : i32
    %c0_i32_0 = arith.constant 0 : i32
    %c0_i32_1 = arith.constant 0 : i32
    return %c0_i32, %c0_i32_0 : i32, i32
  }
  func.func @transform_2(%arg0: i32) -> (i32, i32) {
    %c0_i32 = arith.constant 0 : i32
    %c0_i32_0 = arith.constant 0 : i32
    %c0_i32_1 = arith.constant 0 : i32
    return %c0_i32, %c0_i32_0 : i32, i32
  }
  func.func @transform_3(%arg0: i32) -> (i32, i32) {
    %c0_i32 = arith.constant 0 : i32
    %c0_i32_0 = arith.constant 0 : i32
    %c0_i32_1 = arith.constant 0 : i32
    return %c0_i32, %c0_i32_0 : i32, i32
  }
  func.func @transform_4(%arg0: i32) -> (i32, i32) {
    %c0_i32 = arith.constant 0 : i32
    %c0_i32_0 = arith.constant 0 : i32
    %c0_i32_1 = arith.constant 0 : i32
    return %c0_i32, %c0_i32_0 : i32, i32
  }
  func.func @transform_5(%arg0: i32) -> (i32, i32) {
    %c0_i32 = arith.constant 0 : i32
    %c0_i32_0 = arith.constant 0 : i32
    %c0_i32_1 = arith.constant 0 : i32
    return %c0_i32, %c0_i32_0 : i32, i32
  }
  func.func @transform_6(%arg0: i32) -> (i32, i32) {
    %c0_i32 = arith.constant 0 : i32
    %c0_i32_0 = arith.constant 0 : i32
    %c0_i32_1 = arith.constant 0 : i32
    return %c0_i32, %c0_i32_0 : i32, i32
  }
  func.func @transform_7(%arg0: i32) -> (i32, i32) {
    %c0_i32 = arith.constant 0 : i32
    %c0_i32_0 = arith.constant 0 : i32
    %c0_i32_1 = arith.constant 0 : i32
    return %c0_i32, %c0_i32_0 : i32, i32
  }
  func.func @transform_8(%arg0: i32) -> (i32, i32) {
    %c0_i32 = arith.constant 0 : i32
    %c0_i32_0 = arith.constant 0 : i32
    %c0_i32_1 = arith.constant 0 : i32
    return %c0_i32, %c0_i32_0 : i32, i32
  }
  func.func @transform_9(%arg0: i32) -> (i32, i32) {
    %c0_i32 = arith.constant 0 : i32
    %c0_i32_0 = arith.constant 0 : i32
    return %arg0, %c0_i32 : i32, i32
  }
}

</mosaic_0001>

<llo_original>
// kernel: tpu_custom_call.1
$region0: #{tpu_custom_call.1}
  #allocation0 [shape = 'u32[]', space=smem, size = 0x4, offset = 0x4, fixed_abs, tag = 'smem constant byte address 0x4 - core index']
  #allocation1 [shape = 'u32[144,128]{1,0:T(1,128)}', space=vmem, size = 0x12000, scoped, tag = 'internal scratch']
  #allocation2 [shape = 'f32[1,1]{1,0:T(1,128)S(6)}', space=smem, size = 0x200, scoped, tag = 'scoped memory for tpu_custom_call.1']
  %s0 = inlined_call_operand.vmem [shape: f32[384,32], index: 0, kind: input, shape index: {}]
  %s1 = inlined_call_operand.vmem [shape: f32[32,64], index: 1, kind: input, shape index: {}]
  %s2 = inlined_call_operand.vmem [shape: f32[1,64], index: 2, kind: input, shape index: {}]
  %s3 = inlined_call_operand.vmem [shape: f32[64,32], index: 3, kind: input, shape index: {}]
  %s4 = inlined_call_operand.vmem [shape: f32[1,32], index: 4, kind: input, shape index: {}]
  %s5 = inlined_call_operand.vmem [shape: f32[32,64], index: 5, kind: input, shape index: {}]
  %s6 = inlined_call_operand.vmem [shape: f32[1,64], index: 6, kind: input, shape index: {}]
  %s7 = inlined_call_operand.vmem [shape: f32[1,64], index: 7, kind: input, shape index: {}]
  %s8 = inlined_call_operand.<no memory space> [shape: f32[1,1], index: 8, kind: input, shape index: {}]
  %s9 = inlined_call_operand.hbm [shape: f32[1,384], index: 9, kind: output, shape index: {}]
  %s10 = sld [smem:[#allocation0]]
  $region69: #{tpu_custom_call.1} parent=0
    _
  %s12 = ssub.s32 1, %s10
  %s13 = scalar_select 0, %s12, %s10
  %14 = sst [smem:[#allocation2]] %s8
  $region1: #{tpu_custom_call.1} parent=0
    #allocation3 [shape = 'u8[1024]{0}', space=vmem, size = 0x400, scoped, tag = 'output window, operand 0']
    #allocation4 [shape = 's32[2]{0}', space=sflag, size = 0x8, scoped, tag = 'scoped memory for tpu_custom_call.1']
    %15 = vsyncpa [#allocation4], 0
    %s16 = scalar_lea.sflag [#allocation4], 1
    %17 = vsyncpa %s16, 0
    loop: start=0, step=1, limit=5
    $region2: #{tpu_custom_call.1} parent=1 // loop_pre_header
      _
    $region3: #{tpu_custom_call.1} parent=1 // loop_header
      %s19 = sphi 0, %s23
      %p20 = scmp.ge.s32.totalorder %s19, 5
      %s29 = sphi 0, %s31
      %s32 = sphi 0, %s29
      %s33 = sphi 0, %s32
      %s49 = sphi 0, %s33
      %s53 = sphi 0, %s53
      %s55 = sphi 0, %s53
      %s56 = sphi 0, %s55
      %s70 = sphi 0, %s56
      %s74 = sphi 0, %s74
      %s76 = sphi 0, %s74
      %s77 = sphi 0, %s76
      %s91 = sphi 0, %s77
      %s95 = sphi 0, %s95
      %s97 = sphi 0, %s95
      %s98 = sphi 0, %s97
      %s112 = sphi 0, %s98
      %s116 = sphi 0, %s116
      %s118 = sphi 0, %s116
      %s119 = sphi 0, %s118
      %s133 = sphi 0, %s119
      %s137 = sphi 0, %s137
      %s139 = sphi 0, %s137
      %s140 = sphi 0, %s139
      %s154 = sphi 0, %s140
      %s158 = sphi 0, %s158
      %s160 = sphi 0, %s158
      %s161 = sphi 0, %s160
      %s175 = sphi 0, %s161
      %s179 = sphi 0, %s179
      %s181 = sphi 0, %s179
      %s182 = sphi 0, %s181
      %s196 = sphi 0, %s182
      %s200 = sphi 0, %s200
      %s202 = sphi 0, %s200
      %s203 = sphi 0, %s202
      %s217 = sphi 0, %s203
      %s223 = sphi 0, %s225
      %s226 = sphi 0, %s223
      %s227 = sphi 0, %s226
      %s243 = sphi 0, %s227
    $region4: #{tpu_custom_call.1} parent=1 // loop_header_branch
      %22 = sbr.rel (%p20) target = $region8
    $region5: #{tpu_custom_call.1} parent=1 // loop_body
      %s24 = ssub.s32 %s19, 1
      %s25 = ssub.s32 %s19, 2
      %s26 = sadd.s32 %s19, 1
      %s27 = ssub.s32 %s19, %s26
      %p28 = scmp.eq.s32.totalorder %s27, 0
      %s30 = sadd.s32 %s29, 1
      %s31 = scalar_select %p28, %s29, %s30
      %p34 = pneg %p28
      %p35 = scmp.eq.s32.totalorder %s19, 2
      %p36 = por %p34, %p35
      %p37 = scmp.ne.s32.totalorder %s29, %s32
      %p38 = scmp.eq.s32.totalorder %s19, 0
      %p39 = por %p37, %p38
      %p40 = scmp.ne.s32.totalorder %s29, %s32
      %p41 = scmp.eq.s32.totalorder %s24, 2
      %p42 = por %p40, %p41
      %p43 = scmp.ne.s32.totalorder %s32, %s33
      %p44 = scmp.eq.s32.totalorder %s24, 0
      %p45 = por %p43, %p44
      %p46 = scmp.ne.s32.totalorder %s32, %s33
      %p47 = scmp.eq.s32.totalorder %s25, 2
      %p48 = por %p46, %p47
      %p50 = scmp.ne.s32.totalorder %s33, %s49
      %p51 = scmp.eq.s32.totalorder %s25, 0
      %p52 = por %p50, %p51
      %s54 = sadd.s32 %s53, 1
      %p57 = scmp.eq.s32.totalorder %s19, 2
      %p58 = scmp.ne.s32.totalorder %s53, %s55
      %p59 = scmp.eq.s32.totalorder %s19, 0
      %p60 = por %p58, %p59
      %p61 = scmp.ne.s32.totalorder %s53, %s55
      %p62 = scmp.eq.s32.totalorder %s24, 2
      %p63 = por %p61, %p62
      %p64 = scmp.ne.s32.totalorder %s55, %s56
      %p65 = scmp.eq.s32.totalorder %s24, 0
      %p66 = por %p64, %p65
      %p67 = scmp.ne.s32.totalorder %s55, %s56
      %p68 = scmp.eq.s32.totalorder %s25, 2
      %p69 = por %p67, %p68
      %p71 = scmp.ne.s32.totalorder %s56, %s70
      %p72 = scmp.eq.s32.totalorder %s25, 0
      %p73 = por %p71, %p72
      %s75 = sadd.s32 %s74, 1
      %p78 = scmp.eq.s32.totalorder %s19, 2
      %p79 = scmp.ne.s32.totalorder %s74, %s76
      %p80 = scmp.eq.s32.totalorder %s19, 0
      %p81 = por %p79, %p80
      %p82 = scmp.ne.s32.totalorder %s74, %s76
      %p83 = scmp.eq.s32.totalorder %s24, 2
      %p84 = por %p82, %p83
      %p85 = scmp.ne.s32.totalorder %s76, %s77
      %p86 = scmp.eq.s32.totalorder %s24, 0
      %p87 = por %p85, %p86
      %p88 = scmp.ne.s32.totalorder %s76, %s77
      %p89 = scmp.eq.s32.totalorder %s25, 2
      %p90 = por %p88, %p89
      %p92 = scmp.ne.s32.totalorder %s77, %s91
      %p93 = scmp.eq.s32.totalorder %s25, 0
      %p94 = por %p92, %p93
      %s96 = sadd.s32 %s95, 1
      %p99 = scmp.eq.s32.totalorder %s19, 2
      %p100 = scmp.ne.s32.totalorder %s95, %s97
      %p101 = scmp.eq.s32.totalorder %s19, 0
      %p102 = por %p100, %p101
      %p103 = scmp.ne.s32.totalorder %s95, %s97
      %p104 = scmp.eq.s32.totalorder %s24, 2
      %p105 = por %p103, %p104
      %p106 = scmp.ne.s32.totalorder %s97, %s98
      %p107 = scmp.eq.s32.totalorder %s24, 0
      %p108 = por %p106, %p107
      %p109 = scmp.ne.s32.totalorder %s97, %s98
      %p110 = scmp.eq.s32.totalorder %s25, 2
      %p111 = por %p109, %p110
      %p113 = scmp.ne.s32.totalorder %s98, %s112
      %p114 = scmp.eq.s32.totalorder %s25, 0
      %p115 = por %p113, %p114
      %s117 = sadd.s32 %s116, 1
      %p120 = scmp.eq.s32.totalorder %s19, 2
      %p121 = scmp.ne.s32.totalorder %s116, %s118
      %p122 = scmp.eq.s32.totalorder %s19, 0
      %p123 = por %p121, %p122
      %p124 = scmp.ne.s32.totalorder %s116, %s118
      %p125 = scmp.eq.s32.totalorder %s24, 2
      %p126 = por %p124, %p125
      %p127 = scmp.ne.s32.totalorder %s118, %s119
      %p128 = scmp.eq.s32.totalorder %s24, 0
      %p129 = por %p127, %p128
      %p130 = scmp.ne.s32.totalorder %s118, %s119
      %p131 = scmp.eq.s32.totalorder %s25, 2
      %p132 = por %p130, %p131
      %p134 = scmp.ne.s32.totalorder %s119, %s133
      %p135 = scmp.eq.s32.totalorder %s25, 0
      %p136 = por %p134, %p135
      %s138 = sadd.s32 %s137, 1
      %p141 = scmp.eq.s32.totalorder %s19, 2
      %p142 = scmp.ne.s32.totalorder %s137, %s139
      %p143 = scmp.eq.s32.totalorder %s19, 0
      %p144 = por %p142, %p143
      %p145 = scmp.ne.s32.totalorder %s137, %s139
      %p146 = scmp.eq.s32.totalorder %s24, 2
      %p147 = por %p145, %p146
      %p148 = scmp.ne.s32.totalorder %s139, %s140
      %p149 = scmp.eq.s32.totalorder %s24, 0
      %p150 = por %p148, %p149
      %p151 = scmp.ne.s32.totalorder %s139, %s140
      %p152 = scmp.eq.s32.totalorder %s25, 2
      %p153 = por %p151, %p152
      %p155 = scmp.ne.s32.totalorder %s140, %s154
      %p156 = scmp.eq.s32.totalorder %s25, 0
      %p157 = por %p155, %p156
      %s159 = sadd.s32 %s158, 1
      %p162 = scmp.eq.s32.totalorder %s19, 2
      %p163 = scmp.ne.s32.totalorder %s158, %s160
      %p164 = scmp.eq.s32.totalorder %s19, 0
      %p165 = por %p163, %p164
      %p166 = scmp.ne.s32.totalorder %s158, %s160
      %p167 = scmp.eq.s32.totalorder %s24, 2
      %p168 = por %p166, %p167
      %p169 = scmp.ne.s32.totalorder %s160, %s161
      %p170 = scmp.eq.s32.totalorder %s24, 0
      %p171 = por %p169, %p170
      %p172 = scmp.ne.s32.totalorder %s160, %s161
      %p173 = scmp.eq.s32.totalorder %s25, 2
      %p174 = por %p172, %p173
      %p176 = scmp.ne.s32.totalorder %s161, %s175
      %p177 = scmp.eq.s32.totalorder %s25, 0
      %p178 = por %p176, %p177
      %s180 = sadd.s32 %s179, 1
      %p183 = scmp.eq.s32.totalorder %s19, 2
      %p184 = scmp.ne.s32.totalorder %s179, %s181
      %p185 = scmp.eq.s32.totalorder %s19, 0
      %p186 = por %p184, %p185
      %p187 = scmp.ne.s32.totalorder %s179, %s181
      %p188 = scmp.eq.s32.totalorder %s24, 2
      %p189 = por %p187, %p188
      %p190 = scmp.ne.s32.totalorder %s181, %s182
      %p191 = scmp.eq.s32.totalorder %s24, 0
      %p192 = por %p190, %p191
      %p193 = scmp.ne.s32.totalorder %s181, %s182
      %p194 = scmp.eq.s32.totalorder %s25, 2
      %p195 = por %p193, %p194
      %p197 = scmp.ne.s32.totalorder %s182, %s196
      %p198 = scmp.eq.s32.totalorder %s25, 0
      %p199 = por %p197, %p198
      %s201 = sadd.s32 %s200, 1
      %p204 = scmp.eq.s32.totalorder %s19, 2
      %p205 = scmp.ne.s32.totalorder %s200, %s202
      %p206 = scmp.eq.s32.totalorder %s19, 0
      %p207 = por %p205, %p206
      %p208 = scmp.ne.s32.totalorder %s200, %s202
      %p209 = scmp.eq.s32.totalorder %s24, 2
      %p210 = por %p208, %p209
      %p211 = scmp.ne.s32.totalorder %s202, %s203
      %p212 = scmp.eq.s32.totalorder %s24, 0
      %p213 = por %p211, %p212
      %p214 = scmp.ne.s32.totalorder %s202, %s203
      %p215 = scmp.eq.s32.totalorder %s25, 2
      %p216 = por %p214, %p215
      %p218 = scmp.ne.s32.totalorder %s203, %s217
      %p219 = scmp.eq.s32.totalorder %s25, 0
      %p220 = por %p218, %p219
      %s221 = ssub.s32 %s19, %s26
      %p222 = scmp.eq.s32.totalorder %s221, 0
      %s224 = sadd.s32 %s223, 1
      %s225 = scalar_select %p222, %s223, %s224
      %p228 = pneg %p222
      %p229 = scmp.eq.s32.totalorder %s19, 2
      %p230 = por %p228, %p229
      %p231 = scmp.ne.s32.totalorder %s223, %s226
      %p232 = scmp.eq.s32.totalorder %s19, 0
      %p233 = por %p231, %p232
      %p234 = scmp.ne.s32.totalorder %s223, %s226
      %p235 = scmp.eq.s32.totalorder %s24, 2
      %p236 = por %p234, %p235
      %p237 = scmp.ne.s32.totalorder %s226, %s227
      %p238 = scmp.eq.s32.totalorder %s24, 0
      %p239 = por %p237, %p238
      %p240 = scmp.ne.s32.totalorder %s226, %s227
      %p241 = scmp.eq.s32.totalorder %s25, 2
      %p242 = por %p240, %p241
      %p244 = scmp.ne.s32.totalorder %s227, %s243
      %p245 = scmp.eq.s32.totalorder %s25, 0
      %p246 = por %p244, %p245
      %p247 = scmp.le.s32.totalorder 1, %s19
      %p248 = scmp.lt.s32.totalorder %s19, 4
      %p249 = pnand %p247, %p248
      %p250 = pneg %p249
      // Predicated region
      $region9: #{tpu_custom_call.1} parent=5 // pred_check
        _
      $region10: #{tpu_custom_call.1} parent=5 // pred_check_branch
        %252 = sbr.rel (%p249) target = $region12
      $region11: #{tpu_custom_call.1} parent=5 // pred_region
        %s253 = ssub.s32 %s19, 1
        // Predicated region
        $region13: #{tpu_custom_call.1} parent=11 // pred_check
          %p254 = pneg %p66
        $region14: #{tpu_custom_call.1} parent=11 // pred_check_branch
          %256 = sbr.rel (%p254) target = $region16
        $region15: #{tpu_custom_call.1} parent=11 // pred_region
          _
        $region16: #{tpu_custom_call.1} parent=11 // pred_fallthru
          _
        // Predicated region
        $region17: #{tpu_custom_call.1} parent=11 // pred_check
          %p257 = pneg %p87
        $region18: #{tpu_custom_call.1} parent=11 // pred_check_branch
          %259 = sbr.rel (%p257) target = $region20
        $region19: #{tpu_custom_call.1} parent=11 // pred_region
          _
        $region20: #{tpu_custom_call.1} parent=11 // pred_fallthru
          _
        // Predicated region
        $region21: #{tpu_custom_call.1} parent=11 // pred_check
          %p260 = pneg %p108
        $region22: #{tpu_custom_call.1} parent=11 // pred_check_branch
          %262 = sbr.rel (%p260) target = $region24
        $region23: #{tpu_custom_call.1} parent=11 // pred_region
          _
        $region24: #{tpu_custom_call.1} parent=11 // pred_fallthru
          _
        // Predicated region
        $region25: #{tpu_custom_call.1} parent=11 // pred_check
          %p263 = pneg %p129
        $region26: #{tpu_custom_call.1} parent=11 // pred_check_branch
          %265 = sbr.rel (%p263) target = $region28
        $region27: #{tpu_custom_call.1} parent=11 // pred_region
          _
        $region28: #{tpu_custom_call.1} parent=11 // pred_fallthru
          _
        // Predicated region
        $region29: #{tpu_custom_call.1} parent=11 // pred_check
          %p266 = pneg %p150
        $region30: #{tpu_custom_call.1} parent=11 // pred_check_branch
          %268 = sbr.rel (%p266) target = $region32
        $region31: #{tpu_custom_call.1} parent=11 // pred_region
          _
        $region32: #{tpu_custom_call.1} parent=11 // pred_fallthru
          _
        // Predicated region
        $region33: #{tpu_custom_call.1} parent=11 // pred_check
          %p269 = pneg %p171
        $region34: #{tpu_custom_call.1} parent=11 // pred_check_branch
          %271 = sbr.rel (%p269) target = $region36
        $region35: #{tpu_custom_call.1} parent=11 // pred_region
          _
        $region36: #{tpu_custom_call.1} parent=11 // pred_fallthru
          _
        // Predicated region
        $region37: #{tpu_custom_call.1} parent=11 // pred_check
          %p272 = pneg %p192
        $region38: #{tpu_custom_call.1} parent=11 // pred_check_branch
          %274 = sbr.rel (%p272) target = $region40
        $region39: #{tpu_custom_call.1} parent=11 // pred_region
          _
        $region40: #{tpu_custom_call.1} parent=11 // pred_fallthru
          _
        // Predicated region
        $region41: #{tpu_custom_call.1} parent=11 // pred_check
          %p275 = pneg %p213
        $region42: #{tpu_custom_call.1} parent=11 // pred_check_branch
          %277 = sbr.rel (%p275) target = $region44
        $region43: #{tpu_custom_call.1} parent=11 // pred_region
          _
        $region44: #{tpu_custom_call.1} parent=11 // pred_fallthru
          _
      $region12: #{tpu_custom_call.1} parent=5 // pred_fallthru
        _
      %p278 = scmp.lt.s32.totalorder %s19, 3
      // Predicated region
      $region45: #{tpu_custom_call.1} parent=5 // pred_check
        %p279 = pneg %p278
      $region46: #{tpu_custom_call.1} parent=5 // pred_check_branch
        %281 = sbr.rel (%p279) target = $region48
      $region47: #{tpu_custom_call.1} parent=5 // pred_region
        // Predicated region
        $region49: #{tpu_custom_call.1} parent=47 // pred_check
          %p282 = pneg %p39
        $region50: #{tpu_custom_call.1} parent=47 // pred_check_branch
          %284 = sbr.rel (%p282) target = $region52
        $region51: #{tpu_custom_call.1} parent=47 // pred_region
          %s285 = smul.u32 16, %s19
          %p286 = scmp.lt.s32.totalorder %s285, 47
          %s287 = scalar_select %p286, %s285, 47
          %s288 = smul.addr %s287, 8
          %s289 = scalar_lea.vmem %s0, %s288
          %s290 = smul.u32 16, %s19
        $region52: #{tpu_custom_call.1} parent=47 // pred_fallthru
          _
      $region48: #{tpu_custom_call.1} parent=5 // pred_fallthru
        _
      %p291 = scmp.le.s32.totalorder 1, %s19
      %p292 = scmp.lt.s32.totalorder %s19, 4
      %p293 = pnand %p291, %p292
      %p294 = pneg %p293
      // Predicated region
      $region53: #{tpu_custom_call.1} parent=5 // pred_check
        _
      $region54: #{tpu_custom_call.1} parent=5 // pred_check_branch
        %296 = sbr.rel (%p293) target = $region56
      $region55: #{tpu_custom_call.1} parent=5 // pred_region
        %s297 = ssub.s32 %s19, 1
        %s298 = smul.u32 16, %s24
        %p299 = scmp.lt.s32.totalorder %s298, 47
        %s300 = scalar_select %p299, %s298, 47
        %s301 = smul.addr %s300, 8
        %s302 = scalar_lea.vmem %s0, %s301
        %p303 = pneg %p45
        %p304 = pneg %p42
        %p305 = pneg %p66
        %p306 = pneg %p63
        %p307 = pneg %p87
        %p308 = pneg %p84
        %p309 = pneg %p108
        %p310 = pneg %p105
        %p311 = pneg %p129
        %p312 = pneg %p126
        %p313 = pneg %p150
        %p314 = pneg %p147
        %p315 = pneg %p171
        %p316 = pneg %p168
        %p317 = pneg %p192
        %p318 = pneg %p189
        %p319 = pneg %p213
        %p320 = pneg %p210
        %p321 = pneg %p239
        %p322 = pneg %p236
        %s323 = sand.u32 %s226, 1
        %s324 = scalar_lea.sflag [#allocation4], %s323
        %s325 = sand.u32 %s226, 1
        %s326 = scalar_lea.vmem [#allocation3], %s325
        %s327 = smul.u32 16, %s24
        %p328 = scmp.lt.s32.totalorder %s327, 47
        %s329 = scalar_select %p328, %s327, 47
        %s330 = smul.addr %s329, 8
        %s331 = scalar_lea.vmem %s0, %s330
        %s332 = smul.u32 16, %s24
        %v333 = vld [vmem:[%s331] sm:$0xff]
        %v334 = vld [vmem:[%s331 + $0x8] sm:$0xff]
        %v335 = vld [vmem:[%s331 + $0x10] sm:$0xff]
        %v336 = vld [vmem:[%s331 + $0x18] sm:$0xff]
        %v337 = vld [vmem:[%s331 + $0x20] sm:$0xff]
        %v338 = vld [vmem:[%s331 + $0x28] sm:$0xff]
        %v339 = vld [vmem:[%s331 + $0x30] sm:$0xff]
        %v340 = vld [vmem:[%s331 + $0x38] sm:$0xff]
        %v341 = vld [vmem:[%s331 + $0x40] sm:$0xff]
        %v342 = vld [vmem:[%s331 + $0x48] sm:$0xff]
        %v343 = vld [vmem:[%s331 + $0x50] sm:$0xff]
        %v344 = vld [vmem:[%s331 + $0x58] sm:$0xff]
        %v345 = vld [vmem:[%s331 + $0x60] sm:$0xff]
        %v346 = vld [vmem:[%s331 + $0x68] sm:$0xff]
        %v347 = vld [vmem:[%s331 + $0x70] sm:$0xff]
        %v348 = vld [vmem:[%s331 + $0x78] sm:$0xff]
        %v349 = vld [vmem:[%s1] sm:$0xff]
        %v350 = vld [vmem:[%s1 + $0x8] sm:$0xff]
        %v351 = vld [vmem:[%s1 + $0x10] sm:$0xff]
        %v352 = vld [vmem:[%s1 + $0x18] sm:$0xff]
        %v353 = vld [vmem:[%s2] sm:$0x1]
        %v355 = vlaneseq
        %v356 = vshrl.u32 %v355, 7
        %v357 = vsub.s32 0, %v356
        %v358 = vrot.slane %v353, %v357
        %vm360 = vcmask 261120
        %v362 = vsel %vm360, %v333, 0
        %v365 = vsel %vm360, %v334, 0
        %v368 = vsel %vm360, %v335, 0
        %v371 = vsel %vm360, %v336, 0
        %v374 = vsel %vm360, %v337, 0
        %v377 = vsel %vm360, %v338, 0
        %v380 = vsel %vm360, %v339, 0
        %v383 = vsel %vm360, %v340, 0
        %v386 = vsel %vm360, %v341, 0
        %v389 = vsel %vm360, %v342, 0
        %v392 = vsel %vm360, %v343, 0
        %v395 = vsel %vm360, %v344, 0
        %v398 = vsel %vm360, %v345, 0
        %v401 = vsel %vm360, %v346, 0
        %v404 = vsel %vm360, %v347, 0
        %v407 = vsel %vm360, %v348, 0
        %409 = vmatprep.subr.mxu0 0.0
        %410 = vmatpush1.msra.mxu0 0.0
        %411 = vmatprep.subr.mxu0 0.0
        %412 = vmatpush1.msra.mxu0 0.0
        %413 = vmatprep.subr.mxu0 0.0
        %414 = vmatpush1.msra.mxu0 0.0
        %415 = vmatprep.subr.mxu0 0.0
        %416 = vmatpush1.msra.mxu0 0.0
        %417 = vmatprep.subr.mxu0 0.0
        %418 = vmatpush1.msra.mxu0 0.0
        %419 = vmatprep.subr.mxu0 0.0
        %420 = vmatpush1.msra.mxu0 0.0
        %421 = vmatprep.subr.mxu0 0.0
        %422 = vmatpush1.msra.mxu0 0.0
        %423 = vmatprep.subr.mxu0 0.0
        %424 = vmatpush1.msra.mxu0 0.0
        %425 = vmatprep.subr.mxu0 0.0
        %426 = vmatpush1.msra.mxu0 0.0
        %427 = vmatprep.subr.mxu0 0.0
        %428 = vmatpush1.msra.mxu0 0.0
        %429 = vmatprep.subr.mxu0 0.0
        %430 = vmatpush1.msra.mxu0 0.0
        %431 = vmatprep.subr.mxu0 0.0
        %432 = vmatpush1.msra.mxu0 0.0
        %433 = vmatprep.subr.mxu0 0.0
        %434 = vmatpush1.msra.mxu0 %v352
        %435 = vmatprep.subr.mxu0 0.0
        %436 = vmatpush1.msra.mxu0 %v351
        %437 = vmatprep.subr.mxu0 0.0
        %438 = vmatpush1.msra.mxu0 %v350
        %439 = vmatprep.subr.mxu0 0.0
        %440 = vmatpush1.msra.mxu0 %v349
        %441 = vmatprep.subr.mxu0 0.0
        %442 = vmatpush2.msra.mxu0 0.0
        %443 = vmatprep.subr.mxu0 0.0
        %444 = vmatpush2.msra.mxu0 0.0
        %445 = vmatprep.subr.mxu0 0.0
        %446 = vmatpush2.msra.mxu0 0.0
        %447 = vmatprep.subr.mxu0 0.0
        %448 = vmatpush2.msra.mxu0 0.0
        %449 = vmatprep.subr.mxu0 0.0
        %450 = vmatpush2.msra.mxu0 0.0
        %451 = vmatprep.subr.mxu0 0.0
        %452 = vmatpush2.msra.mxu0 0.0
        %453 = vmatprep.subr.mxu0 0.0
        %454 = vmatpush2.msra.mxu0 0.0
        %455 = vmatprep.subr.mxu0 0.0
        %456 = vmatpush2.msra.mxu0 0.0
        %457 = vmatprep.subr.mxu0 0.0
        %458 = vmatpush2.msra.mxu0 0.0
        %459 = vmatprep.subr.mxu0 0.0
        %460 = vmatpush2.msra.mxu0 0.0
        %461 = vmatprep.subr.mxu0 0.0
        %462 = vmatpush2.msra.mxu0 0.0
        %463 = vmatprep.subr.mxu0 0.0
        %464 = vmatpush2.msra.mxu0 0.0
        %465 = vmatprep.subr.mxu0 0.0
        %466 = vmatpush2.msra.mxu0 0.0
        %467 = vmatprep.subr.mxu0 0.0
        %468 = vmatpush2.msra.mxu0 0.0
        %469 = vmatprep.subr.mxu0 0.0
        %470 = vmatpush2.msra.mxu0 0.0
        %471 = vmatprep.subr.mxu0 0.0
        %472 = vmatpush2.msra.mxu0 0.0
        %473 = vmatprep.mubr.f32.mxu0 0.0
        %474 = vmatmul.mubr.f32.gmra.mxu0 %v362
        %v475 = vpop.f32.mrf.mxu0
        %v476 = vadd.f32 %v358, %v475
        %v477 = vpop.f32.mrf.mxu0
        %478 = vmatprep.mubr.f32.mxu0 0.0
        %479 = vmatmul.mubr.f32.gmra.mxu0 %v365
        %v480 = vpop.f32.mrf.mxu0
        %v481 = vadd.f32 %v358, %v480
        %v482 = vpop.f32.mrf.mxu0
        %483 = vmatprep.mubr.f32.mxu0 0.0
        %484 = vmatmul.mubr.f32.gmra.mxu0 %v368
        %v485 = vpop.f32.mrf.mxu0
        %v486 = vadd.f32 %v358, %v485
        %v487 = vpop.f32.mrf.mxu0
        %488 = vmatprep.mubr.f32.mxu0 0.0
        %489 = vmatmul.mubr.f32.gmra.mxu0 %v371
        %v490 = vpop.f32.mrf.mxu0
        %v491 = vadd.f32 %v358, %v490
        %v492 = vpop.f32.mrf.mxu0
        %493 = vmatprep.mubr.f32.mxu0 0.0
        %494 = vmatmul.mubr.f32.gmra.mxu0 %v374
        %v495 = vpop.f32.mrf.mxu0
        %v496 = vadd.f32 %v358, %v495
        %v497 = vpop.f32.mrf.mxu0
        %498 = vmatprep.mubr.f32.mxu0 0.0
        %499 = vmatmul.mubr.f32.gmra.mxu0 %v377
        %v500 = vpop.f32.mrf.mxu0
        %v501 = vadd.f32 %v358, %v500
        %v502 = vpop.f32.mrf.mxu0
        %503 = vmatprep.mubr.f32.mxu0 0.0
        %504 = vmatmul.mubr.f32.gmra.mxu0 %v380
        %v505 = vpop.f32.mrf.mxu0
        %v506 = vadd.f32 %v358, %v505
        %v507 = vpop.f32.mrf.mxu0
        %508 = vmatprep.mubr.f32.mxu0 0.0
        %509 = vmatmul.mubr.f32.gmra.mxu0 %v383
        %v510 = vpop.f32.mrf.mxu0
        %v511 = vadd.f32 %v358, %v510
        %v512 = vpop.f32.mrf.mxu0
        %513 = vmatprep.mubr.f32.mxu0 0.0
        %514 = vmatmul.mubr.f32.gmra.mxu0 %v386
        %v515 = vpop.f32.mrf.mxu0
        %v516 = vadd.f32 %v358, %v515
        %v517 = vpop.f32.mrf.mxu0
        %518 = vmatprep.mubr.f32.mxu0 0.0
        %519 = vmatmul.mubr.f32.gmra.mxu0 %v389
        %v520 = vpop.f32.mrf.mxu0
        %v521 = vadd.f32 %v358, %v520
        %v522 = vpop.f32.mrf.mxu0
        %523 = vmatprep.mubr.f32.mxu0 0.0
        %524 = vmatmul.mubr.f32.gmra.mxu0 %v392
        %v525 = vpop.f32.mrf.mxu0
        %v526 = vadd.f32 %v358, %v525
        %v527 = vpop.f32.mrf.mxu0
        %528 = vmatprep.mubr.f32.mxu0 0.0
        %529 = vmatmul.mubr.f32.gmra.mxu0 %v395
        %v530 = vpop.f32.mrf.mxu0
        %v531 = vadd.f32 %v358, %v530
        %v532 = vpop.f32.mrf.mxu0
        %533 = vmatprep.mubr.f32.mxu0 0.0
        %534 = vmatmul.mubr.f32.gmra.mxu0 %v398
        %v535 = vpop.f32.mrf.mxu0
        %v536 = vadd.f32 %v358, %v535
        %v537 = vpop.f32.mrf.mxu0
        %538 = vmatprep.mubr.f32.mxu0 0.0
        %539 = vmatmul.mubr.f32.gmra.mxu0 %v401
        %v540 = vpop.f32.mrf.mxu0
        %v541 = vadd.f32 %v358, %v540
        %v542 = vpop.f32.mrf.mxu0
        %543 = vmatprep.mubr.f32.mxu0 0.0
        %544 = vmatmul.mubr.f32.gmra.mxu0 %v404
        %v545 = vpop.f32.mrf.mxu0
        %v546 = vadd.f32 %v358, %v545
        %v547 = vpop.f32.mrf.mxu0
        %548 = vmatprep.mubr.f32.mxu0 0.0
        %549 = vmatmul.mubr.f32.gmra.mxu0 %v407
        %v550 = vpop.f32.mrf.mxu0
        %v551 = vadd.f32 %v358, %v550
        %v552 = vpop.f32.mrf.mxu0
        %553 = vdwg.mxu0
        %v554 = vmax.f32 %v476, 0.0
        %v555 = vmax.f32 %v481, 0.0
        %v556 = vmax.f32 %v486, 0.0
        %v557 = vmax.f32 %v491, 0.0
        %v558 = vmax.f32 %v496, 0.0
        %v559 = vmax.f32 %v501, 0.0
        %v560 = vmax.f32 %v506, 0.0
        %v561 = vmax.f32 %v511, 0.0
        %v562 = vmax.f32 %v516, 0.0
        %v563 = vmax.f32 %v521, 0.0
        %v564 = vmax.f32 %v526, 0.0
        %v565 = vmax.f32 %v531, 0.0
        %v566 = vmax.f32 %v536, 0.0
        %v567 = vmax.f32 %v541, 0.0
        %v568 = vmax.f32 %v546, 0.0
        %v569 = vmax.f32 %v551, 0.0
        %v570 = vld [vmem:[%s3] sm:$0xff]
        %v571 = vld [vmem:[%s3 + $0x8] sm:$0xff]
        %v572 = vld [vmem:[%s3 + $0x10] sm:$0xff]
        %v573 = vld [vmem:[%s3 + $0x18] sm:$0xff]
        %v574 = vld [vmem:[%s3 + $0x20] sm:$0xff]
        %v575 = vld [vmem:[%s3 + $0x28] sm:$0xff]
        %v576 = vld [vmem:[%s3 + $0x30] sm:$0xff]
        %v577 = vld [vmem:[%s3 + $0x38] sm:$0xff]
        %v578 = vld [vmem:[%s4] sm:$0x1]
        %v580 = vlaneseq
        %v581 = vshrl.u32 %v580, 7
        %v582 = vsub.s32 0, %v581
        %v583 = vrot.slane %v578, %v582
        %vm585 = vcmask 523264
        %v587 = vsel %vm585, %v554, 0
        %v590 = vsel %vm585, %v555, 0
        %v593 = vsel %vm585, %v556, 0
        %v596 = vsel %vm585, %v557, 0
        %v599 = vsel %vm585, %v558, 0
        %v602 = vsel %vm585, %v559, 0
        %v605 = vsel %vm585, %v560, 0
        %v608 = vsel %vm585, %v561, 0
        %v611 = vsel %vm585, %v562, 0
        %v614 = vsel %vm585, %v563, 0
        %v617 = vsel %vm585, %v564, 0
        %v620 = vsel %vm585, %v565, 0
        %v623 = vsel %vm585, %v566, 0
        %v626 = vsel %vm585, %v567, 0
        %v629 = vsel %vm585, %v568, 0
        %v632 = vsel %vm585, %v569, 0
        %634 = vmatprep.subr.mxu0 0.0
        %635 = vmatpush1.msra.mxu0 0.0
        %636 = vmatprep.subr.mxu0 0.0
        %637 = vmatpush1.msra.mxu0 0.0
        %638 = vmatprep.subr.mxu0 0.0
        %639 = vmatpush1.msra.mxu0 0.0
        %640 = vmatprep.subr.mxu0 0.0
        %641 = vmatpush1.msra.mxu0 0.0
        %642 = vmatprep.subr.mxu0 0.0
        %643 = vmatpush1.msra.mxu0 0.0
        %644 = vmatprep.subr.mxu0 0.0
        %645 = vmatpush1.msra.mxu0 0.0
        %646 = vmatprep.subr.mxu0 0.0
        %647 = vmatpush1.msra.mxu0 0.0
        %648 = vmatprep.subr.mxu0 0.0
        %649 = vmatpush1.msra.mxu0 0.0
        %650 = vmatprep.subr.mxu0 0.0
        %651 = vmatpush1.msra.mxu0 %v577
        %652 = vmatprep.subr.mxu0 0.0
        %653 = vmatpush1.msra.mxu0 %v576
        %654 = vmatprep.subr.mxu0 0.0
        %655 = vmatpush1.msra.mxu0 %v575
        %656 = vmatprep.subr.mxu0 0.0
        %657 = vmatpush1.msra.mxu0 %v574
        %658 = vmatprep.subr.mxu0 0.0
        %659 = vmatpush1.msra.mxu0 %v573
        %660 = vmatprep.subr.mxu0 0.0
        %661 = vmatpush1.msra.mxu0 %v572
        %662 = vmatprep.subr.mxu0 0.0
        %663 = vmatpush1.msra.mxu0 %v571
        %664 = vmatprep.subr.mxu0 0.0
        %665 = vmatpush1.msra.mxu0 %v570
        %666 = vmatprep.subr.mxu0 0.0
        %667 = vmatpush2.msra.mxu0 0.0
        %668 = vmatprep.subr.mxu0 0.0
        %669 = vmatpush2.msra.mxu0 0.0
        %670 = vmatprep.subr.mxu0 0.0
        %671 = vmatpush2.msra.mxu0 0.0
        %672 = vmatprep.subr.mxu0 0.0
        %673 = vmatpush2.msra.mxu0 0.0
        %674 = vmatprep.subr.mxu0 0.0
        %675 = vmatpush2.msra.mxu0 0.0
        %676 = vmatprep.subr.mxu0 0.0
        %677 = vmatpush2.msra.mxu0 0.0
        %678 = vmatprep.subr.mxu0 0.0
        %679 = vmatpush2.msra.mxu0 0.0
        %680 = vmatprep.subr.mxu0 0.0
        %681 = vmatpush2.msra.mxu0 0.0
        %682 = vmatprep.subr.mxu0 0.0
        %683 = vmatpush2.msra.mxu0 0.0
        %684 = vmatprep.subr.mxu0 0.0
        %685 = vmatpush2.msra.mxu0 0.0
        %686 = vmatprep.subr.mxu0 0.0
        %687 = vmatpush2.msra.mxu0 0.0
        %688 = vmatprep.subr.mxu0 0.0
        %689 = vmatpush2.msra.mxu0 0.0
        %690 = vmatprep.subr.mxu0 0.0
        %691 = vmatpush2.msra.mxu0 0.0
        %692 = vmatprep.subr.mxu0 0.0
        %693 = vmatpush2.msra.mxu0 0.0
        %694 = vmatprep.subr.mxu0 0.0
        %695 = vmatpush2.msra.mxu0 0.0
        %696 = vmatprep.subr.mxu0 0.0
        %697 = vmatpush2.msra.mxu0 0.0
        %698 = vmatprep.mubr.f32.mxu0 0.0
        %699 = vmatmul.mubr.f32.gmra.mxu0 %v587
        %v700 = vpop.f32.mrf.mxu0
        %v701 = vadd.f32 %v583, %v700
        %v702 = vpop.f32.mrf.mxu0
        %703 = vmatprep.mubr.f32.mxu0 0.0
        %704 = vmatmul.mubr.f32.gmra.mxu0 %v590
        %v705 = vpop.f32.mrf.mxu0
        %v706 = vadd.f32 %v583, %v705
        %v707 = vpop.f32.mrf.mxu0
        %708 = vmatprep.mubr.f32.mxu0 0.0
        %709 = vmatmul.mubr.f32.gmra.mxu0 %v593
        %v710 = vpop.f32.mrf.mxu0
        %v711 = vadd.f32 %v583, %v710
        %v712 = vpop.f32.mrf.mxu0
        %713 = vmatprep.mubr.f32.mxu0 0.0
        %714 = vmatmul.mubr.f32.gmra.mxu0 %v596
        %v715 = vpop.f32.mrf.mxu0
        %v716 = vadd.f32 %v583, %v715
        %v717 = vpop.f32.mrf.mxu0
        %718 = vmatprep.mubr.f32.mxu0 0.0
        %719 = vmatmul.mubr.f32.gmra.mxu0 %v599
        %v720 = vpop.f32.mrf.mxu0
        %v721 = vadd.f32 %v583, %v720
        %v722 = vpop.f32.mrf.mxu0
        %723 = vmatprep.mubr.f32.mxu0 0.0
        %724 = vmatmul.mubr.f32.gmra.mxu0 %v602
        %v725 = vpop.f32.mrf.mxu0
        %v726 = vadd.f32 %v583, %v725
        %v727 = vpop.f32.mrf.mxu0
        %728 = vmatprep.mubr.f32.mxu0 0.0
        %729 = vmatmul.mubr.f32.gmra.mxu0 %v605
        %v730 = vpop.f32.mrf.mxu0
        %v731 = vadd.f32 %v583, %v730
        %v732 = vpop.f32.mrf.mxu0
        %733 = vmatprep.mubr.f32.mxu0 0.0
        %734 = vmatmul.mubr.f32.gmra.mxu0 %v608
        %v735 = vpop.f32.mrf.mxu0
        %v736 = vadd.f32 %v583, %v735
        %v737 = vpop.f32.mrf.mxu0
        %738 = vmatprep.mubr.f32.mxu0 0.0
        %739 = vmatmul.mubr.f32.gmra.mxu0 %v611
        %v740 = vpop.f32.mrf.mxu0
        %v741 = vadd.f32 %v583, %v740
        %v742 = vpop.f32.mrf.mxu0
        %743 = vmatprep.mubr.f32.mxu0 0.0
        %744 = vmatmul.mubr.f32.gmra.mxu0 %v614
        %v745 = vpop.f32.mrf.mxu0
        %v746 = vadd.f32 %v583, %v745
        %v747 = vpop.f32.mrf.mxu0
        %748 = vmatprep.mubr.f32.mxu0 0.0
        %749 = vmatmul.mubr.f32.gmra.mxu0 %v617
        %v750 = vpop.f32.mrf.mxu0
        %v751 = vadd.f32 %v583, %v750
        %v752 = vpop.f32.mrf.mxu0
        %753 = vmatprep.mubr.f32.mxu0 0.0
        %754 = vmatmul.mubr.f32.gmra.mxu0 %v620
        %v755 = vpop.f32.mrf.mxu0
        %v756 = vadd.f32 %v583, %v755
        %v757 = vpop.f32.mrf.mxu0
        %758 = vmatprep.mubr.f32.mxu0 0.0
        %759 = vmatmul.mubr.f32.gmra.mxu0 %v623
        %v760 = vpop.f32.mrf.mxu0
        %v761 = vadd.f32 %v583, %v760
        %v762 = vpop.f32.mrf.mxu0
        %763 = vmatprep.mubr.f32.mxu0 0.0
        %764 = vmatmul.mubr.f32.gmra.mxu0 %v626
        %v765 = vpop.f32.mrf.mxu0
        %v766 = vadd.f32 %v583, %v765
        %v767 = vpop.f32.mrf.mxu0
        %768 = vmatprep.mubr.f32.mxu0 0.0
        %769 = vmatmul.mubr.f32.gmra.mxu0 %v629
        %v770 = vpop.f32.mrf.mxu0
        %v771 = vadd.f32 %v583, %v770
        %v772 = vpop.f32.mrf.mxu0
        %773 = vmatprep.mubr.f32.mxu0 0.0
        %774 = vmatmul.mubr.f32.gmra.mxu0 %v632
        %v775 = vpop.f32.mrf.mxu0
        %v776 = vadd.f32 %v583, %v775
        %v777 = vpop.f32.mrf.mxu0
        %778 = vdwg.mxu0
        %v779 = vmax.f32 %v701, 0.0
        %v780 = vmax.f32 %v706, 0.0
        %v781 = vmax.f32 %v711, 0.0
        %v782 = vmax.f32 %v716, 0.0
        %v783 = vmax.f32 %v721, 0.0
        %v784 = vmax.f32 %v726, 0.0
        %v785 = vmax.f32 %v731, 0.0
        %v786 = vmax.f32 %v736, 0.0
        %v787 = vmax.f32 %v741, 0.0
        %v788 = vmax.f32 %v746, 0.0
        %v789 = vmax.f32 %v751, 0.0
        %v790 = vmax.f32 %v756, 0.0
        %v791 = vmax.f32 %v761, 0.0
        %v792 = vmax.f32 %v766, 0.0
        %v793 = vmax.f32 %v771, 0.0
        %v794 = vmax.f32 %v776, 0.0
        %v795 = vld [vmem:[%s5] sm:$0xff]
        %v796 = vld [vmem:[%s5 + $0x8] sm:$0xff]
        %v797 = vld [vmem:[%s5 + $0x10] sm:$0xff]
        %v798 = vld [vmem:[%s5 + $0x18] sm:$0xff]
        %v799 = vld [vmem:[%s6] sm:$0x1]
        %v801 = vlaneseq
        %v802 = vshrl.u32 %v801, 7
        %v803 = vsub.s32 0, %v802
        %v804 = vrot.slane %v799, %v803
        %v807 = vsel %vm360, %v779, 0
        %v810 = vsel %vm360, %v780, 0
        %v813 = vsel %vm360, %v781, 0
        %v816 = vsel %vm360, %v782, 0
        %v819 = vsel %vm360, %v783, 0
        %v822 = vsel %vm360, %v784, 0
        %v825 = vsel %vm360, %v785, 0
        %v828 = vsel %vm360, %v786, 0
        %v831 = vsel %vm360, %v787, 0
        %v834 = vsel %vm360, %v788, 0
        %v837 = vsel %vm360, %v789, 0
        %v840 = vsel %vm360, %v790, 0
        %v843 = vsel %vm360, %v791, 0
        %v846 = vsel %vm360, %v792, 0
        %v849 = vsel %vm360, %v793, 0
        %v852 = vsel %vm360, %v794, 0
        %854 = vmatprep.subr.mxu0 0.0
        %855 = vmatpush1.msra.mxu0 0.0
        %856 = vmatprep.subr.mxu0 0.0
        %857 = vmatpush1.msra.mxu0 0.0
        %858 = vmatprep.subr.mxu0 0.0
        %859 = vmatpush1.msra.mxu0 0.0
        %860 = vmatprep.subr.mxu0 0.0
        %861 = vmatpush1.msra.mxu0 0.0
        %862 = vmatprep.subr.mxu0 0.0
        %863 = vmatpush1.msra.mxu0 0.0
        %864 = vmatprep.subr.mxu0 0.0
        %865 = vmatpush1.msra.mxu0 0.0
        %866 = vmatprep.subr.mxu0 0.0
        %867 = vmatpush1.msra.mxu0 0.0
        %868 = vmatprep.subr.mxu0 0.0
        %869 = vmatpush1.msra.mxu0 0.0
        %870 = vmatprep.subr.mxu0 0.0
        %871 = vmatpush1.msra.mxu0 0.0
        %872 = vmatprep.subr.mxu0 0.0
        %873 = vmatpush1.msra.mxu0 0.0
        %874 = vmatprep.subr.mxu0 0.0
        %875 = vmatpush1.msra.mxu0 0.0
        %876 = vmatprep.subr.mxu0 0.0
        %877 = vmatpush1.msra.mxu0 0.0
        %878 = vmatprep.subr.mxu0 0.0
        %879 = vmatpush1.msra.mxu0 %v798
        %880 = vmatprep.subr.mxu0 0.0
        %881 = vmatpush1.msra.mxu0 %v797
        %882 = vmatprep.subr.mxu0 0.0
        %883 = vmatpush1.msra.mxu0 %v796
        %884 = vmatprep.subr.mxu0 0.0
        %885 = vmatpush1.msra.mxu0 %v795
        %886 = vmatprep.subr.mxu0 0.0
        %887 = vmatpush2.msra.mxu0 0.0
        %888 = vmatprep.subr.mxu0 0.0
        %889 = vmatpush2.msra.mxu0 0.0
        %890 = vmatprep.subr.mxu0 0.0
        %891 = vmatpush2.msra.mxu0 0.0
        %892 = vmatprep.subr.mxu0 0.0
        %893 = vmatpush2.msra.mxu0 0.0
        %894 = vmatprep.subr.mxu0 0.0
        %895 = vmatpush2.msra.mxu0 0.0
        %896 = vmatprep.subr.mxu0 0.0
        %897 = vmatpush2.msra.mxu0 0.0
        %898 = vmatprep.subr.mxu0 0.0
        %899 = vmatpush2.msra.mxu0 0.0
        %900 = vmatprep.subr.mxu0 0.0
        %901 = vmatpush2.msra.mxu0 0.0
        %902 = vmatprep.subr.mxu0 0.0
        %903 = vmatpush2.msra.mxu0 0.0
        %904 = vmatprep.subr.mxu0 0.0
        %905 = vmatpush2.msra.mxu0 0.0
        %906 = vmatprep.subr.mxu0 0.0
        %907 = vmatpush2.msra.mxu0 0.0
        %908 = vmatprep.subr.mxu0 0.0
        %909 = vmatpush2.msra.mxu0 0.0
        %910 = vmatprep.subr.mxu0 0.0
        %911 = vmatpush2.msra.mxu0 0.0
        %912 = vmatprep.subr.mxu0 0.0
        %913 = vmatpush2.msra.mxu0 0.0
        %914 = vmatprep.subr.mxu0 0.0
        %915 = vmatpush2.msra.mxu0 0.0
        %916 = vmatprep.subr.mxu0 0.0
        %917 = vmatpush2.msra.mxu0 0.0
        %918 = vmatprep.mubr.f32.mxu0 0.0
        %919 = vmatmul.mubr.f32.gmra.mxu0 %v807
        %v920 = vpop.f32.mrf.mxu0
        %v921 = vadd.f32 %v804, %v920
        %v922 = vpop.f32.mrf.mxu0
        %923 = vmatprep.mubr.f32.mxu0 0.0
        %924 = vmatmul.mubr.f32.gmra.mxu0 %v810
        %v925 = vpop.f32.mrf.mxu0
        %v926 = vadd.f32 %v804, %v925
        %v927 = vpop.f32.mrf.mxu0
        %928 = vmatprep.mubr.f32.mxu0 0.0
        %929 = vmatmul.mubr.f32.gmra.mxu0 %v813
        %v930 = vpop.f32.mrf.mxu0
        %v931 = vadd.f32 %v804, %v930
        %v932 = vpop.f32.mrf.mxu0
        %933 = vmatprep.mubr.f32.mxu0 0.0
        %934 = vmatmul.mubr.f32.gmra.mxu0 %v816
        %v935 = vpop.f32.mrf.mxu0
        %v936 = vadd.f32 %v804, %v935
        %v937 = vpop.f32.mrf.mxu0
        %938 = vmatprep.mubr.f32.mxu0 0.0
        %939 = vmatmul.mubr.f32.gmra.mxu0 %v819
        %v940 = vpop.f32.mrf.mxu0
        %v941 = vadd.f32 %v804, %v940
        %v942 = vpop.f32.mrf.mxu0
        %943 = vmatprep.mubr.f32.mxu0 0.0
        %944 = vmatmul.mubr.f32.gmra.mxu0 %v822
        %v945 = vpop.f32.mrf.mxu0
        %v946 = vadd.f32 %v804, %v945
        %v947 = vpop.f32.mrf.mxu0
        %948 = vmatprep.mubr.f32.mxu0 0.0
        %949 = vmatmul.mubr.f32.gmra.mxu0 %v825
        %v950 = vpop.f32.mrf.mxu0
        %v951 = vadd.f32 %v804, %v950
        %v952 = vpop.f32.mrf.mxu0
        %953 = vmatprep.mubr.f32.mxu0 0.0
        %954 = vmatmul.mubr.f32.gmra.mxu0 %v828
        %v955 = vpop.f32.mrf.mxu0
        %v956 = vadd.f32 %v804, %v955
        %v957 = vpop.f32.mrf.mxu0
        %958 = vmatprep.mubr.f32.mxu0 0.0
        %959 = vmatmul.mubr.f32.gmra.mxu0 %v831
        %v960 = vpop.f32.mrf.mxu0
        %v961 = vadd.f32 %v804, %v960
        %v962 = vpop.f32.mrf.mxu0
        %963 = vmatprep.mubr.f32.mxu0 0.0
        %964 = vmatmul.mubr.f32.gmra.mxu0 %v834
        %v965 = vpop.f32.mrf.mxu0
        %v966 = vadd.f32 %v804, %v965
        %v967 = vpop.f32.mrf.mxu0
        %968 = vmatprep.mubr.f32.mxu0 0.0
        %969 = vmatmul.mubr.f32.gmra.mxu0 %v837
        %v970 = vpop.f32.mrf.mxu0
        %v971 = vadd.f32 %v804, %v970
        %v972 = vpop.f32.mrf.mxu0
        %973 = vmatprep.mubr.f32.mxu0 0.0
        %974 = vmatmul.mubr.f32.gmra.mxu0 %v840
        %v975 = vpop.f32.mrf.mxu0
        %v976 = vadd.f32 %v804, %v975
        %v977 = vpop.f32.mrf.mxu0
        %978 = vmatprep.mubr.f32.mxu0 0.0
        %979 = vmatmul.mubr.f32.gmra.mxu0 %v843
        %v980 = vpop.f32.mrf.mxu0
        %v981 = vadd.f32 %v804, %v980
        %v982 = vpop.f32.mrf.mxu0
        %983 = vmatprep.mubr.f32.mxu0 0.0
        %984 = vmatmul.mubr.f32.gmra.mxu0 %v846
        %v985 = vpop.f32.mrf.mxu0
        %v986 = vadd.f32 %v804, %v985
        %v987 = vpop.f32.mrf.mxu0
        %988 = vmatprep.mubr.f32.mxu0 0.0
        %989 = vmatmul.mubr.f32.gmra.mxu0 %v849
        %v990 = vpop.f32.mrf.mxu0
        %v991 = vadd.f32 %v804, %v990
        %v992 = vpop.f32.mrf.mxu0
        %993 = vmatprep.mubr.f32.mxu0 0.0
        %994 = vmatmul.mubr.f32.gmra.mxu0 %v852
        %v995 = vpop.f32.mrf.mxu0
        %v996 = vadd.f32 %v804, %v995
        %v997 = vpop.f32.mrf.mxu0
        %998 = vdwg.mxu0
        %v999 = vmax.f32 %v921, 0.0
        %v1000 = vmax.f32 %v926, 0.0
        %v1001 = vmax.f32 %v931, 0.0
        %v1002 = vmax.f32 %v936, 0.0
        %v1003 = vmax.f32 %v941, 0.0
        %v1004 = vmax.f32 %v946, 0.0
        %v1005 = vmax.f32 %v951, 0.0
        %v1006 = vmax.f32 %v956, 0.0
        %v1007 = vmax.f32 %v961, 0.0
        %v1008 = vmax.f32 %v966, 0.0
        %v1009 = vmax.f32 %v971, 0.0
        %v1010 = vmax.f32 %v976, 0.0
        %v1011 = vmax.f32 %v981, 0.0
        %v1012 = vmax.f32 %v986, 0.0
        %v1013 = vmax.f32 %v991, 0.0
        %v1014 = vmax.f32 %v996, 0.0
        %v1015 = vld [vmem:[%s7] sm:$0x1]
        %s1016 = sld [smem:[#allocation2]]
        %v1017 = vstv %s1016
        %v1019 = vsel %vm585, %v1015, 0
        %v1022 = vsel %vm585, %v999, 0
        %v1025 = vsel %vm585, %v1000, 0
        %v1028 = vsel %vm585, %v1001, 0
        %v1031 = vsel %vm585, %v1002, 0
        %v1034 = vsel %vm585, %v1003, 0
        %v1037 = vsel %vm585, %v1004, 0
        %v1040 = vsel %vm585, %v1005, 0
        %v1043 = vsel %vm585, %v1006, 0
        %v1046 = vsel %vm585, %v1007, 0
        %v1049 = vsel %vm585, %v1008, 0
        %v1052 = vsel %vm585, %v1009, 0
        %v1055 = vsel %vm585, %v1010, 0
        %v1058 = vsel %vm585, %v1011, 0
        %v1061 = vsel %vm585, %v1012, 0
        %v1064 = vsel %vm585, %v1013, 0
        %v1067 = vsel %vm585, %v1014, 0
        %1069 = vmatprep.subr.mxu0 0.0
        %1070 = vmatpush1.xpose.msra.mxu0 %v1067
        %1071 = vmatprep.subr.mxu0 0.0
        %1072 = vmatpush1.xpose.msra.mxu0 %v1064
        %1073 = vmatprep.subr.mxu0 0.0
        %1074 = vmatpush1.xpose.msra.mxu0 %v1061
        %1075 = vmatprep.subr.mxu0 0.0
        %1076 = vmatpush1.xpose.msra.mxu0 %v1058
        %1077 = vmatprep.subr.mxu0 0.0
        %1078 = vmatpush1.xpose.msra.mxu0 %v1055
        %1079 = vmatprep.subr.mxu0 0.0
        %1080 = vmatpush1.xpose.msra.mxu0 %v1052
        %1081 = vmatprep.subr.mxu0 0.0
        %1082 = vmatpush1.xpose.msra.mxu0 %v1049
        %1083 = vmatprep.subr.mxu0 0.0
        %1084 = vmatpush1.xpose.msra.mxu0 %v1046
        %1085 = vmatprep.subr.mxu0 0.0
        %1086 = vmatpush1.xpose.msra.mxu0 %v1043
        %1087 = vmatprep.subr.mxu0 0.0
        %1088 = vmatpush1.xpose.msra.mxu0 %v1040
        %1089 = vmatprep.subr.mxu0 0.0
        %1090 = vmatpush1.xpose.msra.mxu0 %v1037
        %1091 = vmatprep.subr.mxu0 0.0
        %1092 = vmatpush1.xpose.msra.mxu0 %v1034
        %1093 = vmatprep.subr.mxu0 0.0
        %1094 = vmatpush1.xpose.msra.mxu0 %v1031
        %1095 = vmatprep.subr.mxu0 0.0
        %1096 = vmatpush1.xpose.msra.mxu0 %v1028
        %1097 = vmatprep.subr.mxu0 0.0
        %1098 = vmatpush1.xpose.msra.mxu0 %v1025
        %1099 = vmatprep.subr.mxu0 0.0
        %1100 = vmatpush1.xpose.msra.mxu0 %v1022
        %1101 = vmatprep.subr.mxu0 0.0
        %1102 = vmatpush2.xpose.msra.mxu0 0.0
        %1103 = vmatprep.subr.mxu0 0.0
        %1104 = vmatpush2.xpose.msra.mxu0 0.0
        %1105 = vmatprep.subr.mxu0 0.0
        %1106 = vmatpush2.xpose.msra.mxu0 0.0
        %1107 = vmatprep.subr.mxu0 0.0
        %1108 = vmatpush2.xpose.msra.mxu0 0.0
        %1109 = vmatprep.subr.mxu0 0.0
        %1110 = vmatpush2.xpose.msra.mxu0 0.0
        %1111 = vmatprep.subr.mxu0 0.0
        %1112 = vmatpush2.xpose.msra.mxu0 0.0
        %1113 = vmatprep.subr.mxu0 0.0
        %1114 = vmatpush2.xpose.msra.mxu0 0.0
        %1115 = vmatprep.subr.mxu0 0.0
        %1116 = vmatpush2.xpose.msra.mxu0 0.0
        %1117 = vmatprep.subr.mxu0 0.0
        %1118 = vmatpush2.xpose.msra.mxu0 0.0
        %1119 = vmatprep.subr.mxu0 0.0
        %1120 = vmatpush2.xpose.msra.mxu0 0.0
        %1121 = vmatprep.subr.mxu0 0.0
        %1122 = vmatpush2.xpose.msra.mxu0 0.0
        %1123 = vmatprep.subr.mxu0 0.0
        %1124 = vmatpush2.xpose.msra.mxu0 0.0
        %1125 = vmatprep.subr.mxu0 0.0
        %1126 = vmatpush2.xpose.msra.mxu0 0.0
        %1127 = vmatprep.subr.mxu0 0.0
        %1128 = vmatpush2.xpose.msra.mxu0 0.0
        %1129 = vmatprep.subr.mxu0 0.0
        %1130 = vmatpush2.xpose.msra.mxu0 0.0
        %1131 = vmatprep.subr.mxu0 0.0
        %1132 = vmatpush2.xpose.msra.mxu0 0.0
        %1133 = vmatprep.mubr.f32.mxu0 0.0
        %1134 = vmatmul.mubr.f32.gmra.mxu0 %v1019
        %v1135 = vpop.f32.mrf.mxu0
        %v1136 = vadd.f32 %v1017, %v1135
        %v1137 = vpop.f32.mrf.mxu0
        %1138 = vdwg.mxu0
        %v1139 = vxor.u32 %v1136, 2147483648
        %v1140 = vmul.f32 %v1139, 1.442695
        %v1141 = vpow.pop %v1140
        %v1142 = vadd.f32 %v1141, 1.0
        %v1143 = vrcp.pop %v1142
        %v1144 = vmul.f32 1.0, %v1143
        %1145 = vst [vmem:[%s326] sm:$0x1] %v1144
        %s1146 = sand.u32 %s226, 1
        %s1147 = scalar_lea.sflag [#allocation4], %s1146
        %s1148 = sand.u32 %s226, 1
        %s1149 = scalar_lea.vmem [#allocation3], %s1148
        // Predicated region
        $region57: #{tpu_custom_call.1} parent=55 // pred_check
          %p1150 = pneg %p236
        $region58: #{tpu_custom_call.1} parent=55 // pred_check_branch
          %1152 = sbr.rel (%p1150) target = $region60
        $region59: #{tpu_custom_call.1} parent=55 // pred_region
          %s1154 = ssub.s32 16, 16
          %1155 = vsyncadd %s1147, %s1154
          %s1156 = smul.addr %s24, 16
          %s1157 = scalar_lea.hbm %s9, %s1156
          %s1159 = sshll.u32 %s1149, 4
          %s1160 = int_to_ptr.vmem [resolvable:$true] %s1159
          %1162 = dma.vmem_to_hbm [thread:$0]  %s1160, 16, %s1157, %s1147
        $region60: #{tpu_custom_call.1} parent=55 // pred_fallthru
          _
      $region56: #{tpu_custom_call.1} parent=5 // pred_fallthru
        _
      %p1163 = scmp.le.s32.totalorder 2, %s19
      // Predicated region
      $region61: #{tpu_custom_call.1} parent=5 // pred_check
        %p1164 = pneg %p1163
      $region62: #{tpu_custom_call.1} parent=5 // pred_check_branch
        %1166 = sbr.rel (%p1164) target = $region64
      $region63: #{tpu_custom_call.1} parent=5 // pred_region
        %s1167 = ssub.s32 %s19, 2
        // Predicated region
        $region65: #{tpu_custom_call.1} parent=63 // pred_check
          %p1168 = pneg %p242
        $region66: #{tpu_custom_call.1} parent=63 // pred_check_branch
          %1170 = sbr.rel (%p1168) target = $region68
        $region67: #{tpu_custom_call.1} parent=63 // pred_region
          %s1171 = sand.u32 %s227, 1
          %s1172 = scalar_lea.sflag [#allocation4], %s1171
          %s1173 = sand.u32 %s227, 1
          %s1174 = scalar_lea.vmem [#allocation3], %s1173
          %1175 = dma.done %s1172, 16
        $region68: #{tpu_custom_call.1} parent=63 // pred_fallthru
          _
      $region64: #{tpu_custom_call.1} parent=5 // pred_fallthru
        _
    $region6: #{tpu_custom_call.1} parent=1 // loop_footer
      %s23 = sadd.s32 1, %s19
    $region7: #{tpu_custom_call.1} parent=1 // loop_footer_branch
      %18 = sbr.rel target = $region3
    $region8: #{tpu_custom_call.1} parent=1 // loop_exit
      _
    %1176 = vsyncpa [#allocation4], 1
    %s1177 = scalar_lea.sflag [#allocation4], 1
    %1178 = vsyncpa %s1177, 1

// kernel: tpu_custom_call.1
$region0: #{tpu_custom_call.1}
  #allocation0 [shape = 'u32[]', space=smem, size = 0x4, offset = 0x4, fixed_abs, tag = 'smem constant byte address 0x4 - core index']
  #allocation1 [shape = 'u32[144,128]{1,0:T(1,128)}', space=vmem, size = 0x12000, scoped, tag = 'internal scratch']
  #allocation2 [shape = 'f32[1,1]{1,0:T(1,128)S(6)}', space=smem, size = 0x200, scoped, tag = 'scoped memory for tpu_custom_call.1']
  %s0 = inlined_call_operand.vmem [shape: f32[384,32], index: 0, kind: input, shape index: {}]
  %s1 = inlined_call_operand.vmem [shape: f32[32,64], index: 1, kind: input, shape index: {}]
  %s2 = inlined_call_operand.vmem [shape: f32[1,64], index: 2, kind: input, shape index: {}]
  %s3 = inlined_call_operand.vmem [shape: f32[64,32], index: 3, kind: input, shape index: {}]
  %s4 = inlined_call_operand.vmem [shape: f32[1,32], index: 4, kind: input, shape index: {}]
  %s5 = inlined_call_operand.vmem [shape: f32[32,64], index: 5, kind: input, shape index: {}]
  %s6 = inlined_call_operand.vmem [shape: f32[1,64], index: 6, kind: input, shape index: {}]
  %s7 = inlined_call_operand.vmem [shape: f32[1,64], index: 7, kind: input, shape index: {}]
  %s8 = inlined_call_operand.<no memory space> [shape: f32[1,1], index: 8, kind: input, shape index: {}]
  %s9 = inlined_call_operand.hbm [shape: f32[1,384], index: 9, kind: output, shape index: {}]
  %s10 = sld [smem:[#allocation0]]
  $region69: #{tpu_custom_call.1} parent=0
    _
  %s12 = ssub.s32 1, %s10
  %s13 = scalar_select 0, %s12, %s10
  %14 = sst [smem:[#allocation2]] %s8
  $region1: #{tpu_custom_call.1} parent=0
    #allocation3 [shape = 'u8[1024]{0}', space=vmem, size = 0x400, scoped, tag = 'output window, operand 0']
    #allocation4 [shape = 's32[2]{0}', space=sflag, size = 0x8, scoped, tag = 'scoped memory for tpu_custom_call.1']
    %15 = vsyncpa [#allocation4], 0
    %s16 = scalar_lea.sflag [#allocation4], 1
    %17 = vsyncpa %s16, 0
    loop: start=0, step=1, limit=5
    $region2: #{tpu_custom_call.1} parent=1 // loop_pre_header
      _
    $region3: #{tpu_custom_call.1} parent=1 // loop_header
      %s19 = sphi 0, %s23
      %p20 = scmp.ge.s32.totalorder %s19, 5
      %s29 = sphi 0, %s31
      %s32 = sphi 0, %s29
      %s33 = sphi 0, %s32
      %s49 = sphi 0, %s33
      %s53 = sphi 0, %s53
      %s55 = sphi 0, %s53
      %s56 = sphi 0, %s55
      %s70 = sphi 0, %s56
      %s74 = sphi 0, %s74
      %s76 = sphi 0, %s74
      %s77 = sphi 0, %s76
      %s91 = sphi 0, %s77
      %s95 = sphi 0, %s95
      %s97 = sphi 0, %s95
      %s98 = sphi 0, %s97
      %s112 = sphi 0, %s98
      %s116 = sphi 0, %s116
      %s118 = sphi 0, %s116
      %s119 = sphi 0, %s118
      %s133 = sphi 0, %s119
      %s137 = sphi 0, %s137
      %s139 = sphi 0, %s137
      %s140 = sphi 0, %s139
      %s154 = sphi 0, %s140
      %s158 = sphi 0, %s158
      %s160 = sphi 0, %s158
      %s161 = sphi 0, %s160
      %s175 = sphi 0, %s161
      %s179 = sphi 0, %s179
      %s181 = sphi 0, %s179
      %s182 = sphi 0, %s181
      %s196 = sphi 0, %s182
      %s200 = sphi 0, %s200
      %s202 = sphi 0, %s200
      %s203 = sphi 0, %s202
      %s217 = sphi 0, %s203
      %s223 = sphi 0, %s225
      %s226 = sphi 0, %s223
      %s227 = sphi 0, %s226
      %s243 = sphi 0, %s227
    $region4: #{tpu_custom_call.1} parent=1 // loop_header_branch
      %22 = sbr.rel (%p20) target = $region8
    $region5: #{tpu_custom_call.1} parent=1 // loop_body
      %s24 = ssub.s32 %s19, 1
      %s25 = ssub.s32 %s19, 2
      %s26 = sadd.s32 %s19, 1
      %s27 = ssub.s32 %s19, %s26
      %p28 = scmp.eq.s32.totalorder %s27, 0
      %s30 = sadd.s32 %s29, 1
      %s31 = scalar_select %p28, %s29, %s30
      %p34 = pneg %p28
      %p35 = scmp.eq.s32.totalorder %s19, 2
      %p36 = por %p34, %p35
      %p37 = scmp.ne.s32.totalorder %s29, %s32
      %p38 = scmp.eq.s32.totalorder %s19, 0
      %p39 = por %p37, %p38
      %p40 = scmp.ne.s32.totalorder %s29, %s32
      %p41 = scmp.eq.s32.totalorder %s24, 2
      %p42 = por %p40, %p41
      %p43 = scmp.ne.s32.totalorder %s32, %s33
      %p44 = scmp.eq.s32.totalorder %s24, 0
      %p45 = por %p43, %p44
      %p46 = scmp.ne.s32.totalorder %s32, %s33
      %p47 = scmp.eq.s32.totalorder %s25, 2
      %p48 = por %p46, %p47
      %p50 = scmp.ne.s32.totalorder %s33, %s49
      %p51 = scmp.eq.s32.totalorder %s25, 0
      %p52 = por %p50, %p51
      %s54 = sadd.s32 %s53, 1
      %p57 = scmp.eq.s32.totalorder %s19, 2
      %p58 = scmp.ne.s32.totalorder %s53, %s55
      %p59 = scmp.eq.s32.totalorder %s19, 0
      %p60 = por %p58, %p59
      %p61 = scmp.ne.s32.totalorder %s53, %s55
      %p62 = scmp.eq.s32.totalorder %s24, 2
      %p63 = por %p61, %p62
      %p64 = scmp.ne.s32.totalorder %s55, %s56
      %p65 = scmp.eq.s32.totalorder %s24, 0
      %p66 = por %p64, %p65
      %p67 = scmp.ne.s32.totalorder %s55, %s56
      %p68 = scmp.eq.s32.totalorder %s25, 2
      %p69 = por %p67, %p68
      %p71 = scmp.ne.s32.totalorder %s56, %s70
      %p72 = scmp.eq.s32.totalorder %s25, 0
      %p73 = por %p71, %p72
      %s75 = sadd.s32 %s74, 1
      %p78 = scmp.eq.s32.totalorder %s19, 2
      %p79 = scmp.ne.s32.totalorder %s74, %s76
      %p80 = scmp.eq.s32.totalorder %s19, 0
      %p81 = por %p79, %p80
      %p82 = scmp.ne.s32.totalorder %s74, %s76
      %p83 = scmp.eq.s32.totalorder %s24, 2
      %p84 = por %p82, %p83
      %p85 = scmp.ne.s32.totalorder %s76, %s77
      %p86 = scmp.eq.s32.totalorder %s24, 0
      %p87 = por %p85, %p86
      %p88 = scmp.ne.s32.totalorder %s76, %s77
      %p89 = scmp.eq.s32.totalorder %s25, 2
      %p90 = por %p88, %p89
      %p92 = scmp.ne.s32.totalorder %s77, %s91
      %p93 = scmp.eq.s32.totalorder %s25, 0
      %p94 = por %p92, %p93
      %s96 = sadd.s32 %s95, 1
      %p99 = scmp.eq.s32.totalorder %s19, 2
      %p100 = scmp.ne.s32.totalorder %s95, %s97
      %p101 = scmp.eq.s32.totalorder %s19, 0
      %p102 = por %p100, %p101
      %p103 = scmp.ne.s32.totalorder %s95, %s97
      %p104 = scmp.eq.s32.totalorder %s24, 2
      %p105 = por %p103, %p104
      %p106 = scmp.ne.s32.totalorder %s97, %s98
      %p107 = scmp.eq.s32.totalorder %s24, 0
      %p108 = por %p106, %p107
      %p109 = scmp.ne.s32.totalorder %s97, %s98
      %p110 = scmp.eq.s32.totalorder %s25, 2
      %p111 = por %p109, %p110
      %p113 = scmp.ne.s32.totalorder %s98, %s112
      %p114 = scmp.eq.s32.totalorder %s25, 0
      %p115 = por %p113, %p114
      %s117 = sadd.s32 %s116, 1
      %p120 = scmp.eq.s32.totalorder %s19, 2
      %p121 = scmp.ne.s32.totalorder %s116, %s118
      %p122 = scmp.eq.s32.totalorder %s19, 0
      %p123 = por %p121, %p122
      %p124 = scmp.ne.s32.totalorder %s116, %s118
      %p125 = scmp.eq.s32.totalorder %s24, 2
      %p126 = por %p124, %p125
      %p127 = scmp.ne.s32.totalorder %s118, %s119
      %p128 = scmp.eq.s32.totalorder %s24, 0
      %p129 = por %p127, %p128
      %p130 = scmp.ne.s32.totalorder %s118, %s119
      %p131 = scmp.eq.s32.totalorder %s25, 2
      %p132 = por %p130, %p131
      %p134 = scmp.ne.s32.totalorder %s119, %s133
      %p135 = scmp.eq.s32.totalorder %s25, 0
      %p136 = por %p134, %p135
      %s138 = sadd.s32 %s137, 1
      %p141 = scmp.eq.s32.totalorder %s19, 2
      %p142 = scmp.ne.s32.totalorder %s137, %s139
      %p143 = scmp.eq.s32.totalorder %s19, 0
      %p144 = por %p142, %p143
      %p145 = scmp.ne.s32.totalorder %s137, %s139
      %p146 = scmp.eq.s32.totalorder %s24, 2
      %p147 = por %p145, %p146
      %p148 = scmp.ne.s32.totalorder %s139, %s140
      %p149 = scmp.eq.s32.totalorder %s24, 0
      %p150 = por %p148, %p149
      %p151 = scmp.ne.s32.totalorder %s139, %s140
      %p152 = scmp.eq.s32.totalorder %s25, 2
      %p153 = por %p151, %p152
      %p155 = scmp.ne.s32.totalorder %s140, %s154
      %p156 = scmp.eq.s32.totalorder %s25, 0
      %p157 = por %p155, %p156
      %s159 = sadd.s32 %s158, 1
      %p162 = scmp.eq.s32.totalorder %s19, 2
      %p163 = scmp.ne.s32.totalorder %s158, %s160
      %p164 = scmp.eq.s32.totalorder %s19, 0
      %p165 = por %p163, %p164
      %p166 = scmp.ne.s32.totalorder %s158, %s160
      %p167 = scmp.eq.s32.totalorder %s24, 2
      %p168 = por %p166, %p167
      %p169 = scmp.ne.s32.totalorder %s160, %s161
      %p170 = scmp.eq.s32.totalorder %s24, 0
      %p171 = por %p169, %p170
      %p172 = scmp.ne.s32.totalorder %s160, %s161
      %p173 = scmp.eq.s32.totalorder %s25, 2
      %p174 = por %p172, %p173
      %p176 = scmp.ne.s32.totalorder %s161, %s175
      %p177 = scmp.eq.s32.totalorder %s25, 0
      %p178 = por %p176, %p177
      %s180 = sadd.s32 %s179, 1
      %p183 = scmp.eq.s32.totalorder %s19, 2
      %p184 = scmp.ne.s32.totalorder %s179, %s181
      %p185 = scmp.eq.s32.totalorder %s19, 0
      %p186 = por %p184, %p185
      %p187 = scmp.ne.s32.totalorder %s179, %s181
      %p188 = scmp.eq.s32.totalorder %s24, 2
      %p189 = por %p187, %p188
      %p190 = scmp.ne.s32.totalorder %s181, %s182
      %p191 = scmp.eq.s32.totalorder %s24, 0
      %p192 = por %p190, %p191
      %p193 = scmp.ne.s32.totalorder %s181, %s182
      %p194 = scmp.eq.s32.totalorder %s25, 2
      %p195 = por %p193, %p194
      %p197 = scmp.ne.s32.totalorder %s182, %s196
      %p198 = scmp.eq.s32.totalorder %s25, 0
      %p199 = por %p197, %p198
      %s201 = sadd.s32 %s200, 1
      %p204 = scmp.eq.s32.totalorder %s19, 2
      %p205 = scmp.ne.s32.totalorder %s200, %s202
      %p206 = scmp.eq.s32.totalorder %s19, 0
      %p207 = por %p205, %p206
      %p208 = scmp.ne.s32.totalorder %s200, %s202
      %p209 = scmp.eq.s32.totalorder %s24, 2
      %p210 = por %p208, %p209
      %p211 = scmp.ne.s32.totalorder %s202, %s203
      %p212 = scmp.eq.s32.totalorder %s24, 0
      %p213 = por %p211, %p212
      %p214 = scmp.ne.s32.totalorder %s202, %s203
      %p215 = scmp.eq.s32.totalorder %s25, 2
      %p216 = por %p214, %p215
      %p218 = scmp.ne.s32.totalorder %s203, %s217
      %p219 = scmp.eq.s32.totalorder %s25, 0
      %p220 = por %p218, %p219
      %s221 = ssub.s32 %s19, %s26
      %p222 = scmp.eq.s32.totalorder %s221, 0
      %s224 = sadd.s32 %s223, 1
      %s225 = scalar_select %p222, %s223, %s224
      %p228 = pneg %p222
      %p229 = scmp.eq.s32.totalorder %s19, 2
      %p230 = por %p228, %p229
      %p231 = scmp.ne.s32.totalorder %s223, %s226
      %p232 = scmp.eq.s32.totalorder %s19, 0
      %p233 = por %p231, %p232
      %p234 = scmp.ne.s32.totalorder %s223, %s226
      %p235 = scmp.eq.s32.totalorder %s24, 2
      %p236 = por %p234, %p235
      %p237 = scmp.ne.s32.totalorder %s226, %s227
      %p238 = scmp.eq.s32.totalorder %s24, 0
      %p239 = por %p237, %p238
      %p240 = scmp.ne.s32.totalorder %s226, %s227
      %p241 = scmp.eq.s32.totalorder %s25, 2
      %p242 = por %p240, %p241
      %p244 = scmp.ne.s32.totalorder %s227, %s243
      %p245 = scmp.eq.s32.totalorder %s25, 0
      %p246 = por %p244, %p245
      %p247 = scmp.le.s32.totalorder 1, %s19
      %p248 = scmp.lt.s32.totalorder %s19, 4
      %p249 = pnand %p247, %p248
      %p250 = pneg %p249
      // Predicated region
      $region9: #{tpu_custom_call.1} parent=5 // pred_check
        _
      $region10: #{tpu_custom_call.1} parent=5 // pred_check_branch
        %252 = sbr.rel (%p249) target = $region12
      $region11: #{tpu_custom_call.1} parent=5 // pred_region
        %s253 = ssub.s32 %s19, 1
        // Predicated region
        $region13: #{tpu_custom_call.1} parent=11 // pred_check
          %p254 = pneg %p66
        $region14: #{tpu_custom_call.1} parent=11 // pred_check_branch
          %256 = sbr.rel (%p254) target = $region16
        $region15: #{tpu_custom_call.1} parent=11 // pred_region
          _
        $region16: #{tpu_custom_call.1} parent=11 // pred_fallthru
          _
        // Predicated region
        $region17: #{tpu_custom_call.1} parent=11 // pred_check
          %p257 = pneg %p87
        $region18: #{tpu_custom_call.1} parent=11 // pred_check_branch
          %259 = sbr.rel (%p257) target = $region20
        $region19: #{tpu_custom_call.1} parent=11 // pred_region
          _
        $region20: #{tpu_custom_call.1} parent=11 // pred_fallthru
          _
        // Predicated region
        $region21: #{tpu_custom_call.1} parent=11 // pred_check
          %p260 = pneg %p108
        $region22: #{tpu_custom_call.1} parent=11 // pred_check_branch
          %262 = sbr.rel (%p260) target = $region24
        $region23: #{tpu_custom_call.1} parent=11 // pred_region
          _
        $region24: #{tpu_custom_call.1} parent=11 // pred_fallthru
          _
        // Predicated region
        $region25: #{tpu_custom_call.1} parent=11 // pred_check
          %p263 = pneg %p129
        $region26: #{tpu_custom_call.1} parent=11 // pred_check_branch
          %265 = sbr.rel (%p263) target = $region28
        $region27: #{tpu_custom_call.1} parent=11 // pred_region
          _
        $region28: #{tpu_custom_call.1} parent=11 // pred_fallthru
          _
        // Predicated region
        $region29: #{tpu_custom_call.1} parent=11 // pred_check
          %p266 = pneg %p150
        $region30: #{tpu_custom_call.1} parent=11 // pred_check_branch
          %268 = sbr.rel (%p266) target = $region32
        $region31: #{tpu_custom_call.1} parent=11 // pred_region
          _
        $region32: #{tpu_custom_call.1} parent=11 // pred_fallthru
          _
        // Predicated region
        $region33: #{tpu_custom_call.1} parent=11 // pred_check
          %p269 = pneg %p171
        $region34: #{tpu_custom_call.1} parent=11 // pred_check_branch
          %271 = sbr.rel (%p269) target = $region36
        $region35: #{tpu_custom_call.1} parent=11 // pred_region
          _
        $region36: #{tpu_custom_call.1} parent=11 // pred_fallthru
          _
        // Predicated region
        $region37: #{tpu_custom_call.1} parent=11 // pred_check
          %p272 = pneg %p192
        $region38: #{tpu_custom_call.1} parent=11 // pred_check_branch
          %274 = sbr.rel (%p272) target = $region40
        $region39: #{tpu_custom_call.1} parent=11 // pred_region
          _
        $region40: #{tpu_custom_call.1} parent=11 // pred_fallthru
          _
        // Predicated region
        $region41: #{tpu_custom_call.1} parent=11 // pred_check
          %p275 = pneg %p213
        $region42: #{tpu_custom_call.1} parent=11 // pred_check_branch
          %277 = sbr.rel (%p275) target = $region44
        $region43: #{tpu_custom_call.1} parent=11 // pred_region
          _
        $region44: #{tpu_custom_call.1} parent=11 // pred_fallthru
          _
      $region12: #{tpu_custom_call.1} parent=5 // pred_fallthru
        _
      %p278 = scmp.lt.s32.totalorder %s19, 3
      // Predicated region
      $region45: #{tpu_custom_call.1} parent=5 // pred_check
        %p279 = pneg %p278
      $region46: #{tpu_custom_call.1} parent=5 // pred_check_branch
        %281 = sbr.rel (%p279) target = $region48
      $region47: #{tpu_custom_call.1} parent=5 // pred_region
        // Predicated region
        $region49: #{tpu_custom_call.1} parent=47 // pred_check
          %p282 = pneg %p39
        $region50: #{tpu_custom_call.1} parent=47 // pred_check_branch
          %284 = sbr.rel (%p282) target = $region52
        $region51: #{tpu_custom_call.1} parent=47 // pred_region
          %s285 = smul.u32 16, %s19
          %p286 = scmp.lt.s32.totalorder %s285, 47
          %s287 = scalar_select %p286, %s285, 47
          %s288 = smul.addr %s287, 8
          %s289 = scalar_lea.vmem %s0, %s288
          %s290 = smul.u32 16, %s19
        $region52: #{tpu_custom_call.1} parent=47 // pred_fallthru
          _
      $region48: #{tpu_custom_call.1} parent=5 // pred_fallthru
        _
      %p291 = scmp.le.s32.totalorder 1, %s19
      %p292 = scmp.lt.s32.totalorder %s19, 4
      %p293 = pnand %p291, %p292
      %p294 = pneg %p293
      // Predicated region
      $region53: #{tpu_custom_call.1} parent=5 // pred_check
        _
      $region54: #{tpu_custom_call.1} parent=5 // pred_check_branch
        %296 = sbr.rel (%p293) target = $region56
      $region55: #{tpu_custom_call.1} parent=5 // pred_region
        %s297 = ssub.s32 %s19, 1
        %s298 = smul.u32 16, %s24
        %p299 = scmp.lt.s32.totalorder %s298, 47
        %s300 = scalar_select %p299, %s298, 47
        %s301 = smul.addr %s300, 8
        %s302 = scalar_lea.vmem %s0, %s301
        %p303 = pneg %p45
        %p304 = pneg %p42
        %p305 = pneg %p66
        %p306 = pneg %p63
        %p307 = pneg %p87
        %p308 = pneg %p84
        %p309 = pneg %p108
        %p310 = pneg %p105
        %p311 = pneg %p129
        %p312 = pneg %p126
        %p313 = pneg %p150
        %p314 = pneg %p147
        %p315 = pneg %p171
        %p316 = pneg %p168
        %p317 = pneg %p192
        %p318 = pneg %p189
        %p319 = pneg %p213
        %p320 = pneg %p210
        %p321 = pneg %p239
        %p322 = pneg %p236
        %s323 = sand.u32 %s226, 1
        %s324 = scalar_lea.sflag [#allocation4], %s323
        %s325 = sand.u32 %s226, 1
        %s326 = scalar_lea.vmem [#allocation3], %s325
        %s327 = smul.u32 16, %s24
        %p328 = scmp.lt.s32.totalorder %s327, 47
        %s329 = scalar_select %p328, %s327, 47
        %s330 = smul.addr %s329, 8
        %s331 = scalar_lea.vmem %s0, %s330
        %s332 = smul.u32 16, %s24
        %v333 = vld [vmem:[%s331] sm:$0xff]
        %v334 = vld [vmem:[%s331 + $0x8] sm:$0xff]
        %v335 = vld [vmem:[%s331 + $0x10] sm:$0xff]
        %v336 = vld [vmem:[%s331 + $0x18] sm:$0xff]
        %v337 = vld [vmem:[%s331 + $0x20] sm:$0xff]
        %v338 = vld [vmem:[%s331 + $0x28] sm:$0xff]
        %v339 = vld [vmem:[%s331 + $0x30] sm:$0xff]
        %v340 = vld [vmem:[%s331 + $0x38] sm:$0xff]
        %v341 = vld [vmem:[%s331 + $0x40] sm:$0xff]
        %v342 = vld [vmem:[%s331 + $0x48] sm:$0xff]
        %v343 = vld [vmem:[%s331 + $0x50] sm:$0xff]
        %v344 = vld [vmem:[%s331 + $0x58] sm:$0xff]
        %v345 = vld [vmem:[%s331 + $0x60] sm:$0xff]
        %v346 = vld [vmem:[%s331 + $0x68] sm:$0xff]
        %v347 = vld [vmem:[%s331 + $0x70] sm:$0xff]
        %v348 = vld [vmem:[%s331 + $0x78] sm:$0xff]
        %v349 = vld [vmem:[%s1] sm:$0xff]
        %v350 = vld [vmem:[%s1 + $0x8] sm:$0xff]
        %v351 = vld [vmem:[%s1 + $0x10] sm:$0xff]
        %v352 = vld [vmem:[%s1 + $0x18] sm:$0xff]
        %v353 = vld [vmem:[%s2] sm:$0x1]
        %v355 = vlaneseq
        %v356 = vshrl.u32 %v355, 7
        %v357 = vsub.s32 0, %v356
        %v358 = vrot.slane %v353, %v357
        %vm360 = vcmask 261120
        %v362 = vsel %vm360, %v333, 0
        %v365 = vsel %vm360, %v334, 0
        %v368 = vsel %vm360, %v335, 0
        %v371 = vsel %vm360, %v336, 0
        %v374 = vsel %vm360, %v337, 0
        %v377 = vsel %vm360, %v338, 0
        %v380 = vsel %vm360, %v339, 0
        %v383 = vsel %vm360, %v340, 0
        %v386 = vsel %vm360, %v341, 0
        %v389 = vsel %vm360, %v342, 0
        %v392 = vsel %vm360, %v343, 0
        %v395 = vsel %vm360, %v344, 0
        %v398 = vsel %vm360, %v345, 0
        %v401 = vsel %vm360, %v346, 0
        %v404 = vsel %vm360, %v347, 0
        %v407 = vsel %vm360, %v348, 0
        %409 = vmatprep.subr.mxu0 0.0
        %410 = vmatpush1.msra.mxu0 0.0
        %411 = vmatprep.subr.mxu0 0.0
        %412 = vmatpush1.msra.mxu0 0.0
        %413 = vmatprep.subr.mxu0 0.0
        %414 = vmatpush1.msra.mxu0 0.0
        %415 = vmatprep.subr.mxu0 0.0
        %416 = vmatpush1.msra.mxu0 0.0
        %417 = vmatprep.subr.mxu0 0.0
        %418 = vmatpush1.msra.mxu0 0.0
        %419 = vmatprep.subr.mxu0 0.0
        %420 = vmatpush1.msra.mxu0 0.0
        %421 = vmatprep.subr.mxu0 0.0
        %422 = vmatpush1.msra.mxu0 0.0
        %423 = vmatprep.subr.mxu0 0.0
        %424 = vmatpush1.msra.mxu0 0.0
        %425 = vmatprep.subr.mxu0 0.0
        %426 = vmatpush1.msra.mxu0 0.0
        %427 = vmatprep.subr.mxu0 0.0
        %428 = vmatpush1.msra.mxu0 0.0
        %429 = vmatprep.subr.mxu0 0.0
        %430 = vmatpush1.msra.mxu0 0.0
        %431 = vmatprep.subr.mxu0 0.0
        %432 = vmatpush1.msra.mxu0 0.0
        %433 = vmatprep.subr.mxu0 0.0
        %434 = vmatpush1.msra.mxu0 %v352
        %435 = vmatprep.subr.mxu0 0.0
        %436 = vmatpush1.msra.mxu0 %v351
        %437 = vmatprep.subr.mxu0 0.0
        %438 = vmatpush1.msra.mxu0 %v350
        %439 = vmatprep.subr.mxu0 0.0
        %440 = vmatpush1.msra.mxu0 %v349
        %441 = vmatprep.subr.mxu0 0.0
        %442 = vmatpush2.msra.mxu0 0.0
        %443 = vmatprep.subr.mxu0 0.0
        %444 = vmatpush2.msra.mxu0 0.0
        %445 = vmatprep.subr.mxu0 0.0
        %446 = vmatpush2.msra.mxu0 0.0
        %447 = vmatprep.subr.mxu0 0.0
        %448 = vmatpush2.msra.mxu0 0.0
        %449 = vmatprep.subr.mxu0 0.0
        %450 = vmatpush2.msra.mxu0 0.0
        %451 = vmatprep.subr.mxu0 0.0
        %452 = vmatpush2.msra.mxu0 0.0
        %453 = vmatprep.subr.mxu0 0.0
        %454 = vmatpush2.msra.mxu0 0.0
        %455 = vmatprep.subr.mxu0 0.0
        %456 = vmatpush2.msra.mxu0 0.0
        %457 = vmatprep.subr.mxu0 0.0
        %458 = vmatpush2.msra.mxu0 0.0
        %459 = vmatprep.subr.mxu0 0.0
        %460 = vmatpush2.msra.mxu0 0.0
        %461 = vmatprep.subr.mxu0 0.0
        %462 = vmatpush2.msra.mxu0 0.0
        %463 = vmatprep.subr.mxu0 0.0
        %464 = vmatpush2.msra.mxu0 0.0
        %465 = vmatprep.subr.mxu0 0.0
        %466 = vmatpush2.msra.mxu0 0.0
        %467 = vmatprep.subr.mxu0 0.0
        %468 = vmatpush2.msra.mxu0 0.0
        %469 = vmatprep.subr.mxu0 0.0
        %470 = vmatpush2.msra.mxu0 0.0
        %471 = vmatprep.subr.mxu0 0.0
        %472 = vmatpush2.msra.mxu0 0.0
        %473 = vmatprep.mubr.f32.mxu0 0.0
        %474 = vmatmul.mubr.f32.gmra.mxu0 %v362
        %v475 = vpop.f32.mrf.mxu0
        %v476 = vadd.f32 %v358, %v475
        %v477 = vpop.f32.mrf.mxu0
        %478 = vmatprep.mubr.f32.mxu0 0.0
        %479 = vmatmul.mubr.f32.gmra.mxu0 %v365
        %v480 = vpop.f32.mrf.mxu0
        %v481 = vadd.f32 %v358, %v480
        %v482 = vpop.f32.mrf.mxu0
        %483 = vmatprep.mubr.f32.mxu0 0.0
        %484 = vmatmul.mubr.f32.gmra.mxu0 %v368
        %v485 = vpop.f32.mrf.mxu0
        %v486 = vadd.f32 %v358, %v485
        %v487 = vpop.f32.mrf.mxu0
        %488 = vmatprep.mubr.f32.mxu0 0.0
        %489 = vmatmul.mubr.f32.gmra.mxu0 %v371
        %v490 = vpop.f32.mrf.mxu0
        %v491 = vadd.f32 %v358, %v490
        %v492 = vpop.f32.mrf.mxu0
        %493 = vmatprep.mubr.f32.mxu0 0.0
        %494 = vmatmul.mubr.f32.gmra.mxu0 %v374
        %v495 = vpop.f32.mrf.mxu0
        %v496 = vadd.f32 %v358, %v495
        %v497 = vpop.f32.mrf.mxu0
        %498 = vmatprep.mubr.f32.mxu0 0.0
        %499 = vmatmul.mubr.f32.gmra.mxu0 %v377
        %v500 = vpop.f32.mrf.mxu0
        %v501 = vadd.f32 %v358, %v500
        %v502 = vpop.f32.mrf.mxu0
        %503 = vmatprep.mubr.f32.mxu0 0.0
        %504 = vmatmul.mubr.f32.gmra.mxu0 %v380
        %v505 = vpop.f32.mrf.mxu0
        %v506 = vadd.f32 %v358, %v505
        %v507 = vpop.f32.mrf.mxu0
        %508 = vmatprep.mubr.f32.mxu0 0.0
        %509 = vmatmul.mubr.f32.gmra.mxu0 %v383
        %v510 = vpop.f32.mrf.mxu0
        %v511 = vadd.f32 %v358, %v510
        %v512 = vpop.f32.mrf.mxu0
        %513 = vmatprep.mubr.f32.mxu0 0.0
        %514 = vmatmul.mubr.f32.gmra.mxu0 %v386
        %v515 = vpop.f32.mrf.mxu0
        %v516 = vadd.f32 %v358, %v515
        %v517 = vpop.f32.mrf.mxu0
        %518 = vmatprep.mubr.f32.mxu0 0.0
        %519 = vmatmul.mubr.f32.gmra.mxu0 %v389
        %v520 = vpop.f32.mrf.mxu0
        %v521 = vadd.f32 %v358, %v520
        %v522 = vpop.f32.mrf.mxu0
        %523 = vmatprep.mubr.f32.mxu0 0.0
        %524 = vmatmul.mubr.f32.gmra.mxu0 %v392
        %v525 = vpop.f32.mrf.mxu0
        %v526 = vadd.f32 %v358, %v525
        %v527 = vpop.f32.mrf.mxu0
        %528 = vmatprep.mubr.f32.mxu0 0.0
        %529 = vmatmul.mubr.f32.gmra.mxu0 %v395
        %v530 = vpop.f32.mrf.mxu0
        %v531 = vadd.f32 %v358, %v530
        %v532 = vpop.f32.mrf.mxu0
        %533 = vmatprep.mubr.f32.mxu0 0.0
        %534 = vmatmul.mubr.f32.gmra.mxu0 %v398
        %v535 = vpop.f32.mrf.mxu0
        %v536 = vadd.f32 %v358, %v535
        %v537 = vpop.f32.mrf.mxu0
        %538 = vmatprep.mubr.f32.mxu0 0.0
        %539 = vmatmul.mubr.f32.gmra.mxu0 %v401
        %v540 = vpop.f32.mrf.mxu0
        %v541 = vadd.f32 %v358, %v540
        %v542 = vpop.f32.mrf.mxu0
        %543 = vmatprep.mubr.f32.mxu0 0.0
        %544 = vmatmul.mubr.f32.gmra.mxu0 %v404
        %v545 = vpop.f32.mrf.mxu0
        %v546 = vadd.f32 %v358, %v545
        %v547 = vpop.f32.mrf.mxu0
        %548 = vmatprep.mubr.f32.mxu0 0.0
        %549 = vmatmul.mubr.f32.gmra.mxu0 %v407
        %v550 = vpop.f32.mrf.mxu0
        %v551 = vadd.f32 %v358, %v550
        %v552 = vpop.f32.mrf.mxu0
        %553 = vdwg.mxu0
        %v554 = vmax.f32 %v476, 0.0
        %v555 = vmax.f32 %v481, 0.0
        %v556 = vmax.f32 %v486, 0.0
        %v557 = vmax.f32 %v491, 0.0
        %v558 = vmax.f32 %v496, 0.0
        %v559 = vmax.f32 %v501, 0.0
        %v560 = vmax.f32 %v506, 0.0
        %v561 = vmax.f32 %v511, 0.0
        %v562 = vmax.f32 %v516, 0.0
        %v563 = vmax.f32 %v521, 0.0
        %v564 = vmax.f32 %v526, 0.0
        %v565 = vmax.f32 %v531, 0.0
        %v566 = vmax.f32 %v536, 0.0
        %v567 = vmax.f32 %v541, 0.0
        %v568 = vmax.f32 %v546, 0.0
        %v569 = vmax.f32 %v551, 0.0
        %v570 = vld [vmem:[%s3] sm:$0xff]
        %v571 = vld [vmem:[%s3 + $0x8] sm:$0xff]
        %v572 = vld [vmem:[%s3 + $0x10] sm:$0xff]
        %v573 = vld [vmem:[%s3 + $0x18] sm:$0xff]
        %v574 = vld [vmem:[%s3 + $0x20] sm:$0xff]
        %v575 = vld [vmem:[%s3 + $0x28] sm:$0xff]
        %v576 = vld [vmem:[%s3 + $0x30] sm:$0xff]
        %v577 = vld [vmem:[%s3 + $0x38] sm:$0xff]
        %v578 = vld [vmem:[%s4] sm:$0x1]
        %v580 = vlaneseq
        %v581 = vshrl.u32 %v580, 7
        %v582 = vsub.s32 0, %v581
        %v583 = vrot.slane %v578, %v582
        %vm585 = vcmask 523264
        %v587 = vsel %vm585, %v554, 0
        %v590 = vsel %vm585, %v555, 0
        %v593 = vsel %vm585, %v556, 0
        %v596 = vsel %vm585, %v557, 0
        %v599 = vsel %vm585, %v558, 0
        %v602 = vsel %vm585, %v559, 0
        %v605 = vsel %vm585, %v560, 0
        %v608 = vsel %vm585, %v561, 0
        %v611 = vsel %vm585, %v562, 0
        %v614 = vsel %vm585, %v563, 0
        %v617 = vsel %vm585, %v564, 0
        %v620 = vsel %vm585, %v565, 0
        %v623 = vsel %vm585, %v566, 0
        %v626 = vsel %vm585, %v567, 0
        %v629 = vsel %vm585, %v568, 0
        %v632 = vsel %vm585, %v569, 0
        %634 = vmatprep.subr.mxu0 0.0
        %635 = vmatpush1.msra.mxu0 0.0
        %636 = vmatprep.subr.mxu0 0.0
        %637 = vmatpush1.msra.mxu0 0.0
        %638 = vmatprep.subr.mxu0 0.0
        %639 = vmatpush1.msra.mxu0 0.0
        %640 = vmatprep.subr.mxu0 0.0
        %641 = vmatpush1.msra.mxu0 0.0
        %642 = vmatprep.subr.mxu0 0.0
        %643 = vmatpush1.msra.mxu0 0.0
        %644 = vmatprep.subr.mxu0 0.0
        %645 = vmatpush1.msra.mxu0 0.0
        %646 = vmatprep.subr.mxu0 0.0
        %647 = vmatpush1.msra.mxu0 0.0
        %648 = vmatprep.subr.mxu0 0.0
        %649 = vmatpush1.msra.mxu0 0.0
        %650 = vmatprep.subr.mxu0 0.0
        %651 = vmatpush1.msra.mxu0 %v577
        %652 = vmatprep.subr.mxu0 0.0
        %653 = vmatpush1.msra.mxu0 %v576
        %654 = vmatprep.subr.mxu0 0.0
        %655 = vmatpush1.msra.mxu0 %v575
        %656 = vmatprep.subr.mxu0 0.0
        %657 = vmatpush1.msra.mxu0 %v574
        %658 = vmatprep.subr.mxu0 0.0
        %659 = vmatpush1.msra.mxu0 %v573
        %660 = vmatprep.subr.mxu0 0.0
        %661 = vmatpush1.msra.mxu0 %v572
        %662 = vmatprep.subr.mxu0 0.0
        %663 = vmatpush1.msra.mxu0 %v571
        %664 = vmatprep.subr.mxu0 0.0
        %665 = vmatpush1.msra.mxu0 %v570
        %666 = vmatprep.subr.mxu0 0.0
        %667 = vmatpush2.msra.mxu0 0.0
        %668 = vmatprep.subr.mxu0 0.0
        %669 = vmatpush2.msra.mxu0 0.0
        %670 = vmatprep.subr.mxu0 0.0
        %671 = vmatpush2.msra.mxu0 0.0
        %672 = vmatprep.subr.mxu0 0.0
        %673 = vmatpush2.msra.mxu0 0.0
        %674 = vmatprep.subr.mxu0 0.0
        %675 = vmatpush2.msra.mxu0 0.0
        %676 = vmatprep.subr.mxu0 0.0
        %677 = vmatpush2.msra.mxu0 0.0
        %678 = vmatprep.subr.mxu0 0.0
        %679 = vmatpush2.msra.mxu0 0.0
        %680 = vmatprep.subr.mxu0 0.0
        %681 = vmatpush2.msra.mxu0 0.0
        %682 = vmatprep.subr.mxu0 0.0
        %683 = vmatpush2.msra.mxu0 0.0
        %684 = vmatprep.subr.mxu0 0.0
        %685 = vmatpush2.msra.mxu0 0.0
        %686 = vmatprep.subr.mxu0 0.0
        %687 = vmatpush2.msra.mxu0 0.0
        %688 = vmatprep.subr.mxu0 0.0
        %689 = vmatpush2.msra.mxu0 0.0
        %690 = vmatprep.subr.mxu0 0.0
        %691 = vmatpush2.msra.mxu0 0.0
        %692 = vmatprep.subr.mxu0 0.0
        %693 = vmatpush2.msra.mxu0 0.0
        %694 = vmatprep.subr.mxu0 0.0
        %695 = vmatpush2.msra.mxu0 0.0
        %696 = vmatprep.subr.mxu0 0.0
        %697 = vmatpush2.msra.mxu0 0.0
        %698 = vmatprep.mubr.f32.mxu0 0.0
        %699 = vmatmul.mubr.f32.gmra.mxu0 %v587
        %v700 = vpop.f32.mrf.mxu0
        %v701 = vadd.f32 %v583, %v700
        %v702 = vpop.f32.mrf.mxu0
        %703 = vmatprep.mubr.f32.mxu0 0.0
        %704 = vmatmul.mubr.f32.gmra.mxu0 %v590
        %v705 = vpop.f32.mrf.mxu0
        %v706 = vadd.f32 %v583, %v705
        %v707 = vpop.f32.mrf.mxu0
        %708 = vmatprep.mubr.f32.mxu0 0.0
        %709 = vmatmul.mubr.f32.gmra.mxu0 %v593
        %v710 = vpop.f32.mrf.mxu0
        %v711 = vadd.f32 %v583, %v710
        %v712 = vpop.f32.mrf.mxu0
        %713 = vmatprep.mubr.f32.mxu0 0.0
        %714 = vmatmul.mubr.f32.gmra.mxu0 %v596
        %v715 = vpop.f32.mrf.mxu0
        %v716 = vadd.f32 %v583, %v715
        %v717 = vpop.f32.mrf.mxu0
        %718 = vmatprep.mubr.f32.mxu0 0.0
        %719 = vmatmul.mubr.f32.gmra.mxu0 %v599
        %v720 = vpop.f32.mrf.mxu0
        %v721 = vadd.f32 %v583, %v720
        %v722 = vpop.f32.mrf.mxu0
        %723 = vmatprep.mubr.f32.mxu0 0.0
        %724 = vmatmul.mubr.f32.gmra.mxu0 %v602
        %v725 = vpop.f32.mrf.mxu0
        %v726 = vadd.f32 %v583, %v725
        %v727 = vpop.f32.mrf.mxu0
        %728 = vmatprep.mubr.f32.mxu0 0.0
        %729 = vmatmul.mubr.f32.gmra.mxu0 %v605
        %v730 = vpop.f32.mrf.mxu0
        %v731 = vadd.f32 %v583, %v730
        %v732 = vpop.f32.mrf.mxu0
        %733 = vmatprep.mubr.f32.mxu0 0.0
        %734 = vmatmul.mubr.f32.gmra.mxu0 %v608
        %v735 = vpop.f32.mrf.mxu0
        %v736 = vadd.f32 %v583, %v735
        %v737 = vpop.f32.mrf.mxu0
        %738 = vmatprep.mubr.f32.mxu0 0.0
        %739 = vmatmul.mubr.f32.gmra.mxu0 %v611
        %v740 = vpop.f32.mrf.mxu0
        %v741 = vadd.f32 %v583, %v740
        %v742 = vpop.f32.mrf.mxu0
        %743 = vmatprep.mubr.f32.mxu0 0.0
        %744 = vmatmul.mubr.f32.gmra.mxu0 %v614
        %v745 = vpop.f32.mrf.mxu0
        %v746 = vadd.f32 %v583, %v745
        %v747 = vpop.f32.mrf.mxu0
        %748 = vmatprep.mubr.f32.mxu0 0.0
        %749 = vmatmul.mubr.f32.gmra.mxu0 %v617
        %v750 = vpop.f32.mrf.mxu0
        %v751 = vadd.f32 %v583, %v750
        %v752 = vpop.f32.mrf.mxu0
        %753 = vmatprep.mubr.f32.mxu0 0.0
        %754 = vmatmul.mubr.f32.gmra.mxu0 %v620
        %v755 = vpop.f32.mrf.mxu0
        %v756 = vadd.f32 %v583, %v755
        %v757 = vpop.f32.mrf.mxu0
        %758 = vmatprep.mubr.f32.mxu0 0.0
        %759 = vmatmul.mubr.f32.gmra.mxu0 %v623
        %v760 = vpop.f32.mrf.mxu0
        %v761 = vadd.f32 %v583, %v760
        %v762 = vpop.f32.mrf.mxu0
        %763 = vmatprep.mubr.f32.mxu0 0.0
        %764 = vmatmul.mubr.f32.gmra.mxu0 %v626
        %v765 = vpop.f32.mrf.mxu0
        %v766 = vadd.f32 %v583, %v765
        %v767 = vpop.f32.mrf.mxu0
        %768 = vmatprep.mubr.f32.mxu0 0.0
        %769 = vmatmul.mubr.f32.gmra.mxu0 %v629
        %v770 = vpop.f32.mrf.mxu0
        %v771 = vadd.f32 %v583, %v770
        %v772 = vpop.f32.mrf.mxu0
        %773 = vmatprep.mubr.f32.mxu0 0.0
        %774 = vmatmul.mubr.f32.gmra.mxu0 %v632
        %v775 = vpop.f32.mrf.mxu0
        %v776 = vadd.f32 %v583, %v775
        %v777 = vpop.f32.mrf.mxu0
        %778 = vdwg.mxu0
        %v779 = vmax.f32 %v701, 0.0
        %v780 = vmax.f32 %v706, 0.0
        %v781 = vmax.f32 %v711, 0.0
        %v782 = vmax.f32 %v716, 0.0
        %v783 = vmax.f32 %v721, 0.0
        %v784 = vmax.f32 %v726, 0.0
        %v785 = vmax.f32 %v731, 0.0
        %v786 = vmax.f32 %v736, 0.0
        %v787 = vmax.f32 %v741, 0.0
        %v788 = vmax.f32 %v746, 0.0
        %v789 = vmax.f32 %v751, 0.0
        %v790 = vmax.f32 %v756, 0.0
        %v791 = vmax.f32 %v761, 0.0
        %v792 = vmax.f32 %v766, 0.0
        %v793 = vmax.f32 %v771, 0.0
        %v794 = vmax.f32 %v776, 0.0
        %v795 = vld [vmem:[%s5] sm:$0xff]
        %v796 = vld [vmem:[%s5 + $0x8] sm:$0xff]
        %v797 = vld [vmem:[%s5 + $0x10] sm:$0xff]
        %v798 = vld [vmem:[%s5 + $0x18] sm:$0xff]
        %v799 = vld [vmem:[%s6] sm:$0x1]
        %v801 = vlaneseq
        %v802 = vshrl.u32 %v801, 7
        %v803 = vsub.s32 0, %v802
        %v804 = vrot.slane %v799, %v803
        %v807 = vsel %vm360, %v779, 0
        %v810 = vsel %vm360, %v780, 0
        %v813 = vsel %vm360, %v781, 0
        %v816 = vsel %vm360, %v782, 0
        %v819 = vsel %vm360, %v783, 0
        %v822 = vsel %vm360, %v784, 0
        %v825 = vsel %vm360, %v785, 0
        %v828 = vsel %vm360, %v786, 0
        %v831 = vsel %vm360, %v787, 0
        %v834 = vsel %vm360, %v788, 0
        %v837 = vsel %vm360, %v789, 0
        %v840 = vsel %vm360, %v790, 0
        %v843 = vsel %vm360, %v791, 0
        %v846 = vsel %vm360, %v792, 0
        %v849 = vsel %vm360, %v793, 0
        %v852 = vsel %vm360, %v794, 0
        %854 = vmatprep.subr.mxu0 0.0
        %855 = vmatpush1.msra.mxu0 0.0
        %856 = vmatprep.subr.mxu0 0.0
        %857 = vmatpush1.msra.mxu0 0.0
        %858 = vmatprep.subr.mxu0 0.0
        %859 = vmatpush1.msra.mxu0 0.0
        %860 = vmatprep.subr.mxu0 0.0
        %861 = vmatpush1.msra.mxu0 0.0
        %862 = vmatprep.subr.mxu0 0.0
        %863 = vmatpush1.msra.mxu0 0.0
        %864 = vmatprep.subr.mxu0 0.0
        %865 = vmatpush1.msra.mxu0 0.0
        %866 = vmatprep.subr.mxu0 0.0
        %867 = vmatpush1.msra.mxu0 0.0
        %868 = vmatprep.subr.mxu0 0.0
        %869 = vmatpush1.msra.mxu0 0.0
        %870 = vmatprep.subr.mxu0 0.0
        %871 = vmatpush1.msra.mxu0 0.0
        %872 = vmatprep.subr.mxu0 0.0
        %873 = vmatpush1.msra.mxu0 0.0
        %874 = vmatprep.subr.mxu0 0.0
        %875 = vmatpush1.msra.mxu0 0.0
        %876 = vmatprep.subr.mxu0 0.0
        %877 = vmatpush1.msra.mxu0 0.0
        %878 = vmatprep.subr.mxu0 0.0
        %879 = vmatpush1.msra.mxu0 %v798
        %880 = vmatprep.subr.mxu0 0.0
        %881 = vmatpush1.msra.mxu0 %v797
        %882 = vmatprep.subr.mxu0 0.0
        %883 = vmatpush1.msra.mxu0 %v796
        %884 = vmatprep.subr.mxu0 0.0
        %885 = vmatpush1.msra.mxu0 %v795
        %886 = vmatprep.subr.mxu0 0.0
        %887 = vmatpush2.msra.mxu0 0.0
        %888 = vmatprep.subr.mxu0 0.0
        %889 = vmatpush2.msra.mxu0 0.0
        %890 = vmatprep.subr.mxu0 0.0
        %891 = vmatpush2.msra.mxu0 0.0
        %892 = vmatprep.subr.mxu0 0.0
        %893 = vmatpush2.msra.mxu0 0.0
        %894 = vmatprep.subr.mxu0 0.0
        %895 = vmatpush2.msra.mxu0 0.0
        %896 = vmatprep.subr.mxu0 0.0
        %897 = vmatpush2.msra.mxu0 0.0
        %898 = vmatprep.subr.mxu0 0.0
        %899 = vmatpush2.msra.mxu0 0.0
        %900 = vmatprep.subr.mxu0 0.0
        %901 = vmatpush2.msra.mxu0 0.0
        %902 = vmatprep.subr.mxu0 0.0
        %903 = vmatpush2.msra.mxu0 0.0
        %904 = vmatprep.subr.mxu0 0.0
        %905 = vmatpush2.msra.mxu0 0.0
        %906 = vmatprep.subr.mxu0 0.0
        %907 = vmatpush2.msra.mxu0 0.0
        %908 = vmatprep.subr.mxu0 0.0
        %909 = vmatpush2.msra.mxu0 0.0
        %910 = vmatprep.subr.mxu0 0.0
        %911 = vmatpush2.msra.mxu0 0.0
        %912 = vmatprep.subr.mxu0 0.0
        %913 = vmatpush2.msra.mxu0 0.0
        %914 = vmatprep.subr.mxu0 0.0
        %915 = vmatpush2.msra.mxu0 0.0
        %916 = vmatprep.subr.mxu0 0.0
        %917 = vmatpush2.msra.mxu0 0.0
        %918 = vmatprep.mubr.f32.mxu0 0.0
        %919 = vmatmul.mubr.f32.gmra.mxu0 %v807
        %v920 = vpop.f32.mrf.mxu0
        %v921 = vadd.f32 %v804, %v920
        %v922 = vpop.f32.mrf.mxu0
        %923 = vmatprep.mubr.f32.mxu0 0.0
        %924 = vmatmul.mubr.f32.gmra.mxu0 %v810
        %v925 = vpop.f32.mrf.mxu0
        %v926 = vadd.f32 %v804, %v925
        %v927 = vpop.f32.mrf.mxu0
        %928 = vmatprep.mubr.f32.mxu0 0.0
        %929 = vmatmul.mubr.f32.gmra.mxu0 %v813
        %v930 = vpop.f32.mrf.mxu0
        %v931 = vadd.f32 %v804, %v930
        %v932 = vpop.f32.mrf.mxu0
        %933 = vmatprep.mubr.f32.mxu0 0.0
        %934 = vmatmul.mubr.f32.gmra.mxu0 %v816
        %v935 = vpop.f32.mrf.mxu0
        %v936 = vadd.f32 %v804, %v935
        %v937 = vpop.f32.mrf.mxu0
        %938 = vmatprep.mubr.f32.mxu0 0.0
        %939 = vmatmul.mubr.f32.gmra.mxu0 %v819
        %v940 = vpop.f32.mrf.mxu0
        %v941 = vadd.f32 %v804, %v940
        %v942 = vpop.f32.mrf.mxu0
        %943 = vmatprep.mubr.f32.mxu0 0.0
        %944 = vmatmul.mubr.f32.gmra.mxu0 %v822
        %v945 = vpop.f32.mrf.mxu0
        %v946 = vadd.f32 %v804, %v945
        %v947 = vpop.f32.mrf.mxu0
        %948 = vmatprep.mubr.f32.mxu0 0.0
        %949 = vmatmul.mubr.f32.gmra.mxu0 %v825
        %v950 = vpop.f32.mrf.mxu0
        %v951 = vadd.f32 %v804, %v950
        %v952 = vpop.f32.mrf.mxu0
        %953 = vmatprep.mubr.f32.mxu0 0.0
        %954 = vmatmul.mubr.f32.gmra.mxu0 %v828
        %v955 = vpop.f32.mrf.mxu0
        %v956 = vadd.f32 %v804, %v955
        %v957 = vpop.f32.mrf.mxu0
        %958 = vmatprep.mubr.f32.mxu0 0.0
        %959 = vmatmul.mubr.f32.gmra.mxu0 %v831
        %v960 = vpop.f32.mrf.mxu0
        %v961 = vadd.f32 %v804, %v960
        %v962 = vpop.f32.mrf.mxu0
        %963 = vmatprep.mubr.f32.mxu0 0.0
        %964 = vmatmul.mubr.f32.gmra.mxu0 %v834
        %v965 = vpop.f32.mrf.mxu0
        %v966 = vadd.f32 %v804, %v965
        %v967 = vpop.f32.mrf.mxu0
        %968 = vmatprep.mubr.f32.mxu0 0.0
        %969 = vmatmul.mubr.f32.gmra.mxu0 %v837
        %v970 = vpop.f32.mrf.mxu0
        %v971 = vadd.f32 %v804, %v970
        %v972 = vpop.f32.mrf.mxu0
        %973 = vmatprep.mubr.f32.mxu0 0.0
        %974 = vmatmul.mubr.f32.gmra.mxu0 %v840
        %v975 = vpop.f32.mrf.mxu0
        %v976 = vadd.f32 %v804, %v975
        %v977 = vpop.f32.mrf.mxu0
        %978 = vmatprep.mubr.f32.mxu0 0.0
        %979 = vmatmul.mubr.f32.gmra.mxu0 %v843
        %v980 = vpop.f32.mrf.mxu0
        %v981 = vadd.f32 %v804, %v980
        %v982 = vpop.f32.mrf.mxu0
        %983 = vmatprep.mubr.f32.mxu0 0.0
        %984 = vmatmul.mubr.f32.gmra.mxu0 %v846
        %v985 = vpop.f32.mrf.mxu0
        %v986 = vadd.f32 %v804, %v985
        %v987 = vpop.f32.mrf.mxu0
        %988 = vmatprep.mubr.f32.mxu0 0.0
        %989 = vmatmul.mubr.f32.gmra.mxu0 %v849
        %v990 = vpop.f32.mrf.mxu0
        %v991 = vadd.f32 %v804, %v990
        %v992 = vpop.f32.mrf.mxu0
        %993 = vmatprep.mubr.f32.mxu0 0.0
        %994 = vmatmul.mubr.f32.gmra.mxu0 %v852
        %v995 = vpop.f32.mrf.mxu0
        %v996 = vadd.f32 %v804, %v995
        %v997 = vpop.f32.mrf.mxu0
        %998 = vdwg.mxu0
        %v999 = vmax.f32 %v921, 0.0
        %v1000 = vmax.f32 %v926, 0.0
        %v1001 = vmax.f32 %v931, 0.0
        %v1002 = vmax.f32 %v936, 0.0
        %v1003 = vmax.f32 %v941, 0.0
        %v1004 = vmax.f32 %v946, 0.0
        %v1005 = vmax.f32 %v951, 0.0
        %v1006 = vmax.f32 %v956, 0.0
        %v1007 = vmax.f32 %v961, 0.0
        %v1008 = vmax.f32 %v966, 0.0
        %v1009 = vmax.f32 %v971, 0.0
        %v1010 = vmax.f32 %v976, 0.0
        %v1011 = vmax.f32 %v981, 0.0
        %v1012 = vmax.f32 %v986, 0.0
        %v1013 = vmax.f32 %v991, 0.0
        %v1014 = vmax.f32 %v996, 0.0
        %v1015 = vld [vmem:[%s7] sm:$0x1]
        %s1016 = sld [smem:[#allocation2]]
        %v1017 = vstv %s1016
        %v1019 = vsel %vm585, %v1015, 0
        %v1022 = vsel %vm585, %v999, 0
        %v1025 = vsel %vm585, %v1000, 0
        %v1028 = vsel %vm585, %v1001, 0
        %v1031 = vsel %vm585, %v1002, 0
        %v1034 = vsel %vm585, %v1003, 0
        %v1037 = vsel %vm585, %v1004, 0
        %v1040 = vsel %vm585, %v1005, 0
        %v1043 = vsel %vm585, %v1006, 0
        %v1046 = vsel %vm585, %v1007, 0
        %v1049 = vsel %vm585, %v1008, 0
        %v1052 = vsel %vm585, %v1009, 0
        %v1055 = vsel %vm585, %v1010, 0
        %v1058 = vsel %vm585, %v1011, 0
        %v1061 = vsel %vm585, %v1012, 0
        %v1064 = vsel %vm585, %v1013, 0
        %v1067 = vsel %vm585, %v1014, 0
        %1069 = vmatprep.subr.mxu0 0.0
        %1070 = vmatpush1.xpose.msra.mxu0 %v1067
        %1071 = vmatprep.subr.mxu0 0.0
        %1072 = vmatpush1.xpose.msra.mxu0 %v1064
        %1073 = vmatprep.subr.mxu0 0.0
        %1074 = vmatpush1.xpose.msra.mxu0 %v1061
        %1075 = vmatprep.subr.mxu0 0.0
        %1076 = vmatpush1.xpose.msra.mxu0 %v1058
        %1077 = vmatprep.subr.mxu0 0.0
        %1078 = vmatpush1.xpose.msra.mxu0 %v1055
        %1079 = vmatprep.subr.mxu0 0.0
        %1080 = vmatpush1.xpose.msra.mxu0 %v1052
        %1081 = vmatprep.subr.mxu0 0.0
        %1082 = vmatpush1.xpose.msra.mxu0 %v1049
        %1083 = vmatprep.subr.mxu0 0.0
        %1084 = vmatpush1.xpose.msra.mxu0 %v1046
        %1085 = vmatprep.subr.mxu0 0.0
        %1086 = vmatpush1.xpose.msra.mxu0 %v1043
        %1087 = vmatprep.subr.mxu0 0.0
        %1088 = vmatpush1.xpose.msra.mxu0 %v1040
        %1089 = vmatprep.subr.mxu0 0.0
        %1090 = vmatpush1.xpose.msra.mxu0 %v1037
        %1091 = vmatprep.subr.mxu0 0.0
        %1092 = vmatpush1.xpose.msra.mxu0 %v1034
        %1093 = vmatprep.subr.mxu0 0.0
        %1094 = vmatpush1.xpose.msra.mxu0 %v1031
        %1095 = vmatprep.subr.mxu0 0.0
        %1096 = vmatpush1.xpose.msra.mxu0 %v1028
        %1097 = vmatprep.subr.mxu0 0.0
        %1098 = vmatpush1.xpose.msra.mxu0 %v1025
        %1099 = vmatprep.subr.mxu0 0.0
        %1100 = vmatpush1.xpose.msra.mxu0 %v1022
        %1101 = vmatprep.subr.mxu0 0.0
        %1102 = vmatpush2.xpose.msra.mxu0 0.0
        %1103 = vmatprep.subr.mxu0 0.0
        %1104 = vmatpush2.xpose.msra.mxu0 0.0
        %1105 = vmatprep.subr.mxu0 0.0
        %1106 = vmatpush2.xpose.msra.mxu0 0.0
        %1107 = vmatprep.subr.mxu0 0.0
        %1108 = vmatpush2.xpose.msra.mxu0 0.0
        %1109 = vmatprep.subr.mxu0 0.0
        %1110 = vmatpush2.xpose.msra.mxu0 0.0
        %1111 = vmatprep.subr.mxu0 0.0
        %1112 = vmatpush2.xpose.msra.mxu0 0.0
        %1113 = vmatprep.subr.mxu0 0.0
        %1114 = vmatpush2.xpose.msra.mxu0 0.0
        %1115 = vmatprep.subr.mxu0 0.0
        %1116 = vmatpush2.xpose.msra.mxu0 0.0
        %1117 = vmatprep.subr.mxu0 0.0
        %1118 = vmatpush2.xpose.msra.mxu0 0.0
        %1119 = vmatprep.subr.mxu0 0.0
        %1120 = vmatpush2.xpose.msra.mxu0 0.0
        %1121 = vmatprep.subr.mxu0 0.0
        %1122 = vmatpush2.xpose.msra.mxu0 0.0
        %1123 = vmatprep.subr.mxu0 0.0
        %1124 = vmatpush2.xpose.msra.mxu0 0.0
        %1125 = vmatprep.subr.mxu0 0.0
        %1126 = vmatpush2.xpose.msra.mxu0 0.0
        %1127 = vmatprep.subr.mxu0 0.0
        %1128 = vmatpush2.xpose.msra.mxu0 0.0
        %1129 = vmatprep.subr.mxu0 0.0
        %1130 = vmatpush2.xpose.msra.mxu0 0.0
        %1131 = vmatprep.subr.mxu0 0.0
        %1132 = vmatpush2.xpose.msra.mxu0 0.0
        %1133 = vmatprep.mubr.f32.mxu0 0.0
        %1134 = vmatmul.mubr.f32.gmra.mxu0 %v1019
        %v1135 = vpop.f32.mrf.mxu0
        %v1136 = vadd.f32 %v1017, %v1135
        %v1137 = vpop.f32.mrf.mxu0
        %1138 = vdwg.mxu0
        %v1139 = vxor.u32 %v1136, 2147483648
        %v1140 = vmul.f32 %v1139, 1.442695
        %v1141 = vpow.pop %v1140
        %v1142 = vadd.f32 %v1141, 1.0
        %v1143 = vrcp.pop %v1142
        %v1144 = vmul.f32 1.0, %v1143
        %1145 = vst [vmem:[%s326] sm:$0x1] %v1144
        %s1146 = sand.u32 %s226, 1
        %s1147 = scalar_lea.sflag [#allocation4], %s1146
        %s1148 = sand.u32 %s226, 1
        %s1149 = scalar_lea.vmem [#allocation3], %s1148
        // Predicated region
        $region57: #{tpu_custom_call.1} parent=55 // pred_check
          %p1150 = pneg %p236
        $region58: #{tpu_custom_call.1} parent=55 // pred_check_branch
          %1152 = sbr.rel (%p1150) target = $region60
        $region59: #{tpu_custom_call.1} parent=55 // pred_region
          %s1154 = ssub.s32 16, 16
          %1155 = vsyncadd %s1147, %s1154
          %s1156 = smul.addr %s24, 16
          %s1157 = scalar_lea.hbm %s9, %s1156
          %s1159 = sshll.u32 %s1149, 4
          %s1160 = int_to_ptr.vmem [resolvable:$true] %s1159
          %1162 = dma.vmem_to_hbm [thread:$0]  %s1160, 16, %s1157, %s1147
        $region60: #{tpu_custom_call.1} parent=55 // pred_fallthru
          _
      $region56: #{tpu_custom_call.1} parent=5 // pred_fallthru
        _
      %p1163 = scmp.le.s32.totalorder 2, %s19
      // Predicated region
      $region61: #{tpu_custom_call.1} parent=5 // pred_check
        %p1164 = pneg %p1163
      $region62: #{tpu_custom_call.1} parent=5 // pred_check_branch
        %1166 = sbr.rel (%p1164) target = $region64
      $region63: #{tpu_custom_call.1} parent=5 // pred_region
        %s1167 = ssub.s32 %s19, 2
        // Predicated region
        $region65: #{tpu_custom_call.1} parent=63 // pred_check
          %p1168 = pneg %p242
        $region66: #{tpu_custom_call.1} parent=63 // pred_check_branch
          %1170 = sbr.rel (%p1168) target = $region68
        $region67: #{tpu_custom_call.1} parent=63 // pred_region
          %s1171 = sand.u32 %s227, 1
          %s1172 = scalar_lea.sflag [#allocation4], %s1171
          %s1173 = sand.u32 %s227, 1
          %s1174 = scalar_lea.vmem [#allocation3], %s1173
          %1175 = dma.done %s1172, 16
        $region68: #{tpu_custom_call.1} parent=63 // pred_fallthru
          _
      $region64: #{tpu_custom_call.1} parent=5 // pred_fallthru
        _
    $region6: #{tpu_custom_call.1} parent=1 // loop_footer
      %s23 = sadd.s32 1, %s19
    $region7: #{tpu_custom_call.1} parent=1 // loop_footer_branch
      %18 = sbr.rel target = $region3
    $region8: #{tpu_custom_call.1} parent=1 // loop_exit
      _
    %1176 = vsyncpa [#allocation4], 1
    %s1177 = scalar_lea.sflag [#allocation4], 1
    %1178 = vsyncpa %s1177, 1

// kernel: tpu_custom_call.1
$region0: #{tpu_custom_call.1}
  #allocation0 [shape = 'u32[]', space=smem, size = 0x4, offset = 0x4, fixed_abs, tag = 'smem constant byte address 0x4 - core index']
  #allocation1 [shape = 'u32[144,128]{1,0:T(1,128)}', space=vmem, size = 0x12000, scoped, tag = 'internal scratch']
  #allocation2 [shape = 'f32[1,1]{1,0:T(1,128)S(6)}', space=smem, size = 0x200, scoped, tag = 'scoped memory for tpu_custom_call.1']
  %s0 = inlined_call_operand.vmem [shape: f32[384,32], index: 0, kind: input, shape index: {}]
  %s1 = inlined_call_operand.vmem [shape: f32[32,64], index: 1, kind: input, shape index: {}]
  %s2 = inlined_call_operand.vmem [shape: f32[1,64], index: 2, kind: input, shape index: {}]
  %s3 = inlined_call_operand.vmem [shape: f32[64,32], index: 3, kind: input, shape index: {}]
  %s4 = inlined_call_operand.vmem [shape: f32[1,32], index: 4, kind: input, shape index: {}]
  %s5 = inlined_call_operand.vmem [shape: f32[32,64], index: 5, kind: input, shape index: {}]
  %s6 = inlined_call_operand.vmem [shape: f32[1,64], index: 6, kind: input, shape index: {}]
  %s7 = inlined_call_operand.vmem [shape: f32[1,64], index: 7, kind: input, shape index: {}]
  %s8 = inlined_call_operand.<no memory space> [shape: f32[1,1], index: 8, kind: input, shape index: {}]
  %s9 = inlined_call_operand.vmem [shape: f32[384,1], index: 9, kind: output, shape index: {}]
  %s10 = sld [smem:[#allocation0]]
  $region69: #{tpu_custom_call.1} parent=0
    _
  %s12 = ssub.s32 1, %s10
  %s13 = scalar_select 0, %s12, %s10
  %14 = sst [smem:[#allocation2]] %s8
  loop: start=0, step=1, limit=5
  $region2: #{tpu_custom_call.1} parent=0 // loop_pre_header
    _
  $region3: #{tpu_custom_call.1} parent=0 // loop_header
    %s16 = sphi 0, %s20
    %p17 = scmp.ge.s32.totalorder %s16, 5
    %s26 = sphi 0, %s28
    %s29 = sphi 0, %s26
    %s30 = sphi 0, %s29
    %s46 = sphi 0, %s30
    %s50 = sphi 0, %s50
    %s52 = sphi 0, %s50
    %s53 = sphi 0, %s52
    %s67 = sphi 0, %s53
    %s71 = sphi 0, %s71
    %s73 = sphi 0, %s71
    %s74 = sphi 0, %s73
    %s88 = sphi 0, %s74
    %s92 = sphi 0, %s92
    %s94 = sphi 0, %s92
    %s95 = sphi 0, %s94
    %s109 = sphi 0, %s95
    %s113 = sphi 0, %s113
    %s115 = sphi 0, %s113
    %s116 = sphi 0, %s115
    %s130 = sphi 0, %s116
    %s134 = sphi 0, %s134
    %s136 = sphi 0, %s134
    %s137 = sphi 0, %s136
    %s151 = sphi 0, %s137
    %s155 = sphi 0, %s155
    %s157 = sphi 0, %s155
    %s158 = sphi 0, %s157
    %s172 = sphi 0, %s158
    %s176 = sphi 0, %s176
    %s178 = sphi 0, %s176
    %s179 = sphi 0, %s178
    %s193 = sphi 0, %s179
    %s197 = sphi 0, %s197
    %s199 = sphi 0, %s197
    %s200 = sphi 0, %s199
    %s214 = sphi 0, %s200
    %s220 = sphi 0, %s222
    %s223 = sphi 0, %s220
    %s224 = sphi 0, %s223
    %s240 = sphi 0, %s224
  $region4: #{tpu_custom_call.1} parent=0 // loop_header_branch
    %19 = sbr.rel (%p17) target = $region8
  $region5: #{tpu_custom_call.1} parent=0 // loop_body
    %s21 = ssub.s32 %s16, 1
    %s22 = ssub.s32 %s16, 2
    %s23 = sadd.s32 %s16, 1
    %s24 = ssub.s32 %s16, %s23
    %p25 = scmp.eq.s32.totalorder %s24, 0
    %s27 = sadd.s32 %s26, 1
    %s28 = scalar_select %p25, %s26, %s27
    %p31 = pneg %p25
    %p32 = scmp.eq.s32.totalorder %s16, 2
    %p33 = por %p31, %p32
    %p34 = scmp.ne.s32.totalorder %s26, %s29
    %p35 = scmp.eq.s32.totalorder %s16, 0
    %p36 = por %p34, %p35
    %p37 = scmp.ne.s32.totalorder %s26, %s29
    %p38 = scmp.eq.s32.totalorder %s21, 2
    %p39 = por %p37, %p38
    %p40 = scmp.ne.s32.totalorder %s29, %s30
    %p41 = scmp.eq.s32.totalorder %s21, 0
    %p42 = por %p40, %p41
    %p43 = scmp.ne.s32.totalorder %s29, %s30
    %p44 = scmp.eq.s32.totalorder %s22, 2
    %p45 = por %p43, %p44
    %p47 = scmp.ne.s32.totalorder %s30, %s46
    %p48 = scmp.eq.s32.totalorder %s22, 0
    %p49 = por %p47, %p48
    %s51 = sadd.s32 %s50, 1
    %p54 = scmp.eq.s32.totalorder %s16, 2
    %p55 = scmp.ne.s32.totalorder %s50, %s52
    %p56 = scmp.eq.s32.totalorder %s16, 0
    %p57 = por %p55, %p56
    %p58 = scmp.ne.s32.totalorder %s50, %s52
    %p59 = scmp.eq.s32.totalorder %s21, 2
    %p60 = por %p58, %p59
    %p61 = scmp.ne.s32.totalorder %s52, %s53
    %p62 = scmp.eq.s32.totalorder %s21, 0
    %p63 = por %p61, %p62
    %p64 = scmp.ne.s32.totalorder %s52, %s53
    %p65 = scmp.eq.s32.totalorder %s22, 2
    %p66 = por %p64, %p65
    %p68 = scmp.ne.s32.totalorder %s53, %s67
    %p69 = scmp.eq.s32.totalorder %s22, 0
    %p70 = por %p68, %p69
    %s72 = sadd.s32 %s71, 1
    %p75 = scmp.eq.s32.totalorder %s16, 2
    %p76 = scmp.ne.s32.totalorder %s71, %s73
    %p77 = scmp.eq.s32.totalorder %s16, 0
    %p78 = por %p76, %p77
    %p79 = scmp.ne.s32.totalorder %s71, %s73
    %p80 = scmp.eq.s32.totalorder %s21, 2
    %p81 = por %p79, %p80
    %p82 = scmp.ne.s32.totalorder %s73, %s74
    %p83 = scmp.eq.s32.totalorder %s21, 0
    %p84 = por %p82, %p83
    %p85 = scmp.ne.s32.totalorder %s73, %s74
    %p86 = scmp.eq.s32.totalorder %s22, 2
    %p87 = por %p85, %p86
    %p89 = scmp.ne.s32.totalorder %s74, %s88
    %p90 = scmp.eq.s32.totalorder %s22, 0
    %p91 = por %p89, %p90
    %s93 = sadd.s32 %s92, 1
    %p96 = scmp.eq.s32.totalorder %s16, 2
    %p97 = scmp.ne.s32.totalorder %s92, %s94
    %p98 = scmp.eq.s32.totalorder %s16, 0
    %p99 = por %p97, %p98
    %p100 = scmp.ne.s32.totalorder %s92, %s94
    %p101 = scmp.eq.s32.totalorder %s21, 2
    %p102 = por %p100, %p101
    %p103 = scmp.ne.s32.totalorder %s94, %s95
    %p104 = scmp.eq.s32.totalorder %s21, 0
    %p105 = por %p103, %p104
    %p106 = scmp.ne.s32.totalorder %s94, %s95
    %p107 = scmp.eq.s32.totalorder %s22, 2
    %p108 = por %p106, %p107
    %p110 = scmp.ne.s32.totalorder %s95, %s109
    %p111 = scmp.eq.s32.totalorder %s22, 0
    %p112 = por %p110, %p111
    %s114 = sadd.s32 %s113, 1
    %p117 = scmp.eq.s32.totalorder %s16, 2
    %p118 = scmp.ne.s32.totalorder %s113, %s115
    %p119 = scmp.eq.s32.totalorder %s16, 0
    %p120 = por %p118, %p119
    %p121 = scmp.ne.s32.totalorder %s113, %s115
    %p122 = scmp.eq.s32.totalorder %s21, 2
    %p123 = por %p121, %p122
    %p124 = scmp.ne.s32.totalorder %s115, %s116
    %p125 = scmp.eq.s32.totalorder %s21, 0
    %p126 = por %p124, %p125
    %p127 = scmp.ne.s32.totalorder %s115, %s116
    %p128 = scmp.eq.s32.totalorder %s22, 2
    %p129 = por %p127, %p128
    %p131 = scmp.ne.s32.totalorder %s116, %s130
    %p132 = scmp.eq.s32.totalorder %s22, 0
    %p133 = por %p131, %p132
    %s135 = sadd.s32 %s134, 1
    %p138 = scmp.eq.s32.totalorder %s16, 2
    %p139 = scmp.ne.s32.totalorder %s134, %s136
    %p140 = scmp.eq.s32.totalorder %s16, 0
    %p141 = por %p139, %p140
    %p142 = scmp.ne.s32.totalorder %s134, %s136
    %p143 = scmp.eq.s32.totalorder %s21, 2
    %p144 = por %p142, %p143
    %p145 = scmp.ne.s32.totalorder %s136, %s137
    %p146 = scmp.eq.s32.totalorder %s21, 0
    %p147 = por %p145, %p146
    %p148 = scmp.ne.s32.totalorder %s136, %s137
    %p149 = scmp.eq.s32.totalorder %s22, 2
    %p150 = por %p148, %p149
    %p152 = scmp.ne.s32.totalorder %s137, %s151
    %p153 = scmp.eq.s32.totalorder %s22, 0
    %p154 = por %p152, %p153
    %s156 = sadd.s32 %s155, 1
    %p159 = scmp.eq.s32.totalorder %s16, 2
    %p160 = scmp.ne.s32.totalorder %s155, %s157
    %p161 = scmp.eq.s32.totalorder %s16, 0
    %p162 = por %p160, %p161
    %p163 = scmp.ne.s32.totalorder %s155, %s157
    %p164 = scmp.eq.s32.totalorder %s21, 2
    %p165 = por %p163, %p164
    %p166 = scmp.ne.s32.totalorder %s157, %s158
    %p167 = scmp.eq.s32.totalorder %s21, 0
    %p168 = por %p166, %p167
    %p169 = scmp.ne.s32.totalorder %s157, %s158
    %p170 = scmp.eq.s32.totalorder %s22, 2
    %p171 = por %p169, %p170
    %p173 = scmp.ne.s32.totalorder %s158, %s172
    %p174 = scmp.eq.s32.totalorder %s22, 0
    %p175 = por %p173, %p174
    %s177 = sadd.s32 %s176, 1
    %p180 = scmp.eq.s32.totalorder %s16, 2
    %p181 = scmp.ne.s32.totalorder %s176, %s178
    %p182 = scmp.eq.s32.totalorder %s16, 0
    %p183 = por %p181, %p182
    %p184 = scmp.ne.s32.totalorder %s176, %s178
    %p185 = scmp.eq.s32.totalorder %s21, 2
    %p186 = por %p184, %p185
    %p187 = scmp.ne.s32.totalorder %s178, %s179
    %p188 = scmp.eq.s32.totalorder %s21, 0
    %p189 = por %p187, %p188
    %p190 = scmp.ne.s32.totalorder %s178, %s179
    %p191 = scmp.eq.s32.totalorder %s22, 2
    %p192 = por %p190, %p191
    %p194 = scmp.ne.s32.totalorder %s179, %s193
    %p195 = scmp.eq.s32.totalorder %s22, 0
    %p196 = por %p194, %p195
    %s198 = sadd.s32 %s197, 1
    %p201 = scmp.eq.s32.totalorder %s16, 2
    %p202 = scmp.ne.s32.totalorder %s197, %s199
    %p203 = scmp.eq.s32.totalorder %s16, 0
    %p204 = por %p202, %p203
    %p205 = scmp.ne.s32.totalorder %s197, %s199
    %p206 = scmp.eq.s32.totalorder %s21, 2
    %p207 = por %p205, %p206
    %p208 = scmp.ne.s32.totalorder %s199, %s200
    %p209 = scmp.eq.s32.totalorder %s21, 0
    %p210 = por %p208, %p209
    %p211 = scmp.ne.s32.totalorder %s199, %s200
    %p212 = scmp.eq.s32.totalorder %s22, 2
    %p213 = por %p211, %p212
    %p215 = scmp.ne.s32.totalorder %s200, %s214
    %p216 = scmp.eq.s32.totalorder %s22, 0
    %p217 = por %p215, %p216
    %s218 = ssub.s32 %s16, %s23
    %p219 = scmp.eq.s32.totalorder %s218, 0
    %s221 = sadd.s32 %s220, 1
    %s222 = scalar_select %p219, %s220, %s221
    %p225 = pneg %p219
    %p226 = scmp.eq.s32.totalorder %s16, 2
    %p227 = por %p225, %p226
    %p228 = scmp.ne.s32.totalorder %s220, %s223
    %p229 = scmp.eq.s32.totalorder %s16, 0
    %p230 = por %p228, %p229
    %p231 = scmp.ne.s32.totalorder %s220, %s223
    %p232 = scmp.eq.s32.totalorder %s21, 2
    %p233 = por %p231, %p232
    %p234 = scmp.ne.s32.totalorder %s223, %s224
    %p235 = scmp.eq.s32.totalorder %s21, 0
    %p236 = por %p234, %p235
    %p237 = scmp.ne.s32.totalorder %s223, %s224
    %p238 = scmp.eq.s32.totalorder %s22, 2
    %p239 = por %p237, %p238
    %p241 = scmp.ne.s32.totalorder %s224, %s240
    %p242 = scmp.eq.s32.totalorder %s22, 0
    %p243 = por %p241, %p242
    %p244 = scmp.le.s32.totalorder 1, %s16
    %p245 = scmp.lt.s32.totalorder %s16, 4
    %p246 = pnand %p244, %p245
    %p247 = pneg %p246
    // Predicated region
    $region9: #{tpu_custom_call.1} parent=5 // pred_check
      _
    $region10: #{tpu_custom_call.1} parent=5 // pred_check_branch
      %249 = sbr.rel (%p246) target = $region12
    $region11: #{tpu_custom_call.1} parent=5 // pred_region
      %s250 = ssub.s32 %s16, 1
      // Predicated region
      $region13: #{tpu_custom_call.1} parent=11 // pred_check
        %p251 = pneg %p63
      $region14: #{tpu_custom_call.1} parent=11 // pred_check_branch
        %253 = sbr.rel (%p251) target = $region16
      $region15: #{tpu_custom_call.1} parent=11 // pred_region
        _
      $region16: #{tpu_custom_call.1} parent=11 // pred_fallthru
        _
      // Predicated region
      $region17: #{tpu_custom_call.1} parent=11 // pred_check
        %p254 = pneg %p84
      $region18: #{tpu_custom_call.1} parent=11 // pred_check_branch
        %256 = sbr.rel (%p254) target = $region20
      $region19: #{tpu_custom_call.1} parent=11 // pred_region
        _
      $region20: #{tpu_custom_call.1} parent=11 // pred_fallthru
        _
      // Predicated region
      $region21: #{tpu_custom_call.1} parent=11 // pred_check
        %p257 = pneg %p105
      $region22: #{tpu_custom_call.1} parent=11 // pred_check_branch
        %259 = sbr.rel (%p257) target = $region24
      $region23: #{tpu_custom_call.1} parent=11 // pred_region
        _
      $region24: #{tpu_custom_call.1} parent=11 // pred_fallthru
        _
      // Predicated region
      $region25: #{tpu_custom_call.1} parent=11 // pred_check
        %p260 = pneg %p126
      $region26: #{tpu_custom_call.1} parent=11 // pred_check_branch
        %262 = sbr.rel (%p260) target = $region28
      $region27: #{tpu_custom_call.1} parent=11 // pred_region
        _
      $region28: #{tpu_custom_call.1} parent=11 // pred_fallthru
        _
      // Predicated region
      $region29: #{tpu_custom_call.1} parent=11 // pred_check
        %p263 = pneg %p147
      $region30: #{tpu_custom_call.1} parent=11 // pred_check_branch
        %265 = sbr.rel (%p263) target = $region32
      $region31: #{tpu_custom_call.1} parent=11 // pred_region
        _
      $region32: #{tpu_custom_call.1} parent=11 // pred_fallthru
        _
      // Predicated region
      $region33: #{tpu_custom_call.1} parent=11 // pred_check
        %p266 = pneg %p168
      $region34: #{tpu_custom_call.1} parent=11 // pred_check_branch
        %268 = sbr.rel (%p266) target = $region36
      $region35: #{tpu_custom_call.1} parent=11 // pred_region
        _
      $region36: #{tpu_custom_call.1} parent=11 // pred_fallthru
        _
      // Predicated region
      $region37: #{tpu_custom_call.1} parent=11 // pred_check
        %p269 = pneg %p189
      $region38: #{tpu_custom_call.1} parent=11 // pred_check_branch
        %271 = sbr.rel (%p269) target = $region40
      $region39: #{tpu_custom_call.1} parent=11 // pred_region
        _
      $region40: #{tpu_custom_call.1} parent=11 // pred_fallthru
        _
      // Predicated region
      $region41: #{tpu_custom_call.1} parent=11 // pred_check
        %p272 = pneg %p210
      $region42: #{tpu_custom_call.1} parent=11 // pred_check_branch
        %274 = sbr.rel (%p272) target = $region44
      $region43: #{tpu_custom_call.1} parent=11 // pred_region
        _
      $region44: #{tpu_custom_call.1} parent=11 // pred_fallthru
        _
    $region12: #{tpu_custom_call.1} parent=5 // pred_fallthru
      _
    %p275 = scmp.lt.s32.totalorder %s16, 3
    // Predicated region
    $region45: #{tpu_custom_call.1} parent=5 // pred_check
      %p276 = pneg %p275
    $region46: #{tpu_custom_call.1} parent=5 // pred_check_branch
      %278 = sbr.rel (%p276) target = $region48
    $region47: #{tpu_custom_call.1} parent=5 // pred_region
      // Predicated region
      $region49: #{tpu_custom_call.1} parent=47 // pred_check
        %p279 = pneg %p36
      $region50: #{tpu_custom_call.1} parent=47 // pred_check_branch
        %281 = sbr.rel (%p279) target = $region52
      $region51: #{tpu_custom_call.1} parent=47 // pred_region
        %s282 = smul.u32 16, %s16
        %p283 = scmp.lt.s32.totalorder %s282, 47
        %s284 = scalar_select %p283, %s282, 47
        %s285 = smul.addr %s284, 8
        %s286 = scalar_lea.vmem %s0, %s285
        %s287 = smul.u32 16, %s16
      $region52: #{tpu_custom_call.1} parent=47 // pred_fallthru
        _
    $region48: #{tpu_custom_call.1} parent=5 // pred_fallthru
      _
    %p288 = scmp.le.s32.totalorder 1, %s16
    %p289 = scmp.lt.s32.totalorder %s16, 4
    %p290 = pnand %p288, %p289
    %p291 = pneg %p290
    // Predicated region
    $region53: #{tpu_custom_call.1} parent=5 // pred_check
      _
    $region54: #{tpu_custom_call.1} parent=5 // pred_check_branch
      %293 = sbr.rel (%p290) target = $region56
    $region55: #{tpu_custom_call.1} parent=5 // pred_region
      %s294 = ssub.s32 %s16, 1
      %s295 = smul.u32 16, %s21
      %p296 = scmp.lt.s32.totalorder %s295, 47
      %s297 = scalar_select %p296, %s295, 47
      %s298 = smul.addr %s297, 8
      %s299 = scalar_lea.vmem %s0, %s298
      %p300 = pneg %p42
      %p301 = pneg %p39
      %p302 = pneg %p63
      %p303 = pneg %p60
      %p304 = pneg %p84
      %p305 = pneg %p81
      %p306 = pneg %p105
      %p307 = pneg %p102
      %p308 = pneg %p126
      %p309 = pneg %p123
      %p310 = pneg %p147
      %p311 = pneg %p144
      %p312 = pneg %p168
      %p313 = pneg %p165
      %p314 = pneg %p189
      %p315 = pneg %p186
      %p316 = pneg %p210
      %p317 = pneg %p207
      %p318 = pneg %p236
      %p319 = pneg %p233
      %s320 = smul.u32 16, %s21
      %p321 = scmp.lt.s32.totalorder %s320, 47
      %s322 = scalar_select %p321, %s320, 47
      %s323 = smul.addr %s322, 8
      %s324 = scalar_lea.vmem %s9, %s323
      %s325 = smul.u32 16, %s21
      %p326 = scmp.lt.s32.totalorder %s325, 47
      %s327 = scalar_select %p326, %s325, 47
      %s328 = smul.addr %s327, 8
      %s329 = scalar_lea.vmem %s0, %s328
      %s330 = smul.u32 16, %s21
      %s331 = smul.u32 16, %s21
      %p332 = scmp.lt.s32.totalorder %s331, 47
      %s333 = scalar_select %p332, %s331, 47
      %s334 = smul.addr %s333, 8
      %s335 = scalar_lea.vmem %s9, %s334
      %s336 = smul.u32 16, %s21
      %v337 = vld [vmem:[%s329] sm:$0xff]
      %v338 = vld [vmem:[%s329 + $0x8] sm:$0xff]
      %v339 = vld [vmem:[%s329 + $0x10] sm:$0xff]
      %v340 = vld [vmem:[%s329 + $0x18] sm:$0xff]
      %v341 = vld [vmem:[%s329 + $0x20] sm:$0xff]
      %v342 = vld [vmem:[%s329 + $0x28] sm:$0xff]
      %v343 = vld [vmem:[%s329 + $0x30] sm:$0xff]
      %v344 = vld [vmem:[%s329 + $0x38] sm:$0xff]
      %v345 = vld [vmem:[%s329 + $0x40] sm:$0xff]
      %v346 = vld [vmem:[%s329 + $0x48] sm:$0xff]
      %v347 = vld [vmem:[%s329 + $0x50] sm:$0xff]
      %v348 = vld [vmem:[%s329 + $0x58] sm:$0xff]
      %v349 = vld [vmem:[%s329 + $0x60] sm:$0xff]
      %v350 = vld [vmem:[%s329 + $0x68] sm:$0xff]
      %v351 = vld [vmem:[%s329 + $0x70] sm:$0xff]
      %v352 = vld [vmem:[%s329 + $0x78] sm:$0xff]
      %v353 = vld [vmem:[%s1] sm:$0xff]
      %v354 = vld [vmem:[%s1 + $0x8] sm:$0xff]
      %v355 = vld [vmem:[%s1 + $0x10] sm:$0xff]
      %v356 = vld [vmem:[%s1 + $0x18] sm:$0xff]
      %v357 = vld [vmem:[%s2] sm:$0x1]
      %v359 = vlaneseq
      %v360 = vshrl.u32 %v359, 7
      %v361 = vsub.s32 0, %v360
      %v362 = vrot.slane %v357, %v361
      %vm364 = vcmask 261120
      %v366 = vsel %vm364, %v337, 0
      %v369 = vsel %vm364, %v338, 0
      %v372 = vsel %vm364, %v339, 0
      %v375 = vsel %vm364, %v340, 0
      %v378 = vsel %vm364, %v341, 0
      %v381 = vsel %vm364, %v342, 0
      %v384 = vsel %vm364, %v343, 0
      %v387 = vsel %vm364, %v344, 0
      %v390 = vsel %vm364, %v345, 0
      %v393 = vsel %vm364, %v346, 0
      %v396 = vsel %vm364, %v347, 0
      %v399 = vsel %vm364, %v348, 0
      %v402 = vsel %vm364, %v349, 0
      %v405 = vsel %vm364, %v350, 0
      %v408 = vsel %vm364, %v351, 0
      %v411 = vsel %vm364, %v352, 0
      %413 = vmatprep.subr.mxu0 0.0
      %414 = vmatpush1.msra.mxu0 0.0
      %415 = vmatprep.subr.mxu0 0.0
      %416 = vmatpush1.msra.mxu0 0.0
      %417 = vmatprep.subr.mxu0 0.0
      %418 = vmatpush1.msra.mxu0 0.0
      %419 = vmatprep.subr.mxu0 0.0
      %420 = vmatpush1.msra.mxu0 0.0
      %421 = vmatprep.subr.mxu0 0.0
      %422 = vmatpush1.msra.mxu0 0.0
      %423 = vmatprep.subr.mxu0 0.0
      %424 = vmatpush1.msra.mxu0 0.0
      %425 = vmatprep.subr.mxu0 0.0
      %426 = vmatpush1.msra.mxu0 0.0
      %427 = vmatprep.subr.mxu0 0.0
      %428 = vmatpush1.msra.mxu0 0.0
      %429 = vmatprep.subr.mxu0 0.0
      %430 = vmatpush1.msra.mxu0 0.0
      %431 = vmatprep.subr.mxu0 0.0
      %432 = vmatpush1.msra.mxu0 0.0
      %433 = vmatprep.subr.mxu0 0.0
      %434 = vmatpush1.msra.mxu0 0.0
      %435 = vmatprep.subr.mxu0 0.0
      %436 = vmatpush1.msra.mxu0 0.0
      %437 = vmatprep.subr.mxu0 0.0
      %438 = vmatpush1.msra.mxu0 %v356
      %439 = vmatprep.subr.mxu0 0.0
      %440 = vmatpush1.msra.mxu0 %v355
      %441 = vmatprep.subr.mxu0 0.0
      %442 = vmatpush1.msra.mxu0 %v354
      %443 = vmatprep.subr.mxu0 0.0
      %444 = vmatpush1.msra.mxu0 %v353
      %445 = vmatprep.subr.mxu0 0.0
      %446 = vmatpush2.msra.mxu0 0.0
      %447 = vmatprep.subr.mxu0 0.0
      %448 = vmatpush2.msra.mxu0 0.0
      %449 = vmatprep.subr.mxu0 0.0
      %450 = vmatpush2.msra.mxu0 0.0
      %451 = vmatprep.subr.mxu0 0.0
      %452 = vmatpush2.msra.mxu0 0.0
      %453 = vmatprep.subr.mxu0 0.0
      %454 = vmatpush2.msra.mxu0 0.0
      %455 = vmatprep.subr.mxu0 0.0
      %456 = vmatpush2.msra.mxu0 0.0
      %457 = vmatprep.subr.mxu0 0.0
      %458 = vmatpush2.msra.mxu0 0.0
      %459 = vmatprep.subr.mxu0 0.0
      %460 = vmatpush2.msra.mxu0 0.0
      %461 = vmatprep.subr.mxu0 0.0
      %462 = vmatpush2.msra.mxu0 0.0
      %463 = vmatprep.subr.mxu0 0.0
      %464 = vmatpush2.msra.mxu0 0.0
      %465 = vmatprep.subr.mxu0 0.0
      %466 = vmatpush2.msra.mxu0 0.0
      %467 = vmatprep.subr.mxu0 0.0
      %468 = vmatpush2.msra.mxu0 0.0
      %469 = vmatprep.subr.mxu0 0.0
      %470 = vmatpush2.msra.mxu0 0.0
      %471 = vmatprep.subr.mxu0 0.0
      %472 = vmatpush2.msra.mxu0 0.0
      %473 = vmatprep.subr.mxu0 0.0
      %474 = vmatpush2.msra.mxu0 0.0
      %475 = vmatprep.subr.mxu0 0.0
      %476 = vmatpush2.msra.mxu0 0.0
      %477 = vmatprep.mubr.f32.mxu0 0.0
      %478 = vmatmul.mubr.f32.gmra.mxu0 %v366
      %v479 = vpop.f32.mrf.mxu0
      %v480 = vadd.f32 %v362, %v479
      %v481 = vpop.f32.mrf.mxu0
      %482 = vmatprep.mubr.f32.mxu0 0.0
      %483 = vmatmul.mubr.f32.gmra.mxu0 %v369
      %v484 = vpop.f32.mrf.mxu0
      %v485 = vadd.f32 %v362, %v484
      %v486 = vpop.f32.mrf.mxu0
      %487 = vmatprep.mubr.f32.mxu0 0.0
      %488 = vmatmul.mubr.f32.gmra.mxu0 %v372
      %v489 = vpop.f32.mrf.mxu0
      %v490 = vadd.f32 %v362, %v489
      %v491 = vpop.f32.mrf.mxu0
      %492 = vmatprep.mubr.f32.mxu0 0.0
      %493 = vmatmul.mubr.f32.gmra.mxu0 %v375
      %v494 = vpop.f32.mrf.mxu0
      %v495 = vadd.f32 %v362, %v494
      %v496 = vpop.f32.mrf.mxu0
      %497 = vmatprep.mubr.f32.mxu0 0.0
      %498 = vmatmul.mubr.f32.gmra.mxu0 %v378
      %v499 = vpop.f32.mrf.mxu0
      %v500 = vadd.f32 %v362, %v499
      %v501 = vpop.f32.mrf.mxu0
      %502 = vmatprep.mubr.f32.mxu0 0.0
      %503 = vmatmul.mubr.f32.gmra.mxu0 %v381
      %v504 = vpop.f32.mrf.mxu0
      %v505 = vadd.f32 %v362, %v504
      %v506 = vpop.f32.mrf.mxu0
      %507 = vmatprep.mubr.f32.mxu0 0.0
      %508 = vmatmul.mubr.f32.gmra.mxu0 %v384
      %v509 = vpop.f32.mrf.mxu0
      %v510 = vadd.f32 %v362, %v509
      %v511 = vpop.f32.mrf.mxu0
      %512 = vmatprep.mubr.f32.mxu0 0.0
      %513 = vmatmul.mubr.f32.gmra.mxu0 %v387
      %v514 = vpop.f32.mrf.mxu0
      %v515 = vadd.f32 %v362, %v514
      %v516 = vpop.f32.mrf.mxu0
      %517 = vmatprep.mubr.f32.mxu0 0.0
      %518 = vmatmul.mubr.f32.gmra.mxu0 %v390
      %v519 = vpop.f32.mrf.mxu0
      %v520 = vadd.f32 %v362, %v519
      %v521 = vpop.f32.mrf.mxu0
      %522 = vmatprep.mubr.f32.mxu0 0.0
      %523 = vmatmul.mubr.f32.gmra.mxu0 %v393
      %v524 = vpop.f32.mrf.mxu0
      %v525 = vadd.f32 %v362, %v524
      %v526 = vpop.f32.mrf.mxu0
      %527 = vmatprep.mubr.f32.mxu0 0.0
      %528 = vmatmul.mubr.f32.gmra.mxu0 %v396
      %v529 = vpop.f32.mrf.mxu0
      %v530 = vadd.f32 %v362, %v529
      %v531 = vpop.f32.mrf.mxu0
      %532 = vmatprep.mubr.f32.mxu0 0.0
      %533 = vmatmul.mubr.f32.gmra.mxu0 %v399
      %v534 = vpop.f32.mrf.mxu0
      %v535 = vadd.f32 %v362, %v534
      %v536 = vpop.f32.mrf.mxu0
      %537 = vmatprep.mubr.f32.mxu0 0.0
      %538 = vmatmul.mubr.f32.gmra.mxu0 %v402
      %v539 = vpop.f32.mrf.mxu0
      %v540 = vadd.f32 %v362, %v539
      %v541 = vpop.f32.mrf.mxu0
      %542 = vmatprep.mubr.f32.mxu0 0.0
      %543 = vmatmul.mubr.f32.gmra.mxu0 %v405
      %v544 = vpop.f32.mrf.mxu0
      %v545 = vadd.f32 %v362, %v544
      %v546 = vpop.f32.mrf.mxu0
      %547 = vmatprep.mubr.f32.mxu0 0.0
      %548 = vmatmul.mubr.f32.gmra.mxu0 %v408
      %v549 = vpop.f32.mrf.mxu0
      %v550 = vadd.f32 %v362, %v549
      %v551 = vpop.f32.mrf.mxu0
      %552 = vmatprep.mubr.f32.mxu0 0.0
      %553 = vmatmul.mubr.f32.gmra.mxu0 %v411
      %v554 = vpop.f32.mrf.mxu0
      %v555 = vadd.f32 %v362, %v554
      %v556 = vpop.f32.mrf.mxu0
      %557 = vdwg.mxu0
      %v558 = vmax.f32 %v480, 0.0
      %v559 = vmax.f32 %v485, 0.0
      %v560 = vmax.f32 %v490, 0.0
      %v561 = vmax.f32 %v495, 0.0
      %v562 = vmax.f32 %v500, 0.0
      %v563 = vmax.f32 %v505, 0.0
      %v564 = vmax.f32 %v510, 0.0
      %v565 = vmax.f32 %v515, 0.0
      %v566 = vmax.f32 %v520, 0.0
      %v567 = vmax.f32 %v525, 0.0
      %v568 = vmax.f32 %v530, 0.0
      %v569 = vmax.f32 %v535, 0.0
      %v570 = vmax.f32 %v540, 0.0
      %v571 = vmax.f32 %v545, 0.0
      %v572 = vmax.f32 %v550, 0.0
      %v573 = vmax.f32 %v555, 0.0
      %v574 = vld [vmem:[%s3] sm:$0xff]
      %v575 = vld [vmem:[%s3 + $0x8] sm:$0xff]
      %v576 = vld [vmem:[%s3 + $0x10] sm:$0xff]
      %v577 = vld [vmem:[%s3 + $0x18] sm:$0xff]
      %v578 = vld [vmem:[%s3 + $0x20] sm:$0xff]
      %v579 = vld [vmem:[%s3 + $0x28] sm:$0xff]
      %v580 = vld [vmem:[%s3 + $0x30] sm:$0xff]
      %v581 = vld [vmem:[%s3 + $0x38] sm:$0xff]
      %v582 = vld [vmem:[%s4] sm:$0x1]
      %v584 = vlaneseq
      %v585 = vshrl.u32 %v584, 7
      %v586 = vsub.s32 0, %v585
      %v587 = vrot.slane %v582, %v586
      %vm589 = vcmask 523264
      %v591 = vsel %vm589, %v558, 0
      %v594 = vsel %vm589, %v559, 0
      %v597 = vsel %vm589, %v560, 0
      %v600 = vsel %vm589, %v561, 0
      %v603 = vsel %vm589, %v562, 0
      %v606 = vsel %vm589, %v563, 0
      %v609 = vsel %vm589, %v564, 0
      %v612 = vsel %vm589, %v565, 0
      %v615 = vsel %vm589, %v566, 0
      %v618 = vsel %vm589, %v567, 0
      %v621 = vsel %vm589, %v568, 0
      %v624 = vsel %vm589, %v569, 0
      %v627 = vsel %vm589, %v570, 0
      %v630 = vsel %vm589, %v571, 0
      %v633 = vsel %vm589, %v572, 0
      %v636 = vsel %vm589, %v573, 0
      %638 = vmatprep.subr.mxu0 0.0
      %639 = vmatpush1.msra.mxu0 0.0
      %640 = vmatprep.subr.mxu0 0.0
      %641 = vmatpush1.msra.mxu0 0.0
      %642 = vmatprep.subr.mxu0 0.0
      %643 = vmatpush1.msra.mxu0 0.0
      %644 = vmatprep.subr.mxu0 0.0
      %645 = vmatpush1.msra.mxu0 0.0
      %646 = vmatprep.subr.mxu0 0.0
      %647 = vmatpush1.msra.mxu0 0.0
      %648 = vmatprep.subr.mxu0 0.0
      %649 = vmatpush1.msra.mxu0 0.0
      %650 = vmatprep.subr.mxu0 0.0
      %651 = vmatpush1.msra.mxu0 0.0
      %652 = vmatprep.subr.mxu0 0.0
      %653 = vmatpush1.msra.mxu0 0.0
      %654 = vmatprep.subr.mxu0 0.0
      %655 = vmatpush1.msra.mxu0 %v581
      %656 = vmatprep.subr.mxu0 0.0
      %657 = vmatpush1.msra.mxu0 %v580
      %658 = vmatprep.subr.mxu0 0.0
      %659 = vmatpush1.msra.mxu0 %v579
      %660 = vmatprep.subr.mxu0 0.0
      %661 = vmatpush1.msra.mxu0 %v578
      %662 = vmatprep.subr.mxu0 0.0
      %663 = vmatpush1.msra.mxu0 %v577
      %664 = vmatprep.subr.mxu0 0.0
      %665 = vmatpush1.msra.mxu0 %v576
      %666 = vmatprep.subr.mxu0 0.0
      %667 = vmatpush1.msra.mxu0 %v575
      %668 = vmatprep.subr.mxu0 0.0
      %669 = vmatpush1.msra.mxu0 %v574
      %670 = vmatprep.subr.mxu0 0.0
      %671 = vmatpush2.msra.mxu0 0.0
      %672 = vmatprep.subr.mxu0 0.0
      %673 = vmatpush2.msra.mxu0 0.0
      %674 = vmatprep.subr.mxu0 0.0
      %675 = vmatpush2.msra.mxu0 0.0
      %676 = vmatprep.subr.mxu0 0.0
      %677 = vmatpush2.msra.mxu0 0.0
      %678 = vmatprep.subr.mxu0 0.0
      %679 = vmatpush2.msra.mxu0 0.0
      %680 = vmatprep.subr.mxu0 0.0
      %681 = vmatpush2.msra.mxu0 0.0
      %682 = vmatprep.subr.mxu0 0.0
      %683 = vmatpush2.msra.mxu0 0.0
      %684 = vmatprep.subr.mxu0 0.0
      %685 = vmatpush2.msra.mxu0 0.0
      %686 = vmatprep.subr.mxu0 0.0
      %687 = vmatpush2.msra.mxu0 0.0
      %688 = vmatprep.subr.mxu0 0.0
      %689 = vmatpush2.msra.mxu0 0.0
      %690 = vmatprep.subr.mxu0 0.0
      %691 = vmatpush2.msra.mxu0 0.0
      %692 = vmatprep.subr.mxu0 0.0
      %693 = vmatpush2.msra.mxu0 0.0
      %694 = vmatprep.subr.mxu0 0.0
      %695 = vmatpush2.msra.mxu0 0.0
      %696 = vmatprep.subr.mxu0 0.0
      %697 = vmatpush2.msra.mxu0 0.0
      %698 = vmatprep.subr.mxu0 0.0
      %699 = vmatpush2.msra.mxu0 0.0
      %700 = vmatprep.subr.mxu0 0.0
      %701 = vmatpush2.msra.mxu0 0.0
      %702 = vmatprep.mubr.f32.mxu0 0.0
      %703 = vmatmul.mubr.f32.gmra.mxu0 %v591
      %v704 = vpop.f32.mrf.mxu0
      %v705 = vadd.f32 %v587, %v704
      %v706 = vpop.f32.mrf.mxu0
      %707 = vmatprep.mubr.f32.mxu0 0.0
      %708 = vmatmul.mubr.f32.gmra.mxu0 %v594
      %v709 = vpop.f32.mrf.mxu0
      %v710 = vadd.f32 %v587, %v709
      %v711 = vpop.f32.mrf.mxu0
      %712 = vmatprep.mubr.f32.mxu0 0.0
      %713 = vmatmul.mubr.f32.gmra.mxu0 %v597
      %v714 = vpop.f32.mrf.mxu0
      %v715 = vadd.f32 %v587, %v714
      %v716 = vpop.f32.mrf.mxu0
      %717 = vmatprep.mubr.f32.mxu0 0.0
      %718 = vmatmul.mubr.f32.gmra.mxu0 %v600
      %v719 = vpop.f32.mrf.mxu0
      %v720 = vadd.f32 %v587, %v719
      %v721 = vpop.f32.mrf.mxu0
      %722 = vmatprep.mubr.f32.mxu0 0.0
      %723 = vmatmul.mubr.f32.gmra.mxu0 %v603
      %v724 = vpop.f32.mrf.mxu0
      %v725 = vadd.f32 %v587, %v724
      %v726 = vpop.f32.mrf.mxu0
      %727 = vmatprep.mubr.f32.mxu0 0.0
      %728 = vmatmul.mubr.f32.gmra.mxu0 %v606
      %v729 = vpop.f32.mrf.mxu0
      %v730 = vadd.f32 %v587, %v729
      %v731 = vpop.f32.mrf.mxu0
      %732 = vmatprep.mubr.f32.mxu0 0.0
      %733 = vmatmul.mubr.f32.gmra.mxu0 %v609
      %v734 = vpop.f32.mrf.mxu0
      %v735 = vadd.f32 %v587, %v734
      %v736 = vpop.f32.mrf.mxu0
      %737 = vmatprep.mubr.f32.mxu0 0.0
      %738 = vmatmul.mubr.f32.gmra.mxu0 %v612
      %v739 = vpop.f32.mrf.mxu0
      %v740 = vadd.f32 %v587, %v739
      %v741 = vpop.f32.mrf.mxu0
      %742 = vmatprep.mubr.f32.mxu0 0.0
      %743 = vmatmul.mubr.f32.gmra.mxu0 %v615
      %v744 = vpop.f32.mrf.mxu0
      %v745 = vadd.f32 %v587, %v744
      %v746 = vpop.f32.mrf.mxu0
      %747 = vmatprep.mubr.f32.mxu0 0.0
      %748 = vmatmul.mubr.f32.gmra.mxu0 %v618
      %v749 = vpop.f32.mrf.mxu0
      %v750 = vadd.f32 %v587, %v749
      %v751 = vpop.f32.mrf.mxu0
      %752 = vmatprep.mubr.f32.mxu0 0.0
      %753 = vmatmul.mubr.f32.gmra.mxu0 %v621
      %v754 = vpop.f32.mrf.mxu0
      %v755 = vadd.f32 %v587, %v754
      %v756 = vpop.f32.mrf.mxu0
      %757 = vmatprep.mubr.f32.mxu0 0.0
      %758 = vmatmul.mubr.f32.gmra.mxu0 %v624
      %v759 = vpop.f32.mrf.mxu0
      %v760 = vadd.f32 %v587, %v759
      %v761 = vpop.f32.mrf.mxu0
      %762 = vmatprep.mubr.f32.mxu0 0.0
      %763 = vmatmul.mubr.f32.gmra.mxu0 %v627
      %v764 = vpop.f32.mrf.mxu0
      %v765 = vadd.f32 %v587, %v764
      %v766 = vpop.f32.mrf.mxu0
      %767 = vmatprep.mubr.f32.mxu0 0.0
      %768 = vmatmul.mubr.f32.gmra.mxu0 %v630
      %v769 = vpop.f32.mrf.mxu0
      %v770 = vadd.f32 %v587, %v769
      %v771 = vpop.f32.mrf.mxu0
      %772 = vmatprep.mubr.f32.mxu0 0.0
      %773 = vmatmul.mubr.f32.gmra.mxu0 %v633
      %v774 = vpop.f32.mrf.mxu0
      %v775 = vadd.f32 %v587, %v774
      %v776 = vpop.f32.mrf.mxu0
      %777 = vmatprep.mubr.f32.mxu0 0.0
      %778 = vmatmul.mubr.f32.gmra.mxu0 %v636
      %v779 = vpop.f32.mrf.mxu0
      %v780 = vadd.f32 %v587, %v779
      %v781 = vpop.f32.mrf.mxu0
      %782 = vdwg.mxu0
      %v783 = vmax.f32 %v705, 0.0
      %v784 = vmax.f32 %v710, 0.0
      %v785 = vmax.f32 %v715, 0.0
      %v786 = vmax.f32 %v720, 0.0
      %v787 = vmax.f32 %v725, 0.0
      %v788 = vmax.f32 %v730, 0.0
      %v789 = vmax.f32 %v735, 0.0
      %v790 = vmax.f32 %v740, 0.0
      %v791 = vmax.f32 %v745, 0.0
      %v792 = vmax.f32 %v750, 0.0
      %v793 = vmax.f32 %v755, 0.0
      %v794 = vmax.f32 %v760, 0.0
      %v795 = vmax.f32 %v765, 0.0
      %v796 = vmax.f32 %v770, 0.0
      %v797 = vmax.f32 %v775, 0.0
      %v798 = vmax.f32 %v780, 0.0
      %v799 = vld [vmem:[%s5] sm:$0xff]
      %v800 = vld [vmem:[%s5 + $0x8] sm:$0xff]
      %v801 = vld [vmem:[%s5 + $0x10] sm:$0xff]
      %v802 = vld [vmem:[%s5 + $0x18] sm:$0xff]
      %v803 = vld [vmem:[%s6] sm:$0x1]
      %v805 = vlaneseq
      %v806 = vshrl.u32 %v805, 7
      %v807 = vsub.s32 0, %v806
      %v808 = vrot.slane %v803, %v807
      %v811 = vsel %vm364, %v783, 0
      %v814 = vsel %vm364, %v784, 0
      %v817 = vsel %vm364, %v785, 0
      %v820 = vsel %vm364, %v786, 0
      %v823 = vsel %vm364, %v787, 0
      %v826 = vsel %vm364, %v788, 0
      %v829 = vsel %vm364, %v789, 0
      %v832 = vsel %vm364, %v790, 0
      %v835 = vsel %vm364, %v791, 0
      %v838 = vsel %vm364, %v792, 0
      %v841 = vsel %vm364, %v793, 0
      %v844 = vsel %vm364, %v794, 0
      %v847 = vsel %vm364, %v795, 0
      %v850 = vsel %vm364, %v796, 0
      %v853 = vsel %vm364, %v797, 0
      %v856 = vsel %vm364, %v798, 0
      %858 = vmatprep.subr.mxu0 0.0
      %859 = vmatpush1.msra.mxu0 0.0
      %860 = vmatprep.subr.mxu0 0.0
      %861 = vmatpush1.msra.mxu0 0.0
      %862 = vmatprep.subr.mxu0 0.0
      %863 = vmatpush1.msra.mxu0 0.0
      %864 = vmatprep.subr.mxu0 0.0
      %865 = vmatpush1.msra.mxu0 0.0
      %866 = vmatprep.subr.mxu0 0.0
      %867 = vmatpush1.msra.mxu0 0.0
      %868 = vmatprep.subr.mxu0 0.0
      %869 = vmatpush1.msra.mxu0 0.0
      %870 = vmatprep.subr.mxu0 0.0
      %871 = vmatpush1.msra.mxu0 0.0
      %872 = vmatprep.subr.mxu0 0.0
      %873 = vmatpush1.msra.mxu0 0.0
      %874 = vmatprep.subr.mxu0 0.0
      %875 = vmatpush1.msra.mxu0 0.0
      %876 = vmatprep.subr.mxu0 0.0
      %877 = vmatpush1.msra.mxu0 0.0
      %878 = vmatprep.subr.mxu0 0.0
      %879 = vmatpush1.msra.mxu0 0.0
      %880 = vmatprep.subr.mxu0 0.0
      %881 = vmatpush1.msra.mxu0 0.0
      %882 = vmatprep.subr.mxu0 0.0
      %883 = vmatpush1.msra.mxu0 %v802
      %884 = vmatprep.subr.mxu0 0.0
      %885 = vmatpush1.msra.mxu0 %v801
      %886 = vmatprep.subr.mxu0 0.0
      %887 = vmatpush1.msra.mxu0 %v800
      %888 = vmatprep.subr.mxu0 0.0
      %889 = vmatpush1.msra.mxu0 %v799
      %890 = vmatprep.subr.mxu0 0.0
      %891 = vmatpush2.msra.mxu0 0.0
      %892 = vmatprep.subr.mxu0 0.0
      %893 = vmatpush2.msra.mxu0 0.0
      %894 = vmatprep.subr.mxu0 0.0
      %895 = vmatpush2.msra.mxu0 0.0
      %896 = vmatprep.subr.mxu0 0.0
      %897 = vmatpush2.msra.mxu0 0.0
      %898 = vmatprep.subr.mxu0 0.0
      %899 = vmatpush2.msra.mxu0 0.0
      %900 = vmatprep.subr.mxu0 0.0
      %901 = vmatpush2.msra.mxu0 0.0
      %902 = vmatprep.subr.mxu0 0.0
      %903 = vmatpush2.msra.mxu0 0.0
      %904 = vmatprep.subr.mxu0 0.0
      %905 = vmatpush2.msra.mxu0 0.0
      %906 = vmatprep.subr.mxu0 0.0
      %907 = vmatpush2.msra.mxu0 0.0
      %908 = vmatprep.subr.mxu0 0.0
      %909 = vmatpush2.msra.mxu0 0.0
      %910 = vmatprep.subr.mxu0 0.0
      %911 = vmatpush2.msra.mxu0 0.0
      %912 = vmatprep.subr.mxu0 0.0
      %913 = vmatpush2.msra.mxu0 0.0
      %914 = vmatprep.subr.mxu0 0.0
      %915 = vmatpush2.msra.mxu0 0.0
      %916 = vmatprep.subr.mxu0 0.0
      %917 = vmatpush2.msra.mxu0 0.0
      %918 = vmatprep.subr.mxu0 0.0
      %919 = vmatpush2.msra.mxu0 0.0
      %920 = vmatprep.subr.mxu0 0.0
      %921 = vmatpush2.msra.mxu0 0.0
      %922 = vmatprep.mubr.f32.mxu0 0.0
      %923 = vmatmul.mubr.f32.gmra.mxu0 %v811
      %v924 = vpop.f32.mrf.mxu0
      %v925 = vadd.f32 %v808, %v924
      %v926 = vpop.f32.mrf.mxu0
      %927 = vmatprep.mubr.f32.mxu0 0.0
      %928 = vmatmul.mubr.f32.gmra.mxu0 %v814
      %v929 = vpop.f32.mrf.mxu0
      %v930 = vadd.f32 %v808, %v929
      %v931 = vpop.f32.mrf.mxu0
      %932 = vmatprep.mubr.f32.mxu0 0.0
      %933 = vmatmul.mubr.f32.gmra.mxu0 %v817
      %v934 = vpop.f32.mrf.mxu0
      %v935 = vadd.f32 %v808, %v934
      %v936 = vpop.f32.mrf.mxu0
      %937 = vmatprep.mubr.f32.mxu0 0.0
      %938 = vmatmul.mubr.f32.gmra.mxu0 %v820
      %v939 = vpop.f32.mrf.mxu0
      %v940 = vadd.f32 %v808, %v939
      %v941 = vpop.f32.mrf.mxu0
      %942 = vmatprep.mubr.f32.mxu0 0.0
      %943 = vmatmul.mubr.f32.gmra.mxu0 %v823
      %v944 = vpop.f32.mrf.mxu0
      %v945 = vadd.f32 %v808, %v944
      %v946 = vpop.f32.mrf.mxu0
      %947 = vmatprep.mubr.f32.mxu0 0.0
      %948 = vmatmul.mubr.f32.gmra.mxu0 %v826
      %v949 = vpop.f32.mrf.mxu0
      %v950 = vadd.f32 %v808, %v949
      %v951 = vpop.f32.mrf.mxu0
      %952 = vmatprep.mubr.f32.mxu0 0.0
      %953 = vmatmul.mubr.f32.gmra.mxu0 %v829
      %v954 = vpop.f32.mrf.mxu0
      %v955 = vadd.f32 %v808, %v954
      %v956 = vpop.f32.mrf.mxu0
      %957 = vmatprep.mubr.f32.mxu0 0.0
      %958 = vmatmul.mubr.f32.gmra.mxu0 %v832
      %v959 = vpop.f32.mrf.mxu0
      %v960 = vadd.f32 %v808, %v959
      %v961 = vpop.f32.mrf.mxu0
      %962 = vmatprep.mubr.f32.mxu0 0.0
      %963 = vmatmul.mubr.f32.gmra.mxu0 %v835
      %v964 = vpop.f32.mrf.mxu0
      %v965 = vadd.f32 %v808, %v964
      %v966 = vpop.f32.mrf.mxu0
      %967 = vmatprep.mubr.f32.mxu0 0.0
      %968 = vmatmul.mubr.f32.gmra.mxu0 %v838
      %v969 = vpop.f32.mrf.mxu0
      %v970 = vadd.f32 %v808, %v969
      %v971 = vpop.f32.mrf.mxu0
      %972 = vmatprep.mubr.f32.mxu0 0.0
      %973 = vmatmul.mubr.f32.gmra.mxu0 %v841
      %v974 = vpop.f32.mrf.mxu0
      %v975 = vadd.f32 %v808, %v974
      %v976 = vpop.f32.mrf.mxu0
      %977 = vmatprep.mubr.f32.mxu0 0.0
      %978 = vmatmul.mubr.f32.gmra.mxu0 %v844
      %v979 = vpop.f32.mrf.mxu0
      %v980 = vadd.f32 %v808, %v979
      %v981 = vpop.f32.mrf.mxu0
      %982 = vmatprep.mubr.f32.mxu0 0.0
      %983 = vmatmul.mubr.f32.gmra.mxu0 %v847
      %v984 = vpop.f32.mrf.mxu0
      %v985 = vadd.f32 %v808, %v984
      %v986 = vpop.f32.mrf.mxu0
      %987 = vmatprep.mubr.f32.mxu0 0.0
      %988 = vmatmul.mubr.f32.gmra.mxu0 %v850
      %v989 = vpop.f32.mrf.mxu0
      %v990 = vadd.f32 %v808, %v989
      %v991 = vpop.f32.mrf.mxu0
      %992 = vmatprep.mubr.f32.mxu0 0.0
      %993 = vmatmul.mubr.f32.gmra.mxu0 %v853
      %v994 = vpop.f32.mrf.mxu0
      %v995 = vadd.f32 %v808, %v994
      %v996 = vpop.f32.mrf.mxu0
      %997 = vmatprep.mubr.f32.mxu0 0.0
      %998 = vmatmul.mubr.f32.gmra.mxu0 %v856
      %v999 = vpop.f32.mrf.mxu0
      %v1000 = vadd.f32 %v808, %v999
      %v1001 = vpop.f32.mrf.mxu0
      %1002 = vdwg.mxu0
      %v1003 = vmax.f32 %v925, 0.0
      %v1004 = vmax.f32 %v930, 0.0
      %v1005 = vmax.f32 %v935, 0.0
      %v1006 = vmax.f32 %v940, 0.0
      %v1007 = vmax.f32 %v945, 0.0
      %v1008 = vmax.f32 %v950, 0.0
      %v1009 = vmax.f32 %v955, 0.0
      %v1010 = vmax.f32 %v960, 0.0
      %v1011 = vmax.f32 %v965, 0.0
      %v1012 = vmax.f32 %v970, 0.0
      %v1013 = vmax.f32 %v975, 0.0
      %v1014 = vmax.f32 %v980, 0.0
      %v1015 = vmax.f32 %v985, 0.0
      %v1016 = vmax.f32 %v990, 0.0
      %v1017 = vmax.f32 %v995, 0.0
      %v1018 = vmax.f32 %v1000, 0.0
      %v1019 = vld [vmem:[%s7] sm:$0x1]
      %v1021 = vlaneseq
      %v1022 = vshrl.u32 %v1021, 7
      %v1023 = vsub.s32 0, %v1022
      %v1024 = vrot.slane %v1019, %v1023
      %v1026 = vmul.f32 %v1003, %v1024
      %v1027 = vmul.f32 %v1004, %v1024
      %v1028 = vmul.f32 %v1005, %v1024
      %v1029 = vmul.f32 %v1006, %v1024
      %v1030 = vmul.f32 %v1007, %v1024
      %v1031 = vmul.f32 %v1008, %v1024
      %v1032 = vmul.f32 %v1009, %v1024
      %v1033 = vmul.f32 %v1010, %v1024
      %v1034 = vmul.f32 %v1011, %v1024
      %v1035 = vmul.f32 %v1012, %v1024
      %v1036 = vmul.f32 %v1013, %v1024
      %v1037 = vmul.f32 %v1014, %v1024
      %v1038 = vmul.f32 %v1015, %v1024
      %v1039 = vmul.f32 %v1016, %v1024
      %v1040 = vmul.f32 %v1017, %v1024
      %v1041 = vmul.f32 %v1018, %v1024
      %v1042 = vsel %vm589, %v1026, 0.0
      %1043 = vadd.xlane.f32.xlu0 %v1042
      %v1044 = vpop.xlane.xlu0 %1043
      %v1045 = vsel %vm589, %v1027, 0.0
      %1046 = vadd.xlane.f32.xlu0 %v1045
      %v1047 = vpop.xlane.xlu0 %1046
      %v1048 = vsel %vm589, %v1028, 0.0
      %1049 = vadd.xlane.f32.xlu0 %v1048
      %v1050 = vpop.xlane.xlu0 %1049
      %v1051 = vsel %vm589, %v1029, 0.0
      %1052 = vadd.xlane.f32.xlu0 %v1051
      %v1053 = vpop.xlane.xlu0 %1052
      %v1054 = vsel %vm589, %v1030, 0.0
      %1055 = vadd.xlane.f32.xlu0 %v1054
      %v1056 = vpop.xlane.xlu0 %1055
      %v1057 = vsel %vm589, %v1031, 0.0
      %1058 = vadd.xlane.f32.xlu0 %v1057
      %v1059 = vpop.xlane.xlu0 %1058
      %v1060 = vsel %vm589, %v1032, 0.0
      %1061 = vadd.xlane.f32.xlu0 %v1060
      %v1062 = vpop.xlane.xlu0 %1061
      %v1063 = vsel %vm589, %v1033, 0.0
      %1064 = vadd.xlane.f32.xlu0 %v1063
      %v1065 = vpop.xlane.xlu0 %1064
      %v1066 = vsel %vm589, %v1034, 0.0
      %1067 = vadd.xlane.f32.xlu0 %v1066
      %v1068 = vpop.xlane.xlu0 %1067
      %v1069 = vsel %vm589, %v1035, 0.0
      %1070 = vadd.xlane.f32.xlu0 %v1069
      %v1071 = vpop.xlane.xlu0 %1070
      %v1072 = vsel %vm589, %v1036, 0.0
      %1073 = vadd.xlane.f32.xlu0 %v1072
      %v1074 = vpop.xlane.xlu0 %1073
      %v1075 = vsel %vm589, %v1037, 0.0
      %1076 = vadd.xlane.f32.xlu0 %v1075
      %v1077 = vpop.xlane.xlu0 %1076
      %v1078 = vsel %vm589, %v1038, 0.0
      %1079 = vadd.xlane.f32.xlu0 %v1078
      %v1080 = vpop.xlane.xlu0 %1079
      %v1081 = vsel %vm589, %v1039, 0.0
      %1082 = vadd.xlane.f32.xlu0 %v1081
      %v1083 = vpop.xlane.xlu0 %1082
      %v1084 = vsel %vm589, %v1040, 0.0
      %1085 = vadd.xlane.f32.xlu0 %v1084
      %v1086 = vpop.xlane.xlu0 %1085
      %v1087 = vsel %vm589, %v1041, 0.0
      %1088 = vadd.xlane.f32.xlu0 %v1087
      %v1089 = vpop.xlane.xlu0 %1088
      %s1090 = sld [smem:[#allocation2]]
      %v1091 = vstv %s1090
      %v1092 = vadd.f32 %v1044, %v1091
      %v1093 = vadd.f32 %v1047, %v1091
      %v1094 = vadd.f32 %v1050, %v1091
      %v1095 = vadd.f32 %v1053, %v1091
      %v1096 = vadd.f32 %v1056, %v1091
      %v1097 = vadd.f32 %v1059, %v1091
      %v1098 = vadd.f32 %v1062, %v1091
      %v1099 = vadd.f32 %v1065, %v1091
      %v1100 = vadd.f32 %v1068, %v1091
      %v1101 = vadd.f32 %v1071, %v1091
      %v1102 = vadd.f32 %v1074, %v1091
      %v1103 = vadd.f32 %v1077, %v1091
      %v1104 = vadd.f32 %v1080, %v1091
      %v1105 = vadd.f32 %v1083, %v1091
      %v1106 = vadd.f32 %v1086, %v1091
      %v1107 = vadd.f32 %v1089, %v1091
      %v1108 = vxor.u32 %v1092, 2147483648
      %v1109 = vxor.u32 %v1093, 2147483648
      %v1110 = vxor.u32 %v1094, 2147483648
      %v1111 = vxor.u32 %v1095, 2147483648
      %v1112 = vxor.u32 %v1096, 2147483648
      %v1113 = vxor.u32 %v1097, 2147483648
      %v1114 = vxor.u32 %v1098, 2147483648
      %v1115 = vxor.u32 %v1099, 2147483648
      %v1116 = vxor.u32 %v1100, 2147483648
      %v1117 = vxor.u32 %v1101, 2147483648
      %v1118 = vxor.u32 %v1102, 2147483648
      %v1119 = vxor.u32 %v1103, 2147483648
      %v1120 = vxor.u32 %v1104, 2147483648
      %v1121 = vxor.u32 %v1105, 2147483648
      %v1122 = vxor.u32 %v1106, 2147483648
      %v1123 = vxor.u32 %v1107, 2147483648
      %v1124 = vmul.f32 %v1108, 1.442695
      %v1125 = vpow.pop %v1124
      %v1126 = vmul.f32 %v1109, 1.442695
      %v1127 = vpow.pop %v1126
      %v1128 = vmul.f32 %v1110, 1.442695
      %v1129 = vpow.pop %v1128
      %v1130 = vmul.f32 %v1111, 1.442695
      %v1131 = vpow.pop %v1130
      %v1132 = vmul.f32 %v1112, 1.442695
      %v1133 = vpow.pop %v1132
      %v1134 = vmul.f32 %v1113, 1.442695
      %v1135 = vpow.pop %v1134
      %v1136 = vmul.f32 %v1114, 1.442695
      %v1137 = vpow.pop %v1136
      %v1138 = vmul.f32 %v1115, 1.442695
      %v1139 = vpow.pop %v1138
      %v1140 = vmul.f32 %v1116, 1.442695
      %v1141 = vpow.pop %v1140
      %v1142 = vmul.f32 %v1117, 1.442695
      %v1143 = vpow.pop %v1142
      %v1144 = vmul.f32 %v1118, 1.442695
      %v1145 = vpow.pop %v1144
      %v1146 = vmul.f32 %v1119, 1.442695
      %v1147 = vpow.pop %v1146
      %v1148 = vmul.f32 %v1120, 1.442695
      %v1149 = vpow.pop %v1148
      %v1150 = vmul.f32 %v1121, 1.442695
      %v1151 = vpow.pop %v1150
      %v1152 = vmul.f32 %v1122, 1.442695
      %v1153 = vpow.pop %v1152
      %v1154 = vmul.f32 %v1123, 1.442695
      %v1155 = vpow.pop %v1154
      %v1156 = vadd.f32 %v1125, 1.0
      %v1157 = vadd.f32 %v1127, 1.0
      %v1158 = vadd.f32 %v1129, 1.0
      %v1159 = vadd.f32 %v1131, 1.0
      %v1160 = vadd.f32 %v1133, 1.0
      %v1161 = vadd.f32 %v1135, 1.0
      %v1162 = vadd.f32 %v1137, 1.0
      %v1163 = vadd.f32 %v1139, 1.0
      %v1164 = vadd.f32 %v1141, 1.0
      %v1165 = vadd.f32 %v1143, 1.0
      %v1166 = vadd.f32 %v1145, 1.0
      %v1167 = vadd.f32 %v1147, 1.0
      %v1168 = vadd.f32 %v1149, 1.0
      %v1169 = vadd.f32 %v1151, 1.0
      %v1170 = vadd.f32 %v1153, 1.0
      %v1171 = vadd.f32 %v1155, 1.0
      %v1172 = vrcp.pop %v1156
      %v1173 = vmul.f32 1.0, %v1172
      %v1174 = vrcp.pop %v1157
      %v1175 = vmul.f32 1.0, %v1174
      %v1176 = vrcp.pop %v1158
      %v1177 = vmul.f32 1.0, %v1176
      %v1178 = vrcp.pop %v1159
      %v1179 = vmul.f32 1.0, %v1178
      %v1180 = vrcp.pop %v1160
      %v1181 = vmul.f32 1.0, %v1180
      %v1182 = vrcp.pop %v1161
      %v1183 = vmul.f32 1.0, %v1182
      %v1184 = vrcp.pop %v1162
      %v1185 = vmul.f32 1.0, %v1184
      %v1186 = vrcp.pop %v1163
      %v1187 = vmul.f32 1.0, %v1186
      %v1188 = vrcp.pop %v1164
      %v1189 = vmul.f32 1.0, %v1188
      %v1190 = vrcp.pop %v1165
      %v1191 = vmul.f32 1.0, %v1190
      %v1192 = vrcp.pop %v1166
      %v1193 = vmul.f32 1.0, %v1192
      %v1194 = vrcp.pop %v1167
      %v1195 = vmul.f32 1.0, %v1194
      %v1196 = vrcp.pop %v1168
      %v1197 = vmul.f32 1.0, %v1196
      %v1198 = vrcp.pop %v1169
      %v1199 = vmul.f32 1.0, %v1198
      %v1200 = vrcp.pop %v1170
      %v1201 = vmul.f32 1.0, %v1200
      %v1202 = vrcp.pop %v1171
      %v1203 = vmul.f32 1.0, %v1202
      %vm1204 = vcmask 7168
      %1205 = vst.msk [vmem:[%s335] sm:$0xff] %vm1204, %v1173
      %1206 = vst.msk [vmem:[%s335 + $0x8] sm:$0xff] %vm1204, %v1175
      %1207 = vst.msk [vmem:[%s335 + $0x10] sm:$0xff] %vm1204, %v1177
      %1208 = vst.msk [vmem:[%s335 + $0x18] sm:$0xff] %vm1204, %v1179
      %1209 = vst.msk [vmem:[%s335 + $0x20] sm:$0xff] %vm1204, %v1181
      %1210 = vst.msk [vmem:[%s335 + $0x28] sm:$0xff] %vm1204, %v1183
      %1211 = vst.msk [vmem:[%s335 + $0x30] sm:$0xff] %vm1204, %v1185
      %1212 = vst.msk [vmem:[%s335 + $0x38] sm:$0xff] %vm1204, %v1187
      %1213 = vst.msk [vmem:[%s335 + $0x40] sm:$0xff] %vm1204, %v1189
      %1214 = vst.msk [vmem:[%s335 + $0x48] sm:$0xff] %vm1204, %v1191
      %1215 = vst.msk [vmem:[%s335 + $0x50] sm:$0xff] %vm1204, %v1193
      %1216 = vst.msk [vmem:[%s335 + $0x58] sm:$0xff] %vm1204, %v1195
      %1217 = vst.msk [vmem:[%s335 + $0x60] sm:$0xff] %vm1204, %v1197
      %1218 = vst.msk [vmem:[%s335 + $0x68] sm:$0xff] %vm1204, %v1199
      %1219 = vst.msk [vmem:[%s335 + $0x70] sm:$0xff] %vm1204, %v1201
      %1220 = vst.msk [vmem:[%s335 + $0x78] sm:$0xff] %vm1204, %v1203
      %s1221 = smul.u32 16, %s21
      %p1222 = scmp.lt.s32.totalorder %s1221, 47
      %s1223 = scalar_select %p1222, %s1221, 47
      %s1224 = smul.addr %s1223, 8
      %s1225 = scalar_lea.vmem %s9, %s1224
      // Predicated region
      $region57: #{tpu_custom_call.1} parent=55 // pred_check
        %p1226 = pneg %p233
      $region58: #{tpu_custom_call.1} parent=55 // pred_check_branch
        %1228 = sbr.rel (%p1226) target = $region60
      $region59: #{tpu_custom_call.1} parent=55 // pred_region
        %s1229 = smul.u32 16, %s21
      $region60: #{tpu_custom_call.1} parent=55 // pred_fallthru
        _
    $region56: #{tpu_custom_call.1} parent=5 // pred_fallthru
      _
    %p1230 = scmp.le.s32.totalorder 2, %s16
    // Predicated region
    $region61: #{tpu_custom_call.1} parent=5 // pred_check
      %p1231 = pneg %p1230
    $region62: #{tpu_custom_call.1} parent=5 // pred_check_branch
      %1233 = sbr.rel (%p1231) target = $region64
    $region63: #{tpu_custom_call.1} parent=5 // pred_region
      %s1234 = ssub.s32 %s16, 2
      // Predicated region
      $region65: #{tpu_custom_call.1} parent=63 // pred_check
        %p1235 = pneg %p239
      $region66: #{tpu_custom_call.1} parent=63 // pred_check_branch
        %1237 = sbr.rel (%p1235) target = $region68
      $region67: #{tpu_custom_call.1} parent=63 // pred_region
        %s1238 = smul.u32 16, %s22
        %p1239 = scmp.lt.s32.totalorder %s1238, 47
        %s1240 = scalar_select %p1239, %s1238, 47
        %s1241 = smul.addr %s1240, 8
        %s1242 = scalar_lea.vmem %s9, %s1241
      $region68: #{tpu_custom_call.1} parent=63 // pred_fallthru
        _
    $region64: #{tpu_custom_call.1} parent=5 // pred_fallthru
      _
  $region6: #{tpu_custom_call.1} parent=0 // loop_footer
    %s20 = sadd.s32 1, %s16
  $region7: #{tpu_custom_call.1} parent=0 // loop_footer_branch
    %15 = sbr.rel target = $region3
  $region8: #{tpu_custom_call.1} parent=0 // loop_exit
    _

</llo_original>
